<compile_context>
chip_gen: v6e
topology: v6e:2x2x1
jax: 0.10.0
libtpu: 0.0.40
codegen_flags: <defaults>
</compile_context>

<pallas_src>
import numpy as np
import jax
import jax.numpy as jnp
from jax import lax
from jax.experimental import pallas as pl
from jax.experimental.pallas import tpu as pltpu


# ---------------------------------------------------------------------------
# Fused forward kernel (one grid step == one image)
# ---------------------------------------------------------------------------

def _net_fused_kernel(x_ref,                                    # (1,3,32,32)
                      a1_ref, b1c_ref, s1e_ref, s1o_ref, p1e_ref, p1o_ref,
                      a2_ref, b2c_ref, s2e_ref, s2o_ref, p2e_ref, p2o_ref,
                      w1_ref, b1_ref, w2_ref, b2_ref,
                      o_ref):                                   # (1,1,100)
    f32 = jnp.float32

    # ---- conv1 (3 -> 4, k=5, valid) -> (28, 112), lane = co*28 + ow --------
    # a1_ref[ci, di] is (32, 112): folds the 5 kw taps and the 4 output
    # channels of weight w1[:, ci, di, :] into one matmul per (ci, di).
    y = None
    for ci in range(3):
        xc = x_ref[0, ci]                                       # (32, 32)
        for di in range(5):
            t = jnp.dot(xc[di:di + 28, :], a1_ref[ci, di],
                        preferred_element_type=f32)
            y = t if y is None else y + t
    y = y + b1c_ref[...]                                        # + bias

    # ---- maxpool 2x2 + relu -> (14, 56) (exact 0/1 selection matmuls) ------
    yw = jnp.maximum(jnp.dot(y, s1e_ref[...], preferred_element_type=f32),
                     jnp.dot(y, s1o_ref[...], preferred_element_type=f32))
    y = jnp.maximum(jnp.dot(p1e_ref[...], yw, preferred_element_type=f32),
                    jnp.dot(p1o_ref[...], yw, preferred_element_type=f32))
    y = jnp.maximum(y, 0.0)

    # ---- conv2 (4 -> 4, k=5, valid); Dropout2d = identity (inference) ------
    # a2_ref[di] is (56, 40): folds kw taps, all 4 input channel blocks and
    # all 4 output channels.  Result (10, 40), lane = co*10 + ow.
    z = None
    for di in range(5):
        t = jnp.dot(y[di:di + 10, :], a2_ref[di], preferred_element_type=f32)
        z = t if z is None else z + t
    z = z + b2c_ref[...]

    # ---- maxpool 2x2 + relu -> (5, 20), lane = co*5 + ow -------------------
    zw = jnp.maximum(jnp.dot(z, s2e_ref[...], preferred_element_type=f32),
                     jnp.dot(z, s2o_ref[...], preferred_element_type=f32))
    z = jnp.maximum(jnp.dot(p2e_ref[...], zw, preferred_element_type=f32),
                    jnp.dot(p2o_ref[...], zw, preferred_element_type=f32))
    z = jnp.maximum(z, 0.0)

    # ---- fc1 (+relu); the NCHW view(-1,100) flatten is folded into w1 ------
    # w1_ref[i] is (20, 128): rows indexed by (co*5 + ow), cols padded 50->128.
    h = None
    for i in range(5):
        t = jnp.dot(z[i:i + 1, :], w1_ref[i], preferred_element_type=f32)
        h = t if h is None else h + t
    h = jnp.maximum(h + b1_ref[...], 0.0)                       # (1, 128)

    # ---- fc2 + softmax (F.dropout = identity at inference) -----------------
    # w2 padded to 128x128; padded logit columns carry bias -1e30 -> exp == 0.
    logits = jnp.dot(h, w2_ref[...], preferred_element_type=f32) + b2_ref[...]
    m = jnp.max(logits, axis=-1, keepdims=True)
    e = jnp.exp(logits - m)
    probs = e * pl.reciprocal(jnp.sum(e, axis=-1, keepdims=True), approx=True)
    o_ref[0, :, :] = probs[:, 0:100]


# ---------------------------------------------------------------------------
# Host-side one-time parameter repacking (PyTorch layouts -> folded matrices)
# ---------------------------------------------------------------------------

def init_params(key):
    """Deterministic synthetic parameters, PyTorch layouts/init."""
    ks = jax.random.split(key, 8)

    def u(k, shape, fan_in):
        bound = 1.0 / np.sqrt(float(fan_in))
        return jax.random.uniform(k, shape, jnp.float32, -bound, bound)

    return {
        "conv1_w": u(ks[0], (4, 3, 5, 5), 3 * 25),   # OIHW
        "conv1_b": u(ks[1], (4,), 3 * 25),
        "conv2_w": u(ks[2], (4, 4, 5, 5), 4 * 25),
        "conv2_b": u(ks[3], (4,), 4 * 25),
        "fc1_w": u(ks[4], (50, 100), 100),           # (out, in)
        "fc1_b": u(ks[5], (50,), 100),
        "fc2_w": u(ks[6], (100, 50), 50),
        "fc2_b": u(ks[7], (100,), 50),
    }


def prepare_fused_params(params):
    """Fold conv/pool/flatten/FC params into the matrices the kernel expects."""
    c1w = np.asarray(params["conv1_w"], np.float32)
    c1b = np.asarray(params["conv1_b"], np.float32)
    c2w = np.asarray(params["conv2_w"], np.float32)
    c2b = np.asarray(params["conv2_b"], np.float32)
    f1w = np.asarray(params["fc1_w"], np.float32)
    f1b = np.asarray(params["fc1_b"], np.float32)
    f2w = np.asarray(params["fc2_w"], np.float32)
    f2b = np.asarray(params["fc2_b"], np.float32)

    # conv1 folded taps: a1[ci, di] is (32, 112); row = ow + dj, col = co*28+ow
    a1 = np.zeros((3, 5, 32, 112), np.float32)
    for ci in range(3):
        for di in range(5):
            for co in range(4):
                for dj in range(5):
                    for ow in range(28):
                        a1[ci, di, ow + dj, co * 28 + ow] += c1w[co, ci, di, dj]
    b1c = np.repeat(c1b, 28)[None, :]                            # (1, 112)

    # pool1 (28x28 -> 14x14 per channel) selection matrices
    s1e = np.zeros((112, 56), np.float32)
    s1o = np.zeros((112, 56), np.float32)
    for co in range(4):
        for j in range(14):
            s1e[co * 28 + 2 * j, co * 14 + j] = 1.0
            s1o[co * 28 + 2 * j + 1, co * 14 + j] = 1.0
    p1e = np.zeros((14, 28), np.float32)
    p1o = np.zeros((14, 28), np.float32)
    for i in range(14):
        p1e[i, 2 * i] = 1.0
        p1o[i, 2 * i + 1] = 1.0

    # conv2 folded taps: a2[di] is (56, 40); row = ci*14 + ow+dj, col = co*10+ow
    a2 = np.zeros((5, 56, 40), np.float32)
    for di in range(5):
        for co in range(4):
            for ci in range(4):
                for dj in range(5):
                    for ow in range(10):
                        a2[di, ci * 14 + ow + dj, co * 10 + ow] += c2w[co, ci, di, dj]
    b2c = np.repeat(c2b, 10)[None, :]                            # (1, 40)

    # pool2 (10x10 -> 5x5 per channel)
    s2e = np.zeros((40, 20), np.float32)
    s2o = np.zeros((40, 20), np.float32)
    for co in range(4):
        for j in range(5):
            s2e[co * 10 + 2 * j, co * 5 + j] = 1.0
            s2o[co * 10 + 2 * j + 1, co * 5 + j] = 1.0
    p2e = np.zeros((5, 10), np.float32)
    p2o = np.zeros((5, 10), np.float32)
    for i in range(5):
        p2e[i, 2 * i] = 1.0
        p2o[i, 2 * i + 1] = 1.0

    # fc1 with the PyTorch NCHW flatten (index co*25 + i*5 + j) folded in,
    # output dim zero-padded 50 -> 128.
    w1 = np.zeros((5, 20, 128), np.float32)
    for i in range(5):
        for co in range(4):
            for j in range(5):
                w1[i, co * 5 + j, 0:50] = f1w[:, co * 25 + i * 5 + j]
    b1 = np.zeros((1, 128), np.float32)
    b1[0, :50] = f1b

    # fc2 padded to 128x128; pad logits biased to -1e30 (softmax-neutral).
    w2 = np.zeros((128, 128), np.float32)
    w2[0:50, 0:100] = f2w.T
    b2 = np.full((1, 128), -1e30, np.float32)
    b2[0, :100] = f2b

    host = (a1, b1c, s1e, s1o, p1e, p1o,
            a2, b2c, s2e, s2o, p2e, p2o,
            w1, b1, w2, b2)
    return tuple(jnp.asarray(a) for a in host)


# ---------------------------------------------------------------------------
# pallas_call wrapper
# ---------------------------------------------------------------------------

def _resident_spec(arr):
    """Whole-array block with a constant index_map -> stays resident in VMEM."""
    zeros = (0,) * arr.ndim
    return pl.BlockSpec(arr.shape, lambda b: zeros)


def net_forward(x_nchw, fused_params):
    """Inference forward. x: NCHW float32 (B, 3, 32, 32) -> (B, 100) softmax."""
    B = x_nchw.shape[0]
    x = x_nchw.astype(jnp.float32)

    in_specs = [pl.BlockSpec((1, 3, 32, 32), lambda b: (b, 0, 0, 0))]
    in_specs += [_resident_spec(a) for a in fused_params]

    out = pl.pallas_call(
        _net_fused_kernel,
        out_shape=jax.ShapeDtypeStruct((B, 1, 100), jnp.float32),
        grid=(B,),
        in_specs=in_specs,
        out_specs=pl.BlockSpec((1, 1, 100), lambda b: (b, 0, 0)),
        compiler_params=pltpu.CompilerParams(
            dimension_semantics=("parallel",)),
    )(x, *fused_params)
    return out.reshape(B, 100)


# ---------------------------------------------------------------------------
# Pure-JAX reference (mirrors the PyTorch forward, inference mode)
# ---------------------------------------------------------------------------

def reference_forward(x, params):
    dn = ("NCHW", "OIHW", "NCHW")
    y = lax.conv_general_dilated(x, params["conv1_w"], (1, 1), "VALID",
                                 dimension_numbers=dn)
    y = y + params["conv1_b"][None, :, None, None]
    y = lax.reduce_window(y, -jnp.inf, lax.max, (1, 1, 2, 2), (1, 1, 2, 2), "VALID")
    y = jnp.maximum(y, 0.0)
    y = lax.conv_general_dilated(y, params["conv2_w"], (1, 1), "VALID",
                                 dimension_numbers=dn)
    y = y + params["conv2_b"][None, :, None, None]
    y = lax.reduce_window(y, -jnp.inf, lax.max, (1, 1, 2, 2), (1, 1, 2, 2), "VALID")
    y = jnp.maximum(y, 0.0)
    flat = y.reshape(y.shape[0], 100)
    h = jnp.maximum(flat @ params["fc1_w"].T + params["fc1_b"], 0.0)
    logits = h @ params["fc2_w"].T + params["fc2_b"]
    return jax.nn.softmax(logits, axis=-1)


# ---------------------------------------------------------------------------

if __name__ == "__main__":
    key = jax.random.PRNGKey(0)
    k_params, k_x = jax.random.split(key)
    params = init_params(k_params)
    fused = prepare_fused_params(params)

    # CIFAR-100 sized input is required by the architecture (view(-1, 100)).
    x = jax.random.normal(k_x, (2, 3, 32, 32), dtype=jnp.float32)

    fwd = jax.jit(net_forward)
    out = jax.block_until_ready(fwd(x, fused))
    assert out.shape == (2, 100), out.shape

    ref = jax.block_until_ready(jax.jit(reference_forward)(x, params))
    max_err = float(jnp.max(jnp.abs(out - ref)))
    row_err = float(jnp.max(jnp.abs(jnp.sum(out, axis=-1) - 1.0)))
    assert max_err < 5e-3, f"max abs diff vs reference too large: {max_err}"
    assert row_err < 5e-3, f"softmax rows not normalized: {row_err}"
    print("KERNEL_OK")
</pallas_src>

<mosaic_0001>
module attributes {stable_mosaic.version = 11 : i64} {
  func.func @_net_fused_kernel(%arg0: i32, %arg1: memref<1x3x32x32xf32, #tpu.memory_space<vmem>>, %arg2: memref<3x5x32x112xf32, #tpu.memory_space<vmem>>, %arg3: memref<1x112xf32, #tpu.memory_space<vmem>>, %arg4: memref<112x56xf32, #tpu.memory_space<vmem>>, %arg5: memref<112x56xf32, #tpu.memory_space<vmem>>, %arg6: memref<14x28xf32, #tpu.memory_space<vmem>>, %arg7: memref<14x28xf32, #tpu.memory_space<vmem>>, %arg8: memref<5x56x40xf32, #tpu.memory_space<vmem>>, %arg9: memref<1x40xf32, #tpu.memory_space<vmem>>, %arg10: memref<40x20xf32, #tpu.memory_space<vmem>>, %arg11: memref<40x20xf32, #tpu.memory_space<vmem>>, %arg12: memref<5x10xf32, #tpu.memory_space<vmem>>, %arg13: memref<5x10xf32, #tpu.memory_space<vmem>>, %arg14: memref<5x20x128xf32, #tpu.memory_space<vmem>>, %arg15: memref<1x128xf32, #tpu.memory_space<vmem>>, %arg16: memref<128x128xf32, #tpu.memory_space<vmem>>, %arg17: memref<1x128xf32, #tpu.memory_space<vmem>>, %arg18: memref<1x1x100xf32, #tpu.memory_space<vmem>>) attributes {dimension_semantics = [#tpu.dimension_semantics<parallel>], iteration_bounds = array<i64: 2>, scalar_prefetch = 0 : i64, scratch_operands = 0 : i64, tpu.core_type = #tpu.core_type<tc>, window_params = [{transform_indices = @transform_0, window_bounds = array<i64: 1, 3, 32, 32>}, {pipeline_mode = #tpu.pipeline_mode<synchronous>, transform_indices = @transform_1, window_bounds = array<i64: 3, 5, 32, 112>}, {pipeline_mode = #tpu.pipeline_mode<synchronous>, transform_indices = @transform_2, window_bounds = array<i64: 1, 112>}, {pipeline_mode = #tpu.pipeline_mode<synchronous>, transform_indices = @transform_3, window_bounds = array<i64: 112, 56>}, {pipeline_mode = #tpu.pipeline_mode<synchronous>, transform_indices = @transform_4, window_bounds = array<i64: 112, 56>}, {pipeline_mode = #tpu.pipeline_mode<synchronous>, transform_indices = @transform_5, window_bounds = array<i64: 14, 28>}, {pipeline_mode = #tpu.pipeline_mode<synchronous>, transform_indices = @transform_6, window_bounds = array<i64: 14, 28>}, {pipeline_mode = #tpu.pipeline_mode<synchronous>, transform_indices = @transform_7, window_bounds = array<i64: 5, 56, 40>}, {pipeline_mode = #tpu.pipeline_mode<synchronous>, transform_indices = @transform_8, window_bounds = array<i64: 1, 40>}, {pipeline_mode = #tpu.pipeline_mode<synchronous>, transform_indices = @transform_9, window_bounds = array<i64: 40, 20>}, {pipeline_mode = #tpu.pipeline_mode<synchronous>, transform_indices = @transform_10, window_bounds = array<i64: 40, 20>}, {pipeline_mode = #tpu.pipeline_mode<synchronous>, transform_indices = @transform_11, window_bounds = array<i64: 5, 10>}, {pipeline_mode = #tpu.pipeline_mode<synchronous>, transform_indices = @transform_12, window_bounds = array<i64: 5, 10>}, {pipeline_mode = #tpu.pipeline_mode<synchronous>, transform_indices = @transform_13, window_bounds = array<i64: 5, 20, 128>}, {pipeline_mode = #tpu.pipeline_mode<synchronous>, transform_indices = @transform_14, window_bounds = array<i64: 1, 128>}, {pipeline_mode = #tpu.pipeline_mode<synchronous>, transform_indices = @transform_15, window_bounds = array<i64: 128, 128>}, {pipeline_mode = #tpu.pipeline_mode<synchronous>, transform_indices = @transform_16, window_bounds = array<i64: 1, 128>}, {transform_indices = @transform_17, window_bounds = array<i64: 1, 1, 100>}]} {
    %c0 = arith.constant 0 : index
    %c0_0 = arith.constant 0 : index
    %c0_1 = arith.constant 0 : index
    %c0_2 = arith.constant 0 : index
    %0 = vector.load %arg1[%c0, %c0_0, %c0_1, %c0_2] : memref<1x3x32x32xf32, #tpu.memory_space<vmem>>, vector<1x1x32x32xf32>
    %1 = vector.shape_cast %0 : vector<1x1x32x32xf32> to vector<32x32xf32>
    %2 = vector.extract_strided_slice %1 {offsets = [0, 0], sizes = [28, 32], strides = [1, 1]} : vector<32x32xf32> to vector<28x32xf32>
    %c0_3 = arith.constant 0 : index
    %c0_4 = arith.constant 0 : index
    %c0_5 = arith.constant 0 : index
    %c0_6 = arith.constant 0 : index
    %3 = vector.load %arg2[%c0_3, %c0_4, %c0_5, %c0_6] : memref<3x5x32x112xf32, #tpu.memory_space<vmem>>, vector<1x1x32x112xf32>
    %4 = vector.shape_cast %3 : vector<1x1x32x112xf32> to vector<32x112xf32>
    %cst = arith.constant dense<0.000000e+00> : vector<28x112xf32>
    %5 = tpu.matmul %2, %4, %cst {dimension_numbers = #tpu.dot_dimension_numbers<[1], [0], [0], [1], [0, 0, 1, 1], [], []>} : vector<28x32xf32>, vector<32x112xf32>, vector<28x112xf32> -> vector<28x112xf32>
    %6 = vector.extract_strided_slice %1 {offsets = [1, 0], sizes = [28, 32], strides = [1, 1]} : vector<32x32xf32> to vector<28x32xf32>
    %c0_7 = arith.constant 0 : index
    %c1 = arith.constant 1 : index
    %c0_8 = arith.constant 0 : index
    %c0_9 = arith.constant 0 : index
    %7 = vector.load %arg2[%c0_7, %c1, %c0_8, %c0_9] : memref<3x5x32x112xf32, #tpu.memory_space<vmem>>, vector<1x1x32x112xf32>
    %8 = vector.shape_cast %7 : vector<1x1x32x112xf32> to vector<32x112xf32>
    %cst_10 = arith.constant dense<0.000000e+00> : vector<28x112xf32>
    %9 = tpu.matmul %6, %8, %cst_10 {dimension_numbers = #tpu.dot_dimension_numbers<[1], [0], [0], [1], [0, 0, 1, 1], [], []>} : vector<28x32xf32>, vector<32x112xf32>, vector<28x112xf32> -> vector<28x112xf32>
    %10 = arith.addf %5, %9 : vector<28x112xf32>
    %11 = vector.extract_strided_slice %1 {offsets = [2, 0], sizes = [28, 32], strides = [1, 1]} : vector<32x32xf32> to vector<28x32xf32>
    %c0_11 = arith.constant 0 : index
    %c2 = arith.constant 2 : index
    %c0_12 = arith.constant 0 : index
    %c0_13 = arith.constant 0 : index
    %12 = vector.load %arg2[%c0_11, %c2, %c0_12, %c0_13] : memref<3x5x32x112xf32, #tpu.memory_space<vmem>>, vector<1x1x32x112xf32>
    %13 = vector.shape_cast %12 : vector<1x1x32x112xf32> to vector<32x112xf32>
    %cst_14 = arith.constant dense<0.000000e+00> : vector<28x112xf32>
    %14 = tpu.matmul %11, %13, %cst_14 {dimension_numbers = #tpu.dot_dimension_numbers<[1], [0], [0], [1], [0, 0, 1, 1], [], []>} : vector<28x32xf32>, vector<32x112xf32>, vector<28x112xf32> -> vector<28x112xf32>
    %15 = arith.addf %10, %14 : vector<28x112xf32>
    %16 = vector.extract_strided_slice %1 {offsets = [3, 0], sizes = [28, 32], strides = [1, 1]} : vector<32x32xf32> to vector<28x32xf32>
    %c0_15 = arith.constant 0 : index
    %c3 = arith.constant 3 : index
    %c0_16 = arith.constant 0 : index
    %c0_17 = arith.constant 0 : index
    %17 = vector.load %arg2[%c0_15, %c3, %c0_16, %c0_17] : memref<3x5x32x112xf32, #tpu.memory_space<vmem>>, vector<1x1x32x112xf32>
    %18 = vector.shape_cast %17 : vector<1x1x32x112xf32> to vector<32x112xf32>
    %cst_18 = arith.constant dense<0.000000e+00> : vector<28x112xf32>
    %19 = tpu.matmul %16, %18, %cst_18 {dimension_numbers = #tpu.dot_dimension_numbers<[1], [0], [0], [1], [0, 0, 1, 1], [], []>} : vector<28x32xf32>, vector<32x112xf32>, vector<28x112xf32> -> vector<28x112xf32>
    %20 = arith.addf %15, %19 : vector<28x112xf32>
    %21 = vector.extract_strided_slice %1 {offsets = [4, 0], sizes = [28, 32], strides = [1, 1]} : vector<32x32xf32> to vector<28x32xf32>
    %c0_19 = arith.constant 0 : index
    %c4 = arith.constant 4 : index
    %c0_20 = arith.constant 0 : index
    %c0_21 = arith.constant 0 : index
    %22 = vector.load %arg2[%c0_19, %c4, %c0_20, %c0_21] : memref<3x5x32x112xf32, #tpu.memory_space<vmem>>, vector<1x1x32x112xf32>
    %23 = vector.shape_cast %22 : vector<1x1x32x112xf32> to vector<32x112xf32>
    %cst_22 = arith.constant dense<0.000000e+00> : vector<28x112xf32>
    %24 = tpu.matmul %21, %23, %cst_22 {dimension_numbers = #tpu.dot_dimension_numbers<[1], [0], [0], [1], [0, 0, 1, 1], [], []>} : vector<28x32xf32>, vector<32x112xf32>, vector<28x112xf32> -> vector<28x112xf32>
    %25 = arith.addf %20, %24 : vector<28x112xf32>
    %c0_23 = arith.constant 0 : index
    %c1_24 = arith.constant 1 : index
    %c0_25 = arith.constant 0 : index
    %c0_26 = arith.constant 0 : index
    %26 = vector.load %arg1[%c0_23, %c1_24, %c0_25, %c0_26] : memref<1x3x32x32xf32, #tpu.memory_space<vmem>>, vector<1x1x32x32xf32>
    %27 = vector.shape_cast %26 : vector<1x1x32x32xf32> to vector<32x32xf32>
    %28 = vector.extract_strided_slice %27 {offsets = [0, 0], sizes = [28, 32], strides = [1, 1]} : vector<32x32xf32> to vector<28x32xf32>
    %c1_27 = arith.constant 1 : index
    %c0_28 = arith.constant 0 : index
    %c0_29 = arith.constant 0 : index
    %c0_30 = arith.constant 0 : index
    %29 = vector.load %arg2[%c1_27, %c0_28, %c0_29, %c0_30] : memref<3x5x32x112xf32, #tpu.memory_space<vmem>>, vector<1x1x32x112xf32>
    %30 = vector.shape_cast %29 : vector<1x1x32x112xf32> to vector<32x112xf32>
    %cst_31 = arith.constant dense<0.000000e+00> : vector<28x112xf32>
    %31 = tpu.matmul %28, %30, %cst_31 {dimension_numbers = #tpu.dot_dimension_numbers<[1], [0], [0], [1], [0, 0, 1, 1], [], []>} : vector<28x32xf32>, vector<32x112xf32>, vector<28x112xf32> -> vector<28x112xf32>
    %32 = arith.addf %25, %31 : vector<28x112xf32>
    %33 = vector.extract_strided_slice %27 {offsets = [1, 0], sizes = [28, 32], strides = [1, 1]} : vector<32x32xf32> to vector<28x32xf32>
    %c1_32 = arith.constant 1 : index
    %c1_33 = arith.constant 1 : index
    %c0_34 = arith.constant 0 : index
    %c0_35 = arith.constant 0 : index
    %34 = vector.load %arg2[%c1_32, %c1_33, %c0_34, %c0_35] : memref<3x5x32x112xf32, #tpu.memory_space<vmem>>, vector<1x1x32x112xf32>
    %35 = vector.shape_cast %34 : vector<1x1x32x112xf32> to vector<32x112xf32>
    %cst_36 = arith.constant dense<0.000000e+00> : vector<28x112xf32>
    %36 = tpu.matmul %33, %35, %cst_36 {dimension_numbers = #tpu.dot_dimension_numbers<[1], [0], [0], [1], [0, 0, 1, 1], [], []>} : vector<28x32xf32>, vector<32x112xf32>, vector<28x112xf32> -> vector<28x112xf32>
    %37 = arith.addf %32, %36 : vector<28x112xf32>
    %38 = vector.extract_strided_slice %27 {offsets = [2, 0], sizes = [28, 32], strides = [1, 1]} : vector<32x32xf32> to vector<28x32xf32>
    %c1_37 = arith.constant 1 : index
    %c2_38 = arith.constant 2 : index
    %c0_39 = arith.constant 0 : index
    %c0_40 = arith.constant 0 : index
    %39 = vector.load %arg2[%c1_37, %c2_38, %c0_39, %c0_40] : memref<3x5x32x112xf32, #tpu.memory_space<vmem>>, vector<1x1x32x112xf32>
    %40 = vector.shape_cast %39 : vector<1x1x32x112xf32> to vector<32x112xf32>
    %cst_41 = arith.constant dense<0.000000e+00> : vector<28x112xf32>
    %41 = tpu.matmul %38, %40, %cst_41 {dimension_numbers = #tpu.dot_dimension_numbers<[1], [0], [0], [1], [0, 0, 1, 1], [], []>} : vector<28x32xf32>, vector<32x112xf32>, vector<28x112xf32> -> vector<28x112xf32>
    %42 = arith.addf %37, %41 : vector<28x112xf32>
    %43 = vector.extract_strided_slice %27 {offsets = [3, 0], sizes = [28, 32], strides = [1, 1]} : vector<32x32xf32> to vector<28x32xf32>
    %c1_42 = arith.constant 1 : index
    %c3_43 = arith.constant 3 : index
    %c0_44 = arith.constant 0 : index
    %c0_45 = arith.constant 0 : index
    %44 = vector.load %arg2[%c1_42, %c3_43, %c0_44, %c0_45] : memref<3x5x32x112xf32, #tpu.memory_space<vmem>>, vector<1x1x32x112xf32>
    %45 = vector.shape_cast %44 : vector<1x1x32x112xf32> to vector<32x112xf32>
    %cst_46 = arith.constant dense<0.000000e+00> : vector<28x112xf32>
    %46 = tpu.matmul %43, %45, %cst_46 {dimension_numbers = #tpu.dot_dimension_numbers<[1], [0], [0], [1], [0, 0, 1, 1], [], []>} : vector<28x32xf32>, vector<32x112xf32>, vector<28x112xf32> -> vector<28x112xf32>
    %47 = arith.addf %42, %46 : vector<28x112xf32>
    %48 = vector.extract_strided_slice %27 {offsets = [4, 0], sizes = [28, 32], strides = [1, 1]} : vector<32x32xf32> to vector<28x32xf32>
    %c1_47 = arith.constant 1 : index
    %c4_48 = arith.constant 4 : index
    %c0_49 = arith.constant 0 : index
    %c0_50 = arith.constant 0 : index
    %49 = vector.load %arg2[%c1_47, %c4_48, %c0_49, %c0_50] : memref<3x5x32x112xf32, #tpu.memory_space<vmem>>, vector<1x1x32x112xf32>
    %50 = vector.shape_cast %49 : vector<1x1x32x112xf32> to vector<32x112xf32>
    %cst_51 = arith.constant dense<0.000000e+00> : vector<28x112xf32>
    %51 = tpu.matmul %48, %50, %cst_51 {dimension_numbers = #tpu.dot_dimension_numbers<[1], [0], [0], [1], [0, 0, 1, 1], [], []>} : vector<28x32xf32>, vector<32x112xf32>, vector<28x112xf32> -> vector<28x112xf32>
    %52 = arith.addf %47, %51 : vector<28x112xf32>
    %c0_52 = arith.constant 0 : index
    %c2_53 = arith.constant 2 : index
    %c0_54 = arith.constant 0 : index
    %c0_55 = arith.constant 0 : index
    %53 = vector.load %arg1[%c0_52, %c2_53, %c0_54, %c0_55] : memref<1x3x32x32xf32, #tpu.memory_space<vmem>>, vector<1x1x32x32xf32>
    %54 = vector.shape_cast %53 : vector<1x1x32x32xf32> to vector<32x32xf32>
    %55 = vector.extract_strided_slice %54 {offsets = [0, 0], sizes = [28, 32], strides = [1, 1]} : vector<32x32xf32> to vector<28x32xf32>
    %c2_56 = arith.constant 2 : index
    %c0_57 = arith.constant 0 : index
    %c0_58 = arith.constant 0 : index
    %c0_59 = arith.constant 0 : index
    %56 = vector.load %arg2[%c2_56, %c0_57, %c0_58, %c0_59] : memref<3x5x32x112xf32, #tpu.memory_space<vmem>>, vector<1x1x32x112xf32>
    %57 = vector.shape_cast %56 : vector<1x1x32x112xf32> to vector<32x112xf32>
    %cst_60 = arith.constant dense<0.000000e+00> : vector<28x112xf32>
    %58 = tpu.matmul %55, %57, %cst_60 {dimension_numbers = #tpu.dot_dimension_numbers<[1], [0], [0], [1], [0, 0, 1, 1], [], []>} : vector<28x32xf32>, vector<32x112xf32>, vector<28x112xf32> -> vector<28x112xf32>
    %59 = arith.addf %52, %58 : vector<28x112xf32>
    %60 = vector.extract_strided_slice %54 {offsets = [1, 0], sizes = [28, 32], strides = [1, 1]} : vector<32x32xf32> to vector<28x32xf32>
    %c2_61 = arith.constant 2 : index
    %c1_62 = arith.constant 1 : index
    %c0_63 = arith.constant 0 : index
    %c0_64 = arith.constant 0 : index
    %61 = vector.load %arg2[%c2_61, %c1_62, %c0_63, %c0_64] : memref<3x5x32x112xf32, #tpu.memory_space<vmem>>, vector<1x1x32x112xf32>
    %62 = vector.shape_cast %61 : vector<1x1x32x112xf32> to vector<32x112xf32>
    %cst_65 = arith.constant dense<0.000000e+00> : vector<28x112xf32>
    %63 = tpu.matmul %60, %62, %cst_65 {dimension_numbers = #tpu.dot_dimension_numbers<[1], [0], [0], [1], [0, 0, 1, 1], [], []>} : vector<28x32xf32>, vector<32x112xf32>, vector<28x112xf32> -> vector<28x112xf32>
    %64 = arith.addf %59, %63 : vector<28x112xf32>
    %65 = vector.extract_strided_slice %54 {offsets = [2, 0], sizes = [28, 32], strides = [1, 1]} : vector<32x32xf32> to vector<28x32xf32>
    %c2_66 = arith.constant 2 : index
    %c2_67 = arith.constant 2 : index
    %c0_68 = arith.constant 0 : index
    %c0_69 = arith.constant 0 : index
    %66 = vector.load %arg2[%c2_66, %c2_67, %c0_68, %c0_69] : memref<3x5x32x112xf32, #tpu.memory_space<vmem>>, vector<1x1x32x112xf32>
    %67 = vector.shape_cast %66 : vector<1x1x32x112xf32> to vector<32x112xf32>
    %cst_70 = arith.constant dense<0.000000e+00> : vector<28x112xf32>
    %68 = tpu.matmul %65, %67, %cst_70 {dimension_numbers = #tpu.dot_dimension_numbers<[1], [0], [0], [1], [0, 0, 1, 1], [], []>} : vector<28x32xf32>, vector<32x112xf32>, vector<28x112xf32> -> vector<28x112xf32>
    %69 = arith.addf %64, %68 : vector<28x112xf32>
    %70 = vector.extract_strided_slice %54 {offsets = [3, 0], sizes = [28, 32], strides = [1, 1]} : vector<32x32xf32> to vector<28x32xf32>
    %c2_71 = arith.constant 2 : index
    %c3_72 = arith.constant 3 : index
    %c0_73 = arith.constant 0 : index
    %c0_74 = arith.constant 0 : index
    %71 = vector.load %arg2[%c2_71, %c3_72, %c0_73, %c0_74] : memref<3x5x32x112xf32, #tpu.memory_space<vmem>>, vector<1x1x32x112xf32>
    %72 = vector.shape_cast %71 : vector<1x1x32x112xf32> to vector<32x112xf32>
    %cst_75 = arith.constant dense<0.000000e+00> : vector<28x112xf32>
    %73 = tpu.matmul %70, %72, %cst_75 {dimension_numbers = #tpu.dot_dimension_numbers<[1], [0], [0], [1], [0, 0, 1, 1], [], []>} : vector<28x32xf32>, vector<32x112xf32>, vector<28x112xf32> -> vector<28x112xf32>
    %74 = arith.addf %69, %73 : vector<28x112xf32>
    %75 = vector.extract_strided_slice %54 {offsets = [4, 0], sizes = [28, 32], strides = [1, 1]} : vector<32x32xf32> to vector<28x32xf32>
    %c2_76 = arith.constant 2 : index
    %c4_77 = arith.constant 4 : index
    %c0_78 = arith.constant 0 : index
    %c0_79 = arith.constant 0 : index
    %76 = vector.load %arg2[%c2_76, %c4_77, %c0_78, %c0_79] : memref<3x5x32x112xf32, #tpu.memory_space<vmem>>, vector<1x1x32x112xf32>
    %77 = vector.shape_cast %76 : vector<1x1x32x112xf32> to vector<32x112xf32>
    %cst_80 = arith.constant dense<0.000000e+00> : vector<28x112xf32>
    %78 = tpu.matmul %75, %77, %cst_80 {dimension_numbers = #tpu.dot_dimension_numbers<[1], [0], [0], [1], [0, 0, 1, 1], [], []>} : vector<28x32xf32>, vector<32x112xf32>, vector<28x112xf32> -> vector<28x112xf32>
    %79 = arith.addf %74, %78 : vector<28x112xf32>
    %c0_81 = arith.constant 0 : index
    %c0_82 = arith.constant 0 : index
    %80 = vector.load %arg3[%c0_81, %c0_82] : memref<1x112xf32, #tpu.memory_space<vmem>>, vector<1x112xf32>
    %81 = vector.broadcast %80 : vector<1x112xf32> to vector<28x112xf32>
    %82 = arith.addf %79, %81 : vector<28x112xf32>
    %c0_83 = arith.constant 0 : index
    %c0_84 = arith.constant 0 : index
    %83 = vector.load %arg4[%c0_83, %c0_84] : memref<112x56xf32, #tpu.memory_space<vmem>>, vector<112x56xf32>
    %cst_85 = arith.constant dense<0.000000e+00> : vector<28x56xf32>
    %84 = tpu.matmul %82, %83, %cst_85 {dimension_numbers = #tpu.dot_dimension_numbers<[1], [0], [0], [1], [0, 0, 1, 1], [], []>} : vector<28x112xf32>, vector<112x56xf32>, vector<28x56xf32> -> vector<28x56xf32>
    %c0_86 = arith.constant 0 : index
    %c0_87 = arith.constant 0 : index
    %85 = vector.load %arg5[%c0_86, %c0_87] : memref<112x56xf32, #tpu.memory_space<vmem>>, vector<112x56xf32>
    %cst_88 = arith.constant dense<0.000000e+00> : vector<28x56xf32>
    %86 = tpu.matmul %82, %85, %cst_88 {dimension_numbers = #tpu.dot_dimension_numbers<[1], [0], [0], [1], [0, 0, 1, 1], [], []>} : vector<28x112xf32>, vector<112x56xf32>, vector<28x56xf32> -> vector<28x56xf32>
    %87 = arith.maximumf %84, %86 : vector<28x56xf32>
    %c0_89 = arith.constant 0 : index
    %c0_90 = arith.constant 0 : index
    %88 = vector.load %arg6[%c0_89, %c0_90] : memref<14x28xf32, #tpu.memory_space<vmem>>, vector<14x28xf32>
    %cst_91 = arith.constant dense<0.000000e+00> : vector<14x56xf32>
    %89 = tpu.matmul %88, %87, %cst_91 {dimension_numbers = #tpu.dot_dimension_numbers<[1], [0], [0], [1], [0, 0, 1, 1], [], []>} : vector<14x28xf32>, vector<28x56xf32>, vector<14x56xf32> -> vector<14x56xf32>
    %c0_92 = arith.constant 0 : index
    %c0_93 = arith.constant 0 : index
    %90 = vector.load %arg7[%c0_92, %c0_93] : memref<14x28xf32, #tpu.memory_space<vmem>>, vector<14x28xf32>
    %cst_94 = arith.constant dense<0.000000e+00> : vector<14x56xf32>
    %91 = tpu.matmul %90, %87, %cst_94 {dimension_numbers = #tpu.dot_dimension_numbers<[1], [0], [0], [1], [0, 0, 1, 1], [], []>} : vector<14x28xf32>, vector<28x56xf32>, vector<14x56xf32> -> vector<14x56xf32>
    %92 = arith.maximumf %89, %91 : vector<14x56xf32>
    %cst_95 = arith.constant 0.000000e+00 : f32
    %93 = vector.broadcast %cst_95 : f32 to vector<14x56xf32>
    %94 = arith.maximumf %92, %93 : vector<14x56xf32>
    %95 = vector.extract_strided_slice %94 {offsets = [0, 0], sizes = [10, 56], strides = [1, 1]} : vector<14x56xf32> to vector<10x56xf32>
    %c0_96 = arith.constant 0 : index
    %c0_97 = arith.constant 0 : index
    %c0_98 = arith.constant 0 : index
    %96 = vector.load %arg8[%c0_96, %c0_97, %c0_98] : memref<5x56x40xf32, #tpu.memory_space<vmem>>, vector<1x56x40xf32>
    %97 = vector.shape_cast %96 : vector<1x56x40xf32> to vector<56x40xf32>
    %cst_99 = arith.constant dense<0.000000e+00> : vector<10x40xf32>
    %98 = tpu.matmul %95, %97, %cst_99 {dimension_numbers = #tpu.dot_dimension_numbers<[1], [0], [0], [1], [0, 0, 1, 1], [], []>} : vector<10x56xf32>, vector<56x40xf32>, vector<10x40xf32> -> vector<10x40xf32>
    %99 = vector.extract_strided_slice %94 {offsets = [1, 0], sizes = [10, 56], strides = [1, 1]} : vector<14x56xf32> to vector<10x56xf32>
    %c1_100 = arith.constant 1 : index
    %c0_101 = arith.constant 0 : index
    %c0_102 = arith.constant 0 : index
    %100 = vector.load %arg8[%c1_100, %c0_101, %c0_102] : memref<5x56x40xf32, #tpu.memory_space<vmem>>, vector<1x56x40xf32>
    %101 = vector.shape_cast %100 : vector<1x56x40xf32> to vector<56x40xf32>
    %cst_103 = arith.constant dense<0.000000e+00> : vector<10x40xf32>
    %102 = tpu.matmul %99, %101, %cst_103 {dimension_numbers = #tpu.dot_dimension_numbers<[1], [0], [0], [1], [0, 0, 1, 1], [], []>} : vector<10x56xf32>, vector<56x40xf32>, vector<10x40xf32> -> vector<10x40xf32>
    %103 = arith.addf %98, %102 : vector<10x40xf32>
    %104 = vector.extract_strided_slice %94 {offsets = [2, 0], sizes = [10, 56], strides = [1, 1]} : vector<14x56xf32> to vector<10x56xf32>
    %c2_104 = arith.constant 2 : index
    %c0_105 = arith.constant 0 : index
    %c0_106 = arith.constant 0 : index
    %105 = vector.load %arg8[%c2_104, %c0_105, %c0_106] : memref<5x56x40xf32, #tpu.memory_space<vmem>>, vector<1x56x40xf32>
    %106 = vector.shape_cast %105 : vector<1x56x40xf32> to vector<56x40xf32>
    %cst_107 = arith.constant dense<0.000000e+00> : vector<10x40xf32>
    %107 = tpu.matmul %104, %106, %cst_107 {dimension_numbers = #tpu.dot_dimension_numbers<[1], [0], [0], [1], [0, 0, 1, 1], [], []>} : vector<10x56xf32>, vector<56x40xf32>, vector<10x40xf32> -> vector<10x40xf32>
    %108 = arith.addf %103, %107 : vector<10x40xf32>
    %109 = vector.extract_strided_slice %94 {offsets = [3, 0], sizes = [10, 56], strides = [1, 1]} : vector<14x56xf32> to vector<10x56xf32>
    %c3_108 = arith.constant 3 : index
    %c0_109 = arith.constant 0 : index
    %c0_110 = arith.constant 0 : index
    %110 = vector.load %arg8[%c3_108, %c0_109, %c0_110] : memref<5x56x40xf32, #tpu.memory_space<vmem>>, vector<1x56x40xf32>
    %111 = vector.shape_cast %110 : vector<1x56x40xf32> to vector<56x40xf32>
    %cst_111 = arith.constant dense<0.000000e+00> : vector<10x40xf32>
    %112 = tpu.matmul %109, %111, %cst_111 {dimension_numbers = #tpu.dot_dimension_numbers<[1], [0], [0], [1], [0, 0, 1, 1], [], []>} : vector<10x56xf32>, vector<56x40xf32>, vector<10x40xf32> -> vector<10x40xf32>
    %113 = arith.addf %108, %112 : vector<10x40xf32>
    %114 = vector.extract_strided_slice %94 {offsets = [4, 0], sizes = [10, 56], strides = [1, 1]} : vector<14x56xf32> to vector<10x56xf32>
    %c4_112 = arith.constant 4 : index
    %c0_113 = arith.constant 0 : index
    %c0_114 = arith.constant 0 : index
    %115 = vector.load %arg8[%c4_112, %c0_113, %c0_114] : memref<5x56x40xf32, #tpu.memory_space<vmem>>, vector<1x56x40xf32>
    %116 = vector.shape_cast %115 : vector<1x56x40xf32> to vector<56x40xf32>
    %cst_115 = arith.constant dense<0.000000e+00> : vector<10x40xf32>
    %117 = tpu.matmul %114, %116, %cst_115 {dimension_numbers = #tpu.dot_dimension_numbers<[1], [0], [0], [1], [0, 0, 1, 1], [], []>} : vector<10x56xf32>, vector<56x40xf32>, vector<10x40xf32> -> vector<10x40xf32>
    %118 = arith.addf %113, %117 : vector<10x40xf32>
    %c0_116 = arith.constant 0 : index
    %c0_117 = arith.constant 0 : index
    %119 = vector.load %arg9[%c0_116, %c0_117] : memref<1x40xf32, #tpu.memory_space<vmem>>, vector<1x40xf32>
    %120 = vector.broadcast %119 : vector<1x40xf32> to vector<10x40xf32>
    %121 = arith.addf %118, %120 : vector<10x40xf32>
    %c0_118 = arith.constant 0 : index
    %c0_119 = arith.constant 0 : index
    %122 = vector.load %arg10[%c0_118, %c0_119] : memref<40x20xf32, #tpu.memory_space<vmem>>, vector<40x20xf32>
    %cst_120 = arith.constant dense<0.000000e+00> : vector<10x20xf32>
    %123 = tpu.matmul %121, %122, %cst_120 {dimension_numbers = #tpu.dot_dimension_numbers<[1], [0], [0], [1], [0, 0, 1, 1], [], []>} : vector<10x40xf32>, vector<40x20xf32>, vector<10x20xf32> -> vector<10x20xf32>
    %c0_121 = arith.constant 0 : index
    %c0_122 = arith.constant 0 : index
    %124 = vector.load %arg11[%c0_121, %c0_122] : memref<40x20xf32, #tpu.memory_space<vmem>>, vector<40x20xf32>
    %cst_123 = arith.constant dense<0.000000e+00> : vector<10x20xf32>
    %125 = tpu.matmul %121, %124, %cst_123 {dimension_numbers = #tpu.dot_dimension_numbers<[1], [0], [0], [1], [0, 0, 1, 1], [], []>} : vector<10x40xf32>, vector<40x20xf32>, vector<10x20xf32> -> vector<10x20xf32>
    %126 = arith.maximumf %123, %125 : vector<10x20xf32>
    %c0_124 = arith.constant 0 : index
    %c0_125 = arith.constant 0 : index
    %127 = vector.load %arg12[%c0_124, %c0_125] : memref<5x10xf32, #tpu.memory_space<vmem>>, vector<5x10xf32>
    %cst_126 = arith.constant dense<0.000000e+00> : vector<5x20xf32>
    %128 = tpu.matmul %127, %126, %cst_126 {dimension_numbers = #tpu.dot_dimension_numbers<[1], [0], [0], [1], [0, 0, 1, 1], [], []>} : vector<5x10xf32>, vector<10x20xf32>, vector<5x20xf32> -> vector<5x20xf32>
    %c0_127 = arith.constant 0 : index
    %c0_128 = arith.constant 0 : index
    %129 = vector.load %arg13[%c0_127, %c0_128] : memref<5x10xf32, #tpu.memory_space<vmem>>, vector<5x10xf32>
    %cst_129 = arith.constant dense<0.000000e+00> : vector<5x20xf32>
    %130 = tpu.matmul %129, %126, %cst_129 {dimension_numbers = #tpu.dot_dimension_numbers<[1], [0], [0], [1], [0, 0, 1, 1], [], []>} : vector<5x10xf32>, vector<10x20xf32>, vector<5x20xf32> -> vector<5x20xf32>
    %131 = arith.maximumf %128, %130 : vector<5x20xf32>
    %cst_130 = arith.constant 0.000000e+00 : f32
    %132 = vector.broadcast %cst_130 : f32 to vector<5x20xf32>
    %133 = arith.maximumf %131, %132 : vector<5x20xf32>
    %134 = vector.extract_strided_slice %133 {offsets = [0, 0], sizes = [1, 20], strides = [1, 1]} : vector<5x20xf32> to vector<1x20xf32>
    %c0_131 = arith.constant 0 : index
    %c0_132 = arith.constant 0 : index
    %c0_133 = arith.constant 0 : index
    %135 = vector.load %arg14[%c0_131, %c0_132, %c0_133] : memref<5x20x128xf32, #tpu.memory_space<vmem>>, vector<1x20x128xf32>
    %136 = vector.shape_cast %135 : vector<1x20x128xf32> to vector<20x128xf32>
    %cst_134 = arith.constant dense<0.000000e+00> : vector<1x128xf32>
    %137 = tpu.matmul %134, %136, %cst_134 {dimension_numbers = #tpu.dot_dimension_numbers<[1], [0], [0], [1], [0, 0, 1, 1], [], []>} : vector<1x20xf32>, vector<20x128xf32>, vector<1x128xf32> -> vector<1x128xf32>
    %138 = vector.extract_strided_slice %133 {offsets = [1, 0], sizes = [1, 20], strides = [1, 1]} : vector<5x20xf32> to vector<1x20xf32>
    %c1_135 = arith.constant 1 : index
    %c0_136 = arith.constant 0 : index
    %c0_137 = arith.constant 0 : index
    %139 = vector.load %arg14[%c1_135, %c0_136, %c0_137] : memref<5x20x128xf32, #tpu.memory_space<vmem>>, vector<1x20x128xf32>
    %140 = vector.shape_cast %139 : vector<1x20x128xf32> to vector<20x128xf32>
    %cst_138 = arith.constant dense<0.000000e+00> : vector<1x128xf32>
    %141 = tpu.matmul %138, %140, %cst_138 {dimension_numbers = #tpu.dot_dimension_numbers<[1], [0], [0], [1], [0, 0, 1, 1], [], []>} : vector<1x20xf32>, vector<20x128xf32>, vector<1x128xf32> -> vector<1x128xf32>
    %142 = arith.addf %137, %141 : vector<1x128xf32>
    %143 = vector.extract_strided_slice %133 {offsets = [2, 0], sizes = [1, 20], strides = [1, 1]} : vector<5x20xf32> to vector<1x20xf32>
    %c2_139 = arith.constant 2 : index
    %c0_140 = arith.constant 0 : index
    %c0_141 = arith.constant 0 : index
    %144 = vector.load %arg14[%c2_139, %c0_140, %c0_141] : memref<5x20x128xf32, #tpu.memory_space<vmem>>, vector<1x20x128xf32>
    %145 = vector.shape_cast %144 : vector<1x20x128xf32> to vector<20x128xf32>
    %cst_142 = arith.constant dense<0.000000e+00> : vector<1x128xf32>
    %146 = tpu.matmul %143, %145, %cst_142 {dimension_numbers = #tpu.dot_dimension_numbers<[1], [0], [0], [1], [0, 0, 1, 1], [], []>} : vector<1x20xf32>, vector<20x128xf32>, vector<1x128xf32> -> vector<1x128xf32>
    %147 = arith.addf %142, %146 : vector<1x128xf32>
    %148 = vector.extract_strided_slice %133 {offsets = [3, 0], sizes = [1, 20], strides = [1, 1]} : vector<5x20xf32> to vector<1x20xf32>
    %c3_143 = arith.constant 3 : index
    %c0_144 = arith.constant 0 : index
    %c0_145 = arith.constant 0 : index
    %149 = vector.load %arg14[%c3_143, %c0_144, %c0_145] : memref<5x20x128xf32, #tpu.memory_space<vmem>>, vector<1x20x128xf32>
    %150 = vector.shape_cast %149 : vector<1x20x128xf32> to vector<20x128xf32>
    %cst_146 = arith.constant dense<0.000000e+00> : vector<1x128xf32>
    %151 = tpu.matmul %148, %150, %cst_146 {dimension_numbers = #tpu.dot_dimension_numbers<[1], [0], [0], [1], [0, 0, 1, 1], [], []>} : vector<1x20xf32>, vector<20x128xf32>, vector<1x128xf32> -> vector<1x128xf32>
    %152 = arith.addf %147, %151 : vector<1x128xf32>
    %153 = vector.extract_strided_slice %133 {offsets = [4, 0], sizes = [1, 20], strides = [1, 1]} : vector<5x20xf32> to vector<1x20xf32>
    %c4_147 = arith.constant 4 : index
    %c0_148 = arith.constant 0 : index
    %c0_149 = arith.constant 0 : index
    %154 = vector.load %arg14[%c4_147, %c0_148, %c0_149] : memref<5x20x128xf32, #tpu.memory_space<vmem>>, vector<1x20x128xf32>
    %155 = vector.shape_cast %154 : vector<1x20x128xf32> to vector<20x128xf32>
    %cst_150 = arith.constant dense<0.000000e+00> : vector<1x128xf32>
    %156 = tpu.matmul %153, %155, %cst_150 {dimension_numbers = #tpu.dot_dimension_numbers<[1], [0], [0], [1], [0, 0, 1, 1], [], []>} : vector<1x20xf32>, vector<20x128xf32>, vector<1x128xf32> -> vector<1x128xf32>
    %157 = arith.addf %152, %156 : vector<1x128xf32>
    %c0_151 = arith.constant 0 : index
    %c0_152 = arith.constant 0 : index
    %158 = vector.load %arg15[%c0_151, %c0_152] : memref<1x128xf32, #tpu.memory_space<vmem>>, vector<1x128xf32>
    %159 = arith.addf %157, %158 : vector<1x128xf32>
    %cst_153 = arith.constant 0.000000e+00 : f32
    %160 = vector.broadcast %cst_153 : f32 to vector<1x128xf32>
    %161 = arith.maximumf %159, %160 : vector<1x128xf32>
    %c0_154 = arith.constant 0 : index
    %c0_155 = arith.constant 0 : index
    %162 = vector.load %arg16[%c0_154, %c0_155] : memref<128x128xf32, #tpu.memory_space<vmem>>, vector<128x128xf32>
    %cst_156 = arith.constant dense<0.000000e+00> : vector<1x128xf32>
    %163 = tpu.matmul %161, %162, %cst_156 {dimension_numbers = #tpu.dot_dimension_numbers<[1], [0], [0], [1], [0, 0, 1, 1], [], []>} : vector<1x128xf32>, vector<128x128xf32>, vector<1x128xf32> -> vector<1x128xf32>
    %c0_157 = arith.constant 0 : index
    %c0_158 = arith.constant 0 : index
    %164 = vector.load %arg17[%c0_157, %c0_158] : memref<1x128xf32, #tpu.memory_space<vmem>>, vector<1x128xf32>
    %165 = arith.addf %163, %164 : vector<1x128xf32>
    %cst_159 = arith.constant dense<0xFF800000> : vector<1xf32>
    %166 = vector.multi_reduction <maximumf>, %165, %cst_159 [1] : vector<1x128xf32> to vector<1xf32>
    %167 = vector.shape_cast %166 : vector<1xf32> to vector<1x1xf32>
    %168 = vector.broadcast %167 : vector<1x1xf32> to vector<1x128xf32>
    %169 = arith.subf %165, %168 : vector<1x128xf32>
    %170 = math.exp %169 : vector<1x128xf32>
    %cst_160 = arith.constant dense<0.000000e+00> : vector<1xf32>
    %171 = vector.multi_reduction <add>, %170, %cst_160 [1] : vector<1x128xf32> to vector<1xf32>
    %172 = vector.shape_cast %171 : vector<1xf32> to vector<1x1xf32>
    %173 = tpu.reciprocal %172 {approx = true} : vector<1x1xf32> -> vector<1x1xf32>
    %174 = vector.broadcast %173 : vector<1x1xf32> to vector<1x128xf32>
    %175 = arith.mulf %170, %174 : vector<1x128xf32>
    %176 = vector.extract_strided_slice %175 {offsets = [0, 0], sizes = [1, 100], strides = [1, 1]} : vector<1x128xf32> to vector<1x100xf32>
    %c0_161 = arith.constant 0 : index
    %c0_162 = arith.constant 0 : index
    %c0_163 = arith.constant 0 : index
    %177 = vector.load %arg18[%c0_161, %c0_162, %c0_163] : memref<1x1x100xf32, #tpu.memory_space<vmem>>, vector<1x1x100xf32>
    %178 = vector.shape_cast %177 : vector<1x1x100xf32> to vector<1x100xf32>
    %179 = vector.shape_cast %176 : vector<1x100xf32> to vector<1x1x100xf32>
    tpu.vector_store %arg18[%c0_161, %c0_162, %c0_163], %179 {strides = array<i32>} : memref<1x1x100xf32, #tpu.memory_space<vmem>>, vector<1x1x100xf32>,
    return
  }
  func.func @transform_0(%arg0: i32) -> (i32, i32, i32, i32) {
    %c0_i32 = arith.constant 0 : i32
    %c0_i32_0 = arith.constant 0 : i32
    %c0_i32_1 = arith.constant 0 : i32
    %c0_i32_2 = arith.constant 0 : i32
    return %arg0, %c0_i32, %c0_i32_0, %c0_i32_1 : i32, i32, i32, i32
  }
  func.func @transform_1(%arg0: i32) -> (i32, i32, i32, i32) {
    %c0_i32 = arith.constant 0 : i32
    %c0_i32_0 = arith.constant 0 : i32
    %c0_i32_1 = arith.constant 0 : i32
    %c0_i32_2 = arith.constant 0 : i32
    %c0_i32_3 = arith.constant 0 : i32
    return %c0_i32, %c0_i32_0, %c0_i32_1, %c0_i32_2 : i32, i32, i32, i32
  }
  func.func @transform_2(%arg0: i32) -> (i32, i32) {
    %c0_i32 = arith.constant 0 : i32
    %c0_i32_0 = arith.constant 0 : i32
    %c0_i32_1 = arith.constant 0 : i32
    return %c0_i32, %c0_i32_0 : i32, i32
  }
  func.func @transform_3(%arg0: i32) -> (i32, i32) {
    %c0_i32 = arith.constant 0 : i32
    %c0_i32_0 = arith.constant 0 : i32
    %c0_i32_1 = arith.constant 0 : i32
    return %c0_i32, %c0_i32_0 : i32, i32
  }
  func.func @transform_4(%arg0: i32) -> (i32, i32) {
    %c0_i32 = arith.constant 0 : i32
    %c0_i32_0 = arith.constant 0 : i32
    %c0_i32_1 = arith.constant 0 : i32
    return %c0_i32, %c0_i32_0 : i32, i32
  }
  func.func @transform_5(%arg0: i32) -> (i32, i32) {
    %c0_i32 = arith.constant 0 : i32
    %c0_i32_0 = arith.constant 0 : i32
    %c0_i32_1 = arith.constant 0 : i32
    return %c0_i32, %c0_i32_0 : i32, i32
  }
  func.func @transform_6(%arg0: i32) -> (i32, i32) {
    %c0_i32 = arith.constant 0 : i32
    %c0_i32_0 = arith.constant 0 : i32
    %c0_i32_1 = arith.constant 0 : i32
    return %c0_i32, %c0_i32_0 : i32, i32
  }
  func.func @transform_7(%arg0: i32) -> (i32, i32, i32) {
    %c0_i32 = arith.constant 0 : i32
    %c0_i32_0 = arith.constant 0 : i32
    %c0_i32_1 = arith.constant 0 : i32
    %c0_i32_2 = arith.constant 0 : i32
    return %c0_i32, %c0_i32_0, %c0_i32_1 : i32, i32, i32
  }
  func.func @transform_8(%arg0: i32) -> (i32, i32) {
    %c0_i32 = arith.constant 0 : i32
    %c0_i32_0 = arith.constant 0 : i32
    %c0_i32_1 = arith.constant 0 : i32
    return %c0_i32, %c0_i32_0 : i32, i32
  }
  func.func @transform_9(%arg0: i32) -> (i32, i32) {
    %c0_i32 = arith.constant 0 : i32
    %c0_i32_0 = arith.constant 0 : i32
    %c0_i32_1 = arith.constant 0 : i32
    return %c0_i32, %c0_i32_0 : i32, i32
  }
  func.func @transform_10(%arg0: i32) -> (i32, i32) {
    %c0_i32 = arith.constant 0 : i32
    %c0_i32_0 = arith.constant 0 : i32
    %c0_i32_1 = arith.constant 0 : i32
    return %c0_i32, %c0_i32_0 : i32, i32
  }
  func.func @transform_11(%arg0: i32) -> (i32, i32) {
    %c0_i32 = arith.constant 0 : i32
    %c0_i32_0 = arith.constant 0 : i32
    %c0_i32_1 = arith.constant 0 : i32
    return %c0_i32, %c0_i32_0 : i32, i32
  }
  func.func @transform_12(%arg0: i32) -> (i32, i32) {
    %c0_i32 = arith.constant 0 : i32
    %c0_i32_0 = arith.constant 0 : i32
    %c0_i32_1 = arith.constant 0 : i32
    return %c0_i32, %c0_i32_0 : i32, i32
  }
  func.func @transform_13(%arg0: i32) -> (i32, i32, i32) {
    %c0_i32 = arith.constant 0 : i32
    %c0_i32_0 = arith.constant 0 : i32
    %c0_i32_1 = arith.constant 0 : i32
    %c0_i32_2 = arith.constant 0 : i32
    return %c0_i32, %c0_i32_0, %c0_i32_1 : i32, i32, i32
  }
  func.func @transform_14(%arg0: i32) -> (i32, i32) {
    %c0_i32 = arith.constant 0 : i32
    %c0_i32_0 = arith.constant 0 : i32
    %c0_i32_1 = arith.constant 0 : i32
    return %c0_i32, %c0_i32_0 : i32, i32
  }
  func.func @transform_15(%arg0: i32) -> (i32, i32) {
    %c0_i32 = arith.constant 0 : i32
    %c0_i32_0 = arith.constant 0 : i32
    %c0_i32_1 = arith.constant 0 : i32
    return %c0_i32, %c0_i32_0 : i32, i32
  }
  func.func @transform_16(%arg0: i32) -> (i32, i32) {
    %c0_i32 = arith.constant 0 : i32
    %c0_i32_0 = arith.constant 0 : i32
    %c0_i32_1 = arith.constant 0 : i32
    return %c0_i32, %c0_i32_0 : i32, i32
  }
  func.func @transform_17(%arg0: i32) -> (i32, i32, i32) {
    %c0_i32 = arith.constant 0 : i32
    %c0_i32_0 = arith.constant 0 : i32
    %c0_i32_1 = arith.constant 0 : i32
    return %arg0, %c0_i32, %c0_i32_0 : i32, i32, i32
  }
}

</mosaic_0001>

<llo_original>
// kernel: net_forward.1
$region0: #{net_forward.1}
  #allocation0 [shape = 'u32[]', space=smem, size = 0x4, offset = 0x4, fixed_abs, tag = 'smem constant byte address 0x4 - core index']
  #allocation1 [shape = 'u32[144,128]{1,0:T(1,128)}', space=vmem, size = 0x12000, scoped, tag = 'internal scratch']
  %s0 = inlined_call_operand.vmem [shape: f32[2,3,32,32], index: 0, kind: input, shape index: {}]
  %s1 = inlined_call_operand.vmem [shape: f32[3,5,32,112], index: 1, kind: input, shape index: {}]
  %s2 = inlined_call_operand.vmem [shape: f32[1,112], index: 2, kind: input, shape index: {}]
  %s3 = inlined_call_operand.vmem [shape: f32[112,56], index: 3, kind: input, shape index: {}]
  %s4 = inlined_call_operand.vmem [shape: f32[112,56], index: 4, kind: input, shape index: {}]
  %s5 = inlined_call_operand.hbm [shape: f32[14,28], index: 5, kind: input, shape index: {}]
  %s6 = inlined_call_operand.hbm [shape: f32[14,28], index: 6, kind: input, shape index: {}]
  %s7 = inlined_call_operand.vmem [shape: f32[5,56,40], index: 7, kind: input, shape index: {}]
  %s8 = inlined_call_operand.vmem [shape: f32[1,40], index: 8, kind: input, shape index: {}]
  %s9 = inlined_call_operand.vmem [shape: f32[40,20], index: 9, kind: input, shape index: {}]
  %s10 = inlined_call_operand.vmem [shape: f32[40,20], index: 10, kind: input, shape index: {}]
  %s11 = inlined_call_operand.hbm [shape: f32[5,10], index: 11, kind: input, shape index: {}]
  %s12 = inlined_call_operand.vmem [shape: f32[5,10], index: 12, kind: input, shape index: {}]
  %s13 = inlined_call_operand.hbm [shape: f32[5,20,128], index: 13, kind: input, shape index: {}]
  %s14 = inlined_call_operand.vmem [shape: f32[1,128], index: 14, kind: input, shape index: {}]
  %s15 = inlined_call_operand.hbm [shape: f32[128,128], index: 15, kind: input, shape index: {}]
  %s16 = inlined_call_operand.vmem [shape: f32[1,128], index: 16, kind: input, shape index: {}]
  %s17 = inlined_call_operand.hbm [shape: f32[2,1,100], index: 17, kind: output, shape index: {}]
  %s18 = sld [smem:[#allocation0]]
  $region121: #{net_forward.1} parent=0
    _
  %s20 = ssub.s32 1, %s18
  %s21 = scalar_select 0, %s20, %s18
  $region1: #{net_forward.1} parent=0
    #allocation2 [shape = 'u8[8192]{0}', space=vmem, size = 0x2000, scoped, tag = 'input window, operand 5, single buffered']
    #allocation3 [shape = 's32[2]{0}', space=sflag, size = 0x8, scoped, tag = 'scoped memory for net_forward.1']
    #allocation4 [shape = 's32[2]{0}', space=sflag, size = 0x8, scoped, tag = 'scoped memory for net_forward.1']
    #allocation5 [shape = 'u8[8192]{0}', space=vmem, size = 0x2000, scoped, tag = 'input window, operand 6, single buffered']
    #allocation6 [shape = 's32[1]{0}', space=sflag, size = 0x4, scoped, tag = 'scoped memory for net_forward.1']
    #allocation7 [shape = 'u8[4096]{0}', space=vmem, size = 0x1000, scoped, tag = 'input window, operand 11, single buffered']
    #allocation8 [shape = 'u8[61440]{0}', space=vmem, size = 0xf000, scoped, tag = 'input window, operand 13, single buffered']
    #allocation9 [shape = 's32[1]{0}', space=sflag, size = 0x4, scoped, tag = 'scoped memory for net_forward.1']
    #allocation10 [shape = 'u8[65536]{0}', space=vmem, size = 0x10000, scoped, tag = 'input window, operand 15, single buffered']
    #allocation11 [shape = 'u8[1024]{0}', space=vmem, size = 0x400, scoped, tag = 'output window, operand 0']
    %22 = vsyncpa [#allocation3], 0
    %23 = vsyncpa [#allocation6], 0
    %24 = vsyncpa [#allocation9], 0
    %25 = vsyncpa [#allocation4], 0
    %s26 = scalar_lea.sflag [#allocation4], 1
    %27 = vsyncpa %s26, 0
    loop: start=0, step=1, limit=4
    $region2: #{net_forward.1} parent=1 // loop_pre_header
      _
    $region3: #{net_forward.1} parent=1 // loop_header
      %s29 = sphi 0, %s33
      %p30 = scmp.ge.s32.totalorder %s29, 4
      %s39 = sphi 0, %s41
      %s42 = sphi 0, %s39
      %s43 = sphi 0, %s42
      %s59 = sphi 0, %s43
      %s63 = sphi 0, %s63
      %s65 = sphi 0, %s63
      %s66 = sphi 0, %s65
      %s80 = sphi 0, %s66
      %s84 = sphi 0, %s84
      %s86 = sphi 0, %s84
      %s87 = sphi 0, %s86
      %s101 = sphi 0, %s87
      %s105 = sphi 0, %s105
      %s107 = sphi 0, %s105
      %s108 = sphi 0, %s107
      %s122 = sphi 0, %s108
      %s126 = sphi 0, %s126
      %s128 = sphi 0, %s126
      %s129 = sphi 0, %s128
      %s143 = sphi 0, %s129
      %s147 = sphi 0, %s147
      %s149 = sphi 0, %s147
      %s150 = sphi 0, %s149
      %s164 = sphi 0, %s150
      %s168 = sphi 0, %s168
      %s170 = sphi 0, %s168
      %s171 = sphi 0, %s170
      %s185 = sphi 0, %s171
      %s189 = sphi 0, %s189
      %s191 = sphi 0, %s189
      %s192 = sphi 0, %s191
      %s206 = sphi 0, %s192
      %s210 = sphi 0, %s210
      %s212 = sphi 0, %s210
      %s213 = sphi 0, %s212
      %s227 = sphi 0, %s213
      %s231 = sphi 0, %s231
      %s233 = sphi 0, %s231
      %s234 = sphi 0, %s233
      %s248 = sphi 0, %s234
      %s252 = sphi 0, %s252
      %s254 = sphi 0, %s252
      %s255 = sphi 0, %s254
      %s269 = sphi 0, %s255
      %s273 = sphi 0, %s273
      %s275 = sphi 0, %s273
      %s276 = sphi 0, %s275
      %s290 = sphi 0, %s276
      %s294 = sphi 0, %s294
      %s296 = sphi 0, %s294
      %s297 = sphi 0, %s296
      %s311 = sphi 0, %s297
      %s315 = sphi 0, %s315
      %s317 = sphi 0, %s315
      %s318 = sphi 0, %s317
      %s332 = sphi 0, %s318
      %s336 = sphi 0, %s336
      %s338 = sphi 0, %s336
      %s339 = sphi 0, %s338
      %s353 = sphi 0, %s339
      %s357 = sphi 0, %s357
      %s359 = sphi 0, %s357
      %s360 = sphi 0, %s359
      %s374 = sphi 0, %s360
      %s378 = sphi 0, %s378
      %s380 = sphi 0, %s378
      %s381 = sphi 0, %s380
      %s395 = sphi 0, %s381
      %s401 = sphi 0, %s403
      %s404 = sphi 0, %s401
      %s405 = sphi 0, %s404
      %s421 = sphi 0, %s405
    $region4: #{net_forward.1} parent=1 // loop_header_branch
      %32 = sbr.rel (%p30) target = $region8
    $region5: #{net_forward.1} parent=1 // loop_body
      %s34 = ssub.s32 %s29, 1
      %s35 = ssub.s32 %s29, 2
      %s36 = sadd.s32 %s29, 1
      %s37 = ssub.s32 %s29, %s36
      %p38 = scmp.eq.s32.totalorder %s37, 0
      %s40 = sadd.s32 %s39, 1
      %s41 = scalar_select %p38, %s39, %s40
      %p44 = pneg %p38
      %p45 = scmp.eq.s32.totalorder %s29, 1
      %p46 = por %p44, %p45
      %p47 = scmp.ne.s32.totalorder %s39, %s42
      %p48 = scmp.eq.s32.totalorder %s29, 0
      %p49 = por %p47, %p48
      %p50 = scmp.ne.s32.totalorder %s39, %s42
      %p51 = scmp.eq.s32.totalorder %s34, 1
      %p52 = por %p50, %p51
      %p53 = scmp.ne.s32.totalorder %s42, %s43
      %p54 = scmp.eq.s32.totalorder %s34, 0
      %p55 = por %p53, %p54
      %p56 = scmp.ne.s32.totalorder %s42, %s43
      %p57 = scmp.eq.s32.totalorder %s35, 1
      %p58 = por %p56, %p57
      %p60 = scmp.ne.s32.totalorder %s43, %s59
      %p61 = scmp.eq.s32.totalorder %s35, 0
      %p62 = por %p60, %p61
      %s64 = sadd.s32 %s63, 1
      %p67 = scmp.eq.s32.totalorder %s29, 1
      %p68 = scmp.ne.s32.totalorder %s63, %s65
      %p69 = scmp.eq.s32.totalorder %s29, 0
      %p70 = por %p68, %p69
      %p71 = scmp.ne.s32.totalorder %s63, %s65
      %p72 = scmp.eq.s32.totalorder %s34, 1
      %p73 = por %p71, %p72
      %p74 = scmp.ne.s32.totalorder %s65, %s66
      %p75 = scmp.eq.s32.totalorder %s34, 0
      %p76 = por %p74, %p75
      %p77 = scmp.ne.s32.totalorder %s65, %s66
      %p78 = scmp.eq.s32.totalorder %s35, 1
      %p79 = por %p77, %p78
      %p81 = scmp.ne.s32.totalorder %s66, %s80
      %p82 = scmp.eq.s32.totalorder %s35, 0
      %p83 = por %p81, %p82
      %s85 = sadd.s32 %s84, 1
      %p88 = scmp.eq.s32.totalorder %s29, 1
      %p89 = scmp.ne.s32.totalorder %s84, %s86
      %p90 = scmp.eq.s32.totalorder %s29, 0
      %p91 = por %p89, %p90
      %p92 = scmp.ne.s32.totalorder %s84, %s86
      %p93 = scmp.eq.s32.totalorder %s34, 1
      %p94 = por %p92, %p93
      %p95 = scmp.ne.s32.totalorder %s86, %s87
      %p96 = scmp.eq.s32.totalorder %s34, 0
      %p97 = por %p95, %p96
      %p98 = scmp.ne.s32.totalorder %s86, %s87
      %p99 = scmp.eq.s32.totalorder %s35, 1
      %p100 = por %p98, %p99
      %p102 = scmp.ne.s32.totalorder %s87, %s101
      %p103 = scmp.eq.s32.totalorder %s35, 0
      %p104 = por %p102, %p103
      %s106 = sadd.s32 %s105, 1
      %p109 = scmp.eq.s32.totalorder %s29, 1
      %p110 = scmp.ne.s32.totalorder %s105, %s107
      %p111 = scmp.eq.s32.totalorder %s29, 0
      %p112 = por %p110, %p111
      %p113 = scmp.ne.s32.totalorder %s105, %s107
      %p114 = scmp.eq.s32.totalorder %s34, 1
      %p115 = por %p113, %p114
      %p116 = scmp.ne.s32.totalorder %s107, %s108
      %p117 = scmp.eq.s32.totalorder %s34, 0
      %p118 = por %p116, %p117
      %p119 = scmp.ne.s32.totalorder %s107, %s108
      %p120 = scmp.eq.s32.totalorder %s35, 1
      %p121 = por %p119, %p120
      %p123 = scmp.ne.s32.totalorder %s108, %s122
      %p124 = scmp.eq.s32.totalorder %s35, 0
      %p125 = por %p123, %p124
      %s127 = sadd.s32 %s126, 1
      %p130 = scmp.eq.s32.totalorder %s29, 1
      %p131 = scmp.ne.s32.totalorder %s126, %s128
      %p132 = scmp.eq.s32.totalorder %s29, 0
      %p133 = por %p131, %p132
      %p134 = scmp.ne.s32.totalorder %s126, %s128
      %p135 = scmp.eq.s32.totalorder %s34, 1
      %p136 = por %p134, %p135
      %p137 = scmp.ne.s32.totalorder %s128, %s129
      %p138 = scmp.eq.s32.totalorder %s34, 0
      %p139 = por %p137, %p138
      %p140 = scmp.ne.s32.totalorder %s128, %s129
      %p141 = scmp.eq.s32.totalorder %s35, 1
      %p142 = por %p140, %p141
      %p144 = scmp.ne.s32.totalorder %s129, %s143
      %p145 = scmp.eq.s32.totalorder %s35, 0
      %p146 = por %p144, %p145
      %s148 = sadd.s32 %s147, 1
      %p151 = scmp.eq.s32.totalorder %s29, 1
      %p152 = scmp.ne.s32.totalorder %s147, %s149
      %p153 = scmp.eq.s32.totalorder %s29, 0
      %p154 = por %p152, %p153
      %p155 = scmp.ne.s32.totalorder %s147, %s149
      %p156 = scmp.eq.s32.totalorder %s34, 1
      %p157 = por %p155, %p156
      %p158 = scmp.ne.s32.totalorder %s149, %s150
      %p159 = scmp.eq.s32.totalorder %s34, 0
      %p160 = por %p158, %p159
      %p161 = scmp.ne.s32.totalorder %s149, %s150
      %p162 = scmp.eq.s32.totalorder %s35, 1
      %p163 = por %p161, %p162
      %p165 = scmp.ne.s32.totalorder %s150, %s164
      %p166 = scmp.eq.s32.totalorder %s35, 0
      %p167 = por %p165, %p166
      %s169 = sadd.s32 %s168, 1
      %p172 = scmp.eq.s32.totalorder %s29, 1
      %p173 = scmp.ne.s32.totalorder %s168, %s170
      %p174 = scmp.eq.s32.totalorder %s29, 0
      %p175 = por %p173, %p174
      %p176 = scmp.ne.s32.totalorder %s168, %s170
      %p177 = scmp.eq.s32.totalorder %s34, 1
      %p178 = por %p176, %p177
      %p179 = scmp.ne.s32.totalorder %s170, %s171
      %p180 = scmp.eq.s32.totalorder %s34, 0
      %p181 = por %p179, %p180
      %p182 = scmp.ne.s32.totalorder %s170, %s171
      %p183 = scmp.eq.s32.totalorder %s35, 1
      %p184 = por %p182, %p183
      %p186 = scmp.ne.s32.totalorder %s171, %s185
      %p187 = scmp.eq.s32.totalorder %s35, 0
      %p188 = por %p186, %p187
      %s190 = sadd.s32 %s189, 1
      %p193 = scmp.eq.s32.totalorder %s29, 1
      %p194 = scmp.ne.s32.totalorder %s189, %s191
      %p195 = scmp.eq.s32.totalorder %s29, 0
      %p196 = por %p194, %p195
      %p197 = scmp.ne.s32.totalorder %s189, %s191
      %p198 = scmp.eq.s32.totalorder %s34, 1
      %p199 = por %p197, %p198
      %p200 = scmp.ne.s32.totalorder %s191, %s192
      %p201 = scmp.eq.s32.totalorder %s34, 0
      %p202 = por %p200, %p201
      %p203 = scmp.ne.s32.totalorder %s191, %s192
      %p204 = scmp.eq.s32.totalorder %s35, 1
      %p205 = por %p203, %p204
      %p207 = scmp.ne.s32.totalorder %s192, %s206
      %p208 = scmp.eq.s32.totalorder %s35, 0
      %p209 = por %p207, %p208
      %s211 = sadd.s32 %s210, 1
      %p214 = scmp.eq.s32.totalorder %s29, 1
      %p215 = scmp.ne.s32.totalorder %s210, %s212
      %p216 = scmp.eq.s32.totalorder %s29, 0
      %p217 = por %p215, %p216
      %p218 = scmp.ne.s32.totalorder %s210, %s212
      %p219 = scmp.eq.s32.totalorder %s34, 1
      %p220 = por %p218, %p219
      %p221 = scmp.ne.s32.totalorder %s212, %s213
      %p222 = scmp.eq.s32.totalorder %s34, 0
      %p223 = por %p221, %p222
      %p224 = scmp.ne.s32.totalorder %s212, %s213
      %p225 = scmp.eq.s32.totalorder %s35, 1
      %p226 = por %p224, %p225
      %p228 = scmp.ne.s32.totalorder %s213, %s227
      %p229 = scmp.eq.s32.totalorder %s35, 0
      %p230 = por %p228, %p229
      %s232 = sadd.s32 %s231, 1
      %p235 = scmp.eq.s32.totalorder %s29, 1
      %p236 = scmp.ne.s32.totalorder %s231, %s233
      %p237 = scmp.eq.s32.totalorder %s29, 0
      %p238 = por %p236, %p237
      %p239 = scmp.ne.s32.totalorder %s231, %s233
      %p240 = scmp.eq.s32.totalorder %s34, 1
      %p241 = por %p239, %p240
      %p242 = scmp.ne.s32.totalorder %s233, %s234
      %p243 = scmp.eq.s32.totalorder %s34, 0
      %p244 = por %p242, %p243
      %p245 = scmp.ne.s32.totalorder %s233, %s234
      %p246 = scmp.eq.s32.totalorder %s35, 1
      %p247 = por %p245, %p246
      %p249 = scmp.ne.s32.totalorder %s234, %s248
      %p250 = scmp.eq.s32.totalorder %s35, 0
      %p251 = por %p249, %p250
      %s253 = sadd.s32 %s252, 1
      %p256 = scmp.eq.s32.totalorder %s29, 1
      %p257 = scmp.ne.s32.totalorder %s252, %s254
      %p258 = scmp.eq.s32.totalorder %s29, 0
      %p259 = por %p257, %p258
      %p260 = scmp.ne.s32.totalorder %s252, %s254
      %p261 = scmp.eq.s32.totalorder %s34, 1
      %p262 = por %p260, %p261
      %p263 = scmp.ne.s32.totalorder %s254, %s255
      %p264 = scmp.eq.s32.totalorder %s34, 0
      %p265 = por %p263, %p264
      %p266 = scmp.ne.s32.totalorder %s254, %s255
      %p267 = scmp.eq.s32.totalorder %s35, 1
      %p268 = por %p266, %p267
      %p270 = scmp.ne.s32.totalorder %s255, %s269
      %p271 = scmp.eq.s32.totalorder %s35, 0
      %p272 = por %p270, %p271
      %s274 = sadd.s32 %s273, 1
      %p277 = scmp.eq.s32.totalorder %s29, 1
      %p278 = scmp.ne.s32.totalorder %s273, %s275
      %p279 = scmp.eq.s32.totalorder %s29, 0
      %p280 = por %p278, %p279
      %p281 = scmp.ne.s32.totalorder %s273, %s275
      %p282 = scmp.eq.s32.totalorder %s34, 1
      %p283 = por %p281, %p282
      %p284 = scmp.ne.s32.totalorder %s275, %s276
      %p285 = scmp.eq.s32.totalorder %s34, 0
      %p286 = por %p284, %p285
      %p287 = scmp.ne.s32.totalorder %s275, %s276
      %p288 = scmp.eq.s32.totalorder %s35, 1
      %p289 = por %p287, %p288
      %p291 = scmp.ne.s32.totalorder %s276, %s290
      %p292 = scmp.eq.s32.totalorder %s35, 0
      %p293 = por %p291, %p292
      %s295 = sadd.s32 %s294, 1
      %p298 = scmp.eq.s32.totalorder %s29, 1
      %p299 = scmp.ne.s32.totalorder %s294, %s296
      %p300 = scmp.eq.s32.totalorder %s29, 0
      %p301 = por %p299, %p300
      %p302 = scmp.ne.s32.totalorder %s294, %s296
      %p303 = scmp.eq.s32.totalorder %s34, 1
      %p304 = por %p302, %p303
      %p305 = scmp.ne.s32.totalorder %s296, %s297
      %p306 = scmp.eq.s32.totalorder %s34, 0
      %p307 = por %p305, %p306
      %p308 = scmp.ne.s32.totalorder %s296, %s297
      %p309 = scmp.eq.s32.totalorder %s35, 1
      %p310 = por %p308, %p309
      %p312 = scmp.ne.s32.totalorder %s297, %s311
      %p313 = scmp.eq.s32.totalorder %s35, 0
      %p314 = por %p312, %p313
      %s316 = sadd.s32 %s315, 1
      %p319 = scmp.eq.s32.totalorder %s29, 1
      %p320 = scmp.ne.s32.totalorder %s315, %s317
      %p321 = scmp.eq.s32.totalorder %s29, 0
      %p322 = por %p320, %p321
      %p323 = scmp.ne.s32.totalorder %s315, %s317
      %p324 = scmp.eq.s32.totalorder %s34, 1
      %p325 = por %p323, %p324
      %p326 = scmp.ne.s32.totalorder %s317, %s318
      %p327 = scmp.eq.s32.totalorder %s34, 0
      %p328 = por %p326, %p327
      %p329 = scmp.ne.s32.totalorder %s317, %s318
      %p330 = scmp.eq.s32.totalorder %s35, 1
      %p331 = por %p329, %p330
      %p333 = scmp.ne.s32.totalorder %s318, %s332
      %p334 = scmp.eq.s32.totalorder %s35, 0
      %p335 = por %p333, %p334
      %s337 = sadd.s32 %s336, 1
      %p340 = scmp.eq.s32.totalorder %s29, 1
      %p341 = scmp.ne.s32.totalorder %s336, %s338
      %p342 = scmp.eq.s32.totalorder %s29, 0
      %p343 = por %p341, %p342
      %p344 = scmp.ne.s32.totalorder %s336, %s338
      %p345 = scmp.eq.s32.totalorder %s34, 1
      %p346 = por %p344, %p345
      %p347 = scmp.ne.s32.totalorder %s338, %s339
      %p348 = scmp.eq.s32.totalorder %s34, 0
      %p349 = por %p347, %p348
      %p350 = scmp.ne.s32.totalorder %s338, %s339
      %p351 = scmp.eq.s32.totalorder %s35, 1
      %p352 = por %p350, %p351
      %p354 = scmp.ne.s32.totalorder %s339, %s353
      %p355 = scmp.eq.s32.totalorder %s35, 0
      %p356 = por %p354, %p355
      %s358 = sadd.s32 %s357, 1
      %p361 = scmp.eq.s32.totalorder %s29, 1
      %p362 = scmp.ne.s32.totalorder %s357, %s359
      %p363 = scmp.eq.s32.totalorder %s29, 0
      %p364 = por %p362, %p363
      %p365 = scmp.ne.s32.totalorder %s357, %s359
      %p366 = scmp.eq.s32.totalorder %s34, 1
      %p367 = por %p365, %p366
      %p368 = scmp.ne.s32.totalorder %s359, %s360
      %p369 = scmp.eq.s32.totalorder %s34, 0
      %p370 = por %p368, %p369
      %p371 = scmp.ne.s32.totalorder %s359, %s360
      %p372 = scmp.eq.s32.totalorder %s35, 1
      %p373 = por %p371, %p372
      %p375 = scmp.ne.s32.totalorder %s360, %s374
      %p376 = scmp.eq.s32.totalorder %s35, 0
      %p377 = por %p375, %p376
      %s379 = sadd.s32 %s378, 1
      %p382 = scmp.eq.s32.totalorder %s29, 1
      %p383 = scmp.ne.s32.totalorder %s378, %s380
      %p384 = scmp.eq.s32.totalorder %s29, 0
      %p385 = por %p383, %p384
      %p386 = scmp.ne.s32.totalorder %s378, %s380
      %p387 = scmp.eq.s32.totalorder %s34, 1
      %p388 = por %p386, %p387
      %p389 = scmp.ne.s32.totalorder %s380, %s381
      %p390 = scmp.eq.s32.totalorder %s34, 0
      %p391 = por %p389, %p390
      %p392 = scmp.ne.s32.totalorder %s380, %s381
      %p393 = scmp.eq.s32.totalorder %s35, 1
      %p394 = por %p392, %p393
      %p396 = scmp.ne.s32.totalorder %s381, %s395
      %p397 = scmp.eq.s32.totalorder %s35, 0
      %p398 = por %p396, %p397
      %s399 = ssub.s32 %s29, %s36
      %p400 = scmp.eq.s32.totalorder %s399, 0
      %s402 = sadd.s32 %s401, 1
      %s403 = scalar_select %p400, %s401, %s402
      %p406 = pneg %p400
      %p407 = scmp.eq.s32.totalorder %s29, 1
      %p408 = por %p406, %p407
      %p409 = scmp.ne.s32.totalorder %s401, %s404
      %p410 = scmp.eq.s32.totalorder %s29, 0
      %p411 = por %p409, %p410
      %p412 = scmp.ne.s32.totalorder %s401, %s404
      %p413 = scmp.eq.s32.totalorder %s34, 1
      %p414 = por %p412, %p413
      %p415 = scmp.ne.s32.totalorder %s404, %s405
      %p416 = scmp.eq.s32.totalorder %s34, 0
      %p417 = por %p415, %p416
      %p418 = scmp.ne.s32.totalorder %s404, %s405
      %p419 = scmp.eq.s32.totalorder %s35, 1
      %p420 = por %p418, %p419
      %p422 = scmp.ne.s32.totalorder %s405, %s421
      %p423 = scmp.eq.s32.totalorder %s35, 0
      %p424 = por %p422, %p423
      %p425 = scmp.le.s32.totalorder 1, %s29
      %p426 = scmp.lt.s32.totalorder %s29, 3
      %p427 = pnand %p425, %p426
      %p428 = pneg %p427
      // Predicated region
      $region9: #{net_forward.1} parent=5 // pred_check
        _
      $region10: #{net_forward.1} parent=5 // pred_check_branch
        %430 = sbr.rel (%p427) target = $region12
      $region11: #{net_forward.1} parent=5 // pred_region
        %s431 = ssub.s32 %s29, 1
        // Predicated region
        $region13: #{net_forward.1} parent=11 // pred_check
          %p432 = pneg %p76
        $region14: #{net_forward.1} parent=11 // pred_check_branch
          %434 = sbr.rel (%p432) target = $region16
        $region15: #{net_forward.1} parent=11 // pred_region
          _
        $region16: #{net_forward.1} parent=11 // pred_fallthru
          _
        // Predicated region
        $region17: #{net_forward.1} parent=11 // pred_check
          %p435 = pneg %p97
        $region18: #{net_forward.1} parent=11 // pred_check_branch
          %437 = sbr.rel (%p435) target = $region20
        $region19: #{net_forward.1} parent=11 // pred_region
          _
        $region20: #{net_forward.1} parent=11 // pred_fallthru
          _
        // Predicated region
        $region21: #{net_forward.1} parent=11 // pred_check
          %p438 = pneg %p118
        $region22: #{net_forward.1} parent=11 // pred_check_branch
          %440 = sbr.rel (%p438) target = $region24
        $region23: #{net_forward.1} parent=11 // pred_region
          _
        $region24: #{net_forward.1} parent=11 // pred_fallthru
          _
        // Predicated region
        $region25: #{net_forward.1} parent=11 // pred_check
          %p441 = pneg %p139
        $region26: #{net_forward.1} parent=11 // pred_check_branch
          %443 = sbr.rel (%p441) target = $region28
        $region27: #{net_forward.1} parent=11 // pred_region
          _
        $region28: #{net_forward.1} parent=11 // pred_fallthru
          _
        // Predicated region
        $region29: #{net_forward.1} parent=11 // pred_check
          %p444 = pneg %p160
        $region30: #{net_forward.1} parent=11 // pred_check_branch
          %446 = sbr.rel (%p444) target = $region32
        $region31: #{net_forward.1} parent=11 // pred_region
          %s448 = ssub.s32 256, 256
          %449 = vsyncadd [#allocation3], %s448
          %s450 = sshll.u32 [#allocation2], 4
          %s451 = int_to_ptr.vmem [resolvable:$true] %s450
          %456 = dma.hbm_to_vmem [thread:$0]  %s5, 256, %s451, [#allocation3], 128, 128, 8
        $region32: #{net_forward.1} parent=11 // pred_fallthru
          _
        // Predicated region
        $region33: #{net_forward.1} parent=11 // pred_check
          %p457 = pneg %p181
        $region34: #{net_forward.1} parent=11 // pred_check_branch
          %459 = sbr.rel (%p457) target = $region36
        $region35: #{net_forward.1} parent=11 // pred_region
          %s461 = ssub.s32 256, 256
          %462 = vsyncadd [#allocation6], %s461
          %s463 = sshll.u32 [#allocation5], 4
          %s464 = int_to_ptr.vmem [resolvable:$true] %s463
          %469 = dma.hbm_to_vmem [thread:$0]  %s6, 256, %s464, [#allocation6], 128, 128, 8
        $region36: #{net_forward.1} parent=11 // pred_fallthru
          _
        // Predicated region
        $region37: #{net_forward.1} parent=11 // pred_check
          %p470 = pneg %p202
        $region38: #{net_forward.1} parent=11 // pred_check_branch
          %472 = sbr.rel (%p470) target = $region40
        $region39: #{net_forward.1} parent=11 // pred_region
          _
        $region40: #{net_forward.1} parent=11 // pred_fallthru
          _
        // Predicated region
        $region41: #{net_forward.1} parent=11 // pred_check
          %p473 = pneg %p223
        $region42: #{net_forward.1} parent=11 // pred_check_branch
          %475 = sbr.rel (%p473) target = $region44
        $region43: #{net_forward.1} parent=11 // pred_region
          _
        $region44: #{net_forward.1} parent=11 // pred_fallthru
          _
        // Predicated region
        $region45: #{net_forward.1} parent=11 // pred_check
          %p476 = pneg %p244
        $region46: #{net_forward.1} parent=11 // pred_check_branch
          %478 = sbr.rel (%p476) target = $region48
        $region47: #{net_forward.1} parent=11 // pred_region
          _
        $region48: #{net_forward.1} parent=11 // pred_fallthru
          _
        // Predicated region
        $region49: #{net_forward.1} parent=11 // pred_check
          %p479 = pneg %p265
        $region50: #{net_forward.1} parent=11 // pred_check_branch
          %481 = sbr.rel (%p479) target = $region52
        $region51: #{net_forward.1} parent=11 // pred_region
          _
        $region52: #{net_forward.1} parent=11 // pred_fallthru
          _
        // Predicated region
        $region53: #{net_forward.1} parent=11 // pred_check
          %p482 = pneg %p286
        $region54: #{net_forward.1} parent=11 // pred_check_branch
          %484 = sbr.rel (%p482) target = $region56
        $region55: #{net_forward.1} parent=11 // pred_region
          %s486 = ssub.s32 128, 128
          %487 = vsyncadd [#allocation6], %s486
          %s489 = sshll.u32 [#allocation7], 4
          %s490 = int_to_ptr.vmem [resolvable:$true] %s489
          %492 = dma.hbm_to_vmem [thread:$0]  %s11, 128, %s490, [#allocation6]
        $region56: #{net_forward.1} parent=11 // pred_fallthru
          _
        // Predicated region
        $region57: #{net_forward.1} parent=11 // pred_check
          %p493 = pneg %p307
        $region58: #{net_forward.1} parent=11 // pred_check_branch
          %495 = sbr.rel (%p493) target = $region60
        $region59: #{net_forward.1} parent=11 // pred_region
          _
        $region60: #{net_forward.1} parent=11 // pred_fallthru
          _
        // Predicated region
        $region61: #{net_forward.1} parent=11 // pred_check
          %p496 = pneg %p328
        $region62: #{net_forward.1} parent=11 // pred_check_branch
          %498 = sbr.rel (%p496) target = $region64
        $region63: #{net_forward.1} parent=11 // pred_region
          %s500 = ssub.s32 1920, 1920
          %501 = vsyncadd [#allocation9], %s500
          %s502 = sshll.u32 [#allocation8], 4
          %s503 = int_to_ptr.vmem [resolvable:$true] %s502
          %508 = dma.hbm_to_vmem [thread:$0]  %s13, 1920, %s503, [#allocation9], 128, 128, 8
        $region64: #{net_forward.1} parent=11 // pred_fallthru
          _
        // Predicated region
        $region65: #{net_forward.1} parent=11 // pred_check
          %p509 = pneg %p349
        $region66: #{net_forward.1} parent=11 // pred_check_branch
          %511 = sbr.rel (%p509) target = $region68
        $region67: #{net_forward.1} parent=11 // pred_region
          _
        $region68: #{net_forward.1} parent=11 // pred_fallthru
          _
        // Predicated region
        $region69: #{net_forward.1} parent=11 // pred_check
          %p512 = pneg %p370
        $region70: #{net_forward.1} parent=11 // pred_check_branch
          %514 = sbr.rel (%p512) target = $region72
        $region71: #{net_forward.1} parent=11 // pred_region
          %s516 = ssub.s32 2048, 2048
          %517 = vsyncadd [#allocation9], %s516
          %s518 = sshll.u32 [#allocation10], 4
          %s519 = int_to_ptr.vmem [resolvable:$true] %s518
          %524 = dma.hbm_to_vmem [thread:$0]  %s15, 2048, %s519, [#allocation9], 128, 128, 8
        $region72: #{net_forward.1} parent=11 // pred_fallthru
          _
        // Predicated region
        $region73: #{net_forward.1} parent=11 // pred_check
          %p525 = pneg %p391
        $region74: #{net_forward.1} parent=11 // pred_check_branch
          %527 = sbr.rel (%p525) target = $region76
        $region75: #{net_forward.1} parent=11 // pred_region
          _
        $region76: #{net_forward.1} parent=11 // pred_fallthru
          _
      $region12: #{net_forward.1} parent=5 // pred_fallthru
        _
      %p528 = scmp.lt.s32.totalorder %s29, 2
      // Predicated region
      $region77: #{net_forward.1} parent=5 // pred_check
        %p529 = pneg %p528
      $region78: #{net_forward.1} parent=5 // pred_check_branch
        %531 = sbr.rel (%p529) target = $region80
      $region79: #{net_forward.1} parent=5 // pred_region
        // Predicated region
        $region81: #{net_forward.1} parent=79 // pred_check
          %p532 = pneg %p49
        $region82: #{net_forward.1} parent=79 // pred_check_branch
          %534 = sbr.rel (%p532) target = $region84
        $region83: #{net_forward.1} parent=79 // pred_region
          %p535 = scmp.lt.s32.totalorder %s29, 1
          %s536 = scalar_select %p535, %s29, 1
          %s537 = smul.addr %s536, 12
          %s538 = smul.addr %s537, 8
          %s539 = scalar_lea.vmem %s0, %s538
        $region84: #{net_forward.1} parent=79 // pred_fallthru
          _
      $region80: #{net_forward.1} parent=5 // pred_fallthru
        _
      %p540 = scmp.le.s32.totalorder 1, %s29
      %p541 = scmp.lt.s32.totalorder %s29, 3
      %p542 = pnand %p540, %p541
      %p543 = pneg %p542
      // Predicated region
      $region85: #{net_forward.1} parent=5 // pred_check
        _
      $region86: #{net_forward.1} parent=5 // pred_check_branch
        %545 = sbr.rel (%p542) target = $region88
      $region87: #{net_forward.1} parent=5 // pred_region
        %s546 = ssub.s32 %s29, 1
        // Predicated region
        $region89: #{net_forward.1} parent=87 // pred_check
          %p547 = pneg %p160
        $region90: #{net_forward.1} parent=87 // pred_check_branch
          %549 = sbr.rel (%p547) target = $region92
        $region91: #{net_forward.1} parent=87 // pred_region
          %550 = dma.done [#allocation3], 256
        $region92: #{net_forward.1} parent=87 // pred_fallthru
          _
        // Predicated region
        $region93: #{net_forward.1} parent=87 // pred_check
          %p551 = pneg %p181
        $region94: #{net_forward.1} parent=87 // pred_check_branch
          %553 = sbr.rel (%p551) target = $region96
        $region95: #{net_forward.1} parent=87 // pred_region
          %554 = dma.done [#allocation6], 256
        $region96: #{net_forward.1} parent=87 // pred_fallthru
          _
        // Predicated region
        $region97: #{net_forward.1} parent=87 // pred_check
          %p555 = pneg %p286
        $region98: #{net_forward.1} parent=87 // pred_check_branch
          %557 = sbr.rel (%p555) target = $region100
        $region99: #{net_forward.1} parent=87 // pred_region
          %558 = dma.done [#allocation6], 128
        $region100: #{net_forward.1} parent=87 // pred_fallthru
          _
        // Predicated region
        $region101: #{net_forward.1} parent=87 // pred_check
          %p559 = pneg %p328
        $region102: #{net_forward.1} parent=87 // pred_check_branch
          %561 = sbr.rel (%p559) target = $region104
        $region103: #{net_forward.1} parent=87 // pred_region
          %562 = dma.done [#allocation9], 1920
        $region104: #{net_forward.1} parent=87 // pred_fallthru
          _
        // Predicated region
        $region105: #{net_forward.1} parent=87 // pred_check
          %p563 = pneg %p370
        $region106: #{net_forward.1} parent=87 // pred_check_branch
          %565 = sbr.rel (%p563) target = $region108
        $region107: #{net_forward.1} parent=87 // pred_region
          %566 = dma.done [#allocation9], 2048
        $region108: #{net_forward.1} parent=87 // pred_fallthru
          _
        %p567 = scmp.lt.s32.totalorder %s34, 1
        %s568 = scalar_select %p567, %s34, 1
        %s569 = smul.addr %s568, 12
        %s570 = smul.addr %s569, 8
        %s571 = scalar_lea.vmem %s0, %s570
        %p572 = pneg %p55
        %p573 = pneg %p52
        %p574 = pneg %p76
        %p575 = pneg %p73
        %p576 = pneg %p97
        %p577 = pneg %p94
        %p578 = pneg %p118
        %p579 = pneg %p115
        %p580 = pneg %p139
        %p581 = pneg %p136
        %p582 = pneg %p160
        %p583 = pneg %p157
        %p584 = pneg %p181
        %p585 = pneg %p178
        %p586 = pneg %p202
        %p587 = pneg %p199
        %p588 = pneg %p223
        %p589 = pneg %p220
        %p590 = pneg %p244
        %p591 = pneg %p241
        %p592 = pneg %p265
        %p593 = pneg %p262
        %p594 = pneg %p286
        %p595 = pneg %p283
        %p596 = pneg %p307
        %p597 = pneg %p304
        %p598 = pneg %p328
        %p599 = pneg %p325
        %p600 = pneg %p349
        %p601 = pneg %p346
        %p602 = pneg %p370
        %p603 = pneg %p367
        %p604 = pneg %p391
        %p605 = pneg %p388
        %p606 = pneg %p417
        %p607 = pneg %p414
        %s608 = sand.u32 %s404, 1
        %s609 = scalar_lea.sflag [#allocation4], %s608
        %s610 = sand.u32 %s404, 1
        %s611 = scalar_lea.vmem [#allocation11], %s610
        %p612 = scmp.lt.s32.totalorder %s34, 1
        %s613 = scalar_select %p612, %s34, 1
        %s614 = smul.addr %s613, 12
        %s615 = smul.addr %s614, 8
        %s616 = scalar_lea.vmem %s0, %s615
        %v617 = vld [vmem:[%s616] sm:$0xff]
        %v618 = vld [vmem:[%s616 + $0x8] sm:$0xff]
        %v619 = vld [vmem:[%s616 + $0x10] sm:$0xff]
        %v620 = vld [vmem:[%s616 + $0x18] sm:$0xff]
        %v621 = vld [vmem:[%s1] sm:$0xff]
        %v622 = vld [vmem:[%s1 + $0x8] sm:$0xff]
        %v623 = vld [vmem:[%s1 + $0x10] sm:$0xff]
        %v624 = vld [vmem:[%s1 + $0x18] sm:$0xff]
        %s625 = scalar_lea.vmem %s1, 32
        %v626 = vld [vmem:[%s625] sm:$0xff]
        %v627 = vld [vmem:[%s625 + $0x8] sm:$0xff]
        %v628 = vld [vmem:[%s625 + $0x10] sm:$0xff]
        %v629 = vld [vmem:[%s625 + $0x18] sm:$0xff]
        %vm634 = vcmask 1046528
        %v635 = vrot.slane %v617, 1
        %v636 = vrot.slane %v618, 1
        %v637 = vsel %vm634, %v635, %v636
        %v638 = vrot.slane %v619, 1
        %v639 = vsel %vm634, %v636, %v638
        %v640 = vrot.slane %v620, 1
        %v641 = vsel %vm634, %v638, %v640
        %vm642 = vcmask 261120
        %v643 = vsel %vm642, %v637, 0
        %v645 = vsel %vm642, %v639, 0
        %v647 = vsel %vm642, %v641, 0
        %v649 = vsel %vm642, %v640, 0
        %651 = vmatprep.subr.mxu0 0.0
        %652 = vmatpush1.msra.mxu0 0.0
        %653 = vmatprep.subr.mxu0 0.0
        %654 = vmatpush1.msra.mxu0 0.0
        %655 = vmatprep.subr.mxu0 0.0
        %656 = vmatpush1.msra.mxu0 0.0
        %657 = vmatprep.subr.mxu0 0.0
        %658 = vmatpush1.msra.mxu0 0.0
        %659 = vmatprep.subr.mxu0 0.0
        %660 = vmatpush1.msra.mxu0 0.0
        %661 = vmatprep.subr.mxu0 0.0
        %662 = vmatpush1.msra.mxu0 0.0
        %663 = vmatprep.subr.mxu0 0.0
        %664 = vmatpush1.msra.mxu0 0.0
        %665 = vmatprep.subr.mxu0 0.0
        %666 = vmatpush1.msra.mxu0 0.0
        %667 = vmatprep.subr.mxu0 0.0
        %668 = vmatpush1.msra.mxu0 0.0
        %669 = vmatprep.subr.mxu0 0.0
        %670 = vmatpush1.msra.mxu0 0.0
        %671 = vmatprep.subr.mxu0 0.0
        %672 = vmatpush1.msra.mxu0 0.0
        %673 = vmatprep.subr.mxu0 0.0
        %674 = vmatpush1.msra.mxu0 0.0
        %675 = vmatprep.subr.mxu0 0.0
        %676 = vmatpush1.msra.mxu0 %v629
        %677 = vmatprep.subr.mxu0 0.0
        %678 = vmatpush1.msra.mxu0 %v628
        %679 = vmatprep.subr.mxu0 0.0
        %680 = vmatpush1.msra.mxu0 %v627
        %681 = vmatprep.subr.mxu0 0.0
        %682 = vmatpush1.msra.mxu0 %v626
        %683 = vmatprep.subr.mxu0 0.0
        %684 = vmatpush2.msra.mxu0 0.0
        %685 = vmatprep.subr.mxu0 0.0
        %686 = vmatpush2.msra.mxu0 0.0
        %687 = vmatprep.subr.mxu0 0.0
        %688 = vmatpush2.msra.mxu0 0.0
        %689 = vmatprep.subr.mxu0 0.0
        %690 = vmatpush2.msra.mxu0 0.0
        %691 = vmatprep.subr.mxu0 0.0
        %692 = vmatpush2.msra.mxu0 0.0
        %693 = vmatprep.subr.mxu0 0.0
        %694 = vmatpush2.msra.mxu0 0.0
        %695 = vmatprep.subr.mxu0 0.0
        %696 = vmatpush2.msra.mxu0 0.0
        %697 = vmatprep.subr.mxu0 0.0
        %698 = vmatpush2.msra.mxu0 0.0
        %699 = vmatprep.subr.mxu0 0.0
        %700 = vmatpush2.msra.mxu0 0.0
        %701 = vmatprep.subr.mxu0 0.0
        %702 = vmatpush2.msra.mxu0 0.0
        %703 = vmatprep.subr.mxu0 0.0
        %704 = vmatpush2.msra.mxu0 0.0
        %705 = vmatprep.subr.mxu0 0.0
        %706 = vmatpush2.msra.mxu0 0.0
        %707 = vmatprep.subr.mxu0 0.0
        %708 = vmatpush2.msra.mxu0 0.0
        %709 = vmatprep.subr.mxu0 0.0
        %710 = vmatpush2.msra.mxu0 0.0
        %711 = vmatprep.subr.mxu0 0.0
        %712 = vmatpush2.msra.mxu0 0.0
        %713 = vmatprep.subr.mxu0 0.0
        %714 = vmatpush2.msra.mxu0 0.0
        %715 = vmatprep.mubr.f32.mxu0 0.0
        %716 = vmatmul.mubr.f32.gmra.mxu0 %v643
        %v717 = vpop.f32.mrf.mxu0
        %v718 = vadd.f32 0.0, %v717
        %v719 = vpop.f32.mrf.mxu0
        %720 = vmatprep.mubr.f32.mxu0 0.0
        %721 = vmatmul.mubr.f32.gmra.mxu0 %v645
        %v722 = vpop.f32.mrf.mxu0
        %v723 = vadd.f32 0.0, %v722
        %v724 = vpop.f32.mrf.mxu0
        %725 = vmatprep.mubr.f32.mxu0 0.0
        %726 = vmatmul.mubr.f32.gmra.mxu0 %v647
        %v727 = vpop.f32.mrf.mxu0
        %v728 = vadd.f32 0.0, %v727
        %v729 = vpop.f32.mrf.mxu0
        %730 = vmatprep.mubr.f32.mxu0 0.0
        %731 = vmatmul.mubr.f32.gmra.mxu0 %v649
        %v732 = vpop.f32.mrf.mxu0
        %v733 = vadd.f32 0.0, %v732
        %v734 = vpop.f32.mrf.mxu0
        %735 = vdwg.mxu0
        %v736 = vsel %vm642, %v617, 0
        %v738 = vsel %vm642, %v618, 0
        %v740 = vsel %vm642, %v619, 0
        %v742 = vsel %vm642, %v620, 0
        %744 = vmatprep.subr.mxu0 0.0
        %745 = vmatpush1.msra.mxu0 0.0
        %746 = vmatprep.subr.mxu0 0.0
        %747 = vmatpush1.msra.mxu0 0.0
        %748 = vmatprep.subr.mxu0 0.0
        %749 = vmatpush1.msra.mxu0 0.0
        %750 = vmatprep.subr.mxu0 0.0
        %751 = vmatpush1.msra.mxu0 0.0
        %752 = vmatprep.subr.mxu0 0.0
        %753 = vmatpush1.msra.mxu0 0.0
        %754 = vmatprep.subr.mxu0 0.0
        %755 = vmatpush1.msra.mxu0 0.0
        %756 = vmatprep.subr.mxu0 0.0
        %757 = vmatpush1.msra.mxu0 0.0
        %758 = vmatprep.subr.mxu0 0.0
        %759 = vmatpush1.msra.mxu0 0.0
        %760 = vmatprep.subr.mxu0 0.0
        %761 = vmatpush1.msra.mxu0 0.0
        %762 = vmatprep.subr.mxu0 0.0
        %763 = vmatpush1.msra.mxu0 0.0
        %764 = vmatprep.subr.mxu0 0.0
        %765 = vmatpush1.msra.mxu0 0.0
        %766 = vmatprep.subr.mxu0 0.0
        %767 = vmatpush1.msra.mxu0 0.0
        %768 = vmatprep.subr.mxu0 0.0
        %769 = vmatpush1.msra.mxu0 %v624
        %770 = vmatprep.subr.mxu0 0.0
        %771 = vmatpush1.msra.mxu0 %v623
        %772 = vmatprep.subr.mxu0 0.0
        %773 = vmatpush1.msra.mxu0 %v622
        %774 = vmatprep.subr.mxu0 0.0
        %775 = vmatpush1.msra.mxu0 %v621
        %776 = vmatprep.subr.mxu0 0.0
        %777 = vmatpush2.msra.mxu0 0.0
        %778 = vmatprep.subr.mxu0 0.0
        %779 = vmatpush2.msra.mxu0 0.0
        %780 = vmatprep.subr.mxu0 0.0
        %781 = vmatpush2.msra.mxu0 0.0
        %782 = vmatprep.subr.mxu0 0.0
        %783 = vmatpush2.msra.mxu0 0.0
        %784 = vmatprep.subr.mxu0 0.0
        %785 = vmatpush2.msra.mxu0 0.0
        %786 = vmatprep.subr.mxu0 0.0
        %787 = vmatpush2.msra.mxu0 0.0
        %788 = vmatprep.subr.mxu0 0.0
        %789 = vmatpush2.msra.mxu0 0.0
        %790 = vmatprep.subr.mxu0 0.0
        %791 = vmatpush2.msra.mxu0 0.0
        %792 = vmatprep.subr.mxu0 0.0
        %793 = vmatpush2.msra.mxu0 0.0
        %794 = vmatprep.subr.mxu0 0.0
        %795 = vmatpush2.msra.mxu0 0.0
        %796 = vmatprep.subr.mxu0 0.0
        %797 = vmatpush2.msra.mxu0 0.0
        %798 = vmatprep.subr.mxu0 0.0
        %799 = vmatpush2.msra.mxu0 0.0
        %800 = vmatprep.subr.mxu0 0.0
        %801 = vmatpush2.msra.mxu0 0.0
        %802 = vmatprep.subr.mxu0 0.0
        %803 = vmatpush2.msra.mxu0 0.0
        %804 = vmatprep.subr.mxu0 0.0
        %805 = vmatpush2.msra.mxu0 0.0
        %806 = vmatprep.subr.mxu0 0.0
        %807 = vmatpush2.msra.mxu0 0.0
        %808 = vmatprep.mubr.f32.mxu0 0.0
        %809 = vmatmul.mubr.f32.gmra.mxu0 %v736
        %v810 = vpop.f32.mrf.mxu0
        %v811 = vadd.f32 %v718, %v810
        %v812 = vpop.f32.mrf.mxu0
        %813 = vmatprep.mubr.f32.mxu0 0.0
        %814 = vmatmul.mubr.f32.gmra.mxu0 %v738
        %v815 = vpop.f32.mrf.mxu0
        %v816 = vadd.f32 %v723, %v815
        %v817 = vpop.f32.mrf.mxu0
        %818 = vmatprep.mubr.f32.mxu0 0.0
        %819 = vmatmul.mubr.f32.gmra.mxu0 %v740
        %v820 = vpop.f32.mrf.mxu0
        %v821 = vadd.f32 %v728, %v820
        %v822 = vpop.f32.mrf.mxu0
        %823 = vmatprep.mubr.f32.mxu0 0.0
        %824 = vmatmul.mubr.f32.gmra.mxu0 %v742
        %v825 = vpop.f32.mrf.mxu0
        %v826 = vadd.f32 %v733, %v825
        %v827 = vpop.f32.mrf.mxu0
        %828 = vdwg.mxu0
        %s829 = scalar_lea.vmem %s1, 64
        %v830 = vld [vmem:[%s829] sm:$0xff]
        %v831 = vld [vmem:[%s829 + $0x8] sm:$0xff]
        %v832 = vld [vmem:[%s829 + $0x10] sm:$0xff]
        %v833 = vld [vmem:[%s829 + $0x18] sm:$0xff]
        %vm834 = vcmask 1045504
        %v835 = vrot.slane %v617, 2
        %v836 = vrot.slane %v618, 2
        %v837 = vsel %vm834, %v835, %v836
        %v838 = vrot.slane %v619, 2
        %v839 = vsel %vm834, %v836, %v838
        %v840 = vrot.slane %v620, 2
        %v841 = vsel %vm834, %v838, %v840
        %v842 = vsel %vm642, %v837, 0
        %v844 = vsel %vm642, %v839, 0
        %v846 = vsel %vm642, %v841, 0
        %v848 = vsel %vm642, %v840, 0
        %850 = vmatprep.subr.mxu0 0.0
        %851 = vmatpush1.msra.mxu0 0.0
        %852 = vmatprep.subr.mxu0 0.0
        %853 = vmatpush1.msra.mxu0 0.0
        %854 = vmatprep.subr.mxu0 0.0
        %855 = vmatpush1.msra.mxu0 0.0
        %856 = vmatprep.subr.mxu0 0.0
        %857 = vmatpush1.msra.mxu0 0.0
        %858 = vmatprep.subr.mxu0 0.0
        %859 = vmatpush1.msra.mxu0 0.0
        %860 = vmatprep.subr.mxu0 0.0
        %861 = vmatpush1.msra.mxu0 0.0
        %862 = vmatprep.subr.mxu0 0.0
        %863 = vmatpush1.msra.mxu0 0.0
        %864 = vmatprep.subr.mxu0 0.0
        %865 = vmatpush1.msra.mxu0 0.0
        %866 = vmatprep.subr.mxu0 0.0
        %867 = vmatpush1.msra.mxu0 0.0
        %868 = vmatprep.subr.mxu0 0.0
        %869 = vmatpush1.msra.mxu0 0.0
        %870 = vmatprep.subr.mxu0 0.0
        %871 = vmatpush1.msra.mxu0 0.0
        %872 = vmatprep.subr.mxu0 0.0
        %873 = vmatpush1.msra.mxu0 0.0
        %874 = vmatprep.subr.mxu0 0.0
        %875 = vmatpush1.msra.mxu0 %v833
        %876 = vmatprep.subr.mxu0 0.0
        %877 = vmatpush1.msra.mxu0 %v832
        %878 = vmatprep.subr.mxu0 0.0
        %879 = vmatpush1.msra.mxu0 %v831
        %880 = vmatprep.subr.mxu0 0.0
        %881 = vmatpush1.msra.mxu0 %v830
        %882 = vmatprep.subr.mxu0 0.0
        %883 = vmatpush2.msra.mxu0 0.0
        %884 = vmatprep.subr.mxu0 0.0
        %885 = vmatpush2.msra.mxu0 0.0
        %886 = vmatprep.subr.mxu0 0.0
        %887 = vmatpush2.msra.mxu0 0.0
        %888 = vmatprep.subr.mxu0 0.0
        %889 = vmatpush2.msra.mxu0 0.0
        %890 = vmatprep.subr.mxu0 0.0
        %891 = vmatpush2.msra.mxu0 0.0
        %892 = vmatprep.subr.mxu0 0.0
        %893 = vmatpush2.msra.mxu0 0.0
        %894 = vmatprep.subr.mxu0 0.0
        %895 = vmatpush2.msra.mxu0 0.0
        %896 = vmatprep.subr.mxu0 0.0
        %897 = vmatpush2.msra.mxu0 0.0
        %898 = vmatprep.subr.mxu0 0.0
        %899 = vmatpush2.msra.mxu0 0.0
        %900 = vmatprep.subr.mxu0 0.0
        %901 = vmatpush2.msra.mxu0 0.0
        %902 = vmatprep.subr.mxu0 0.0
        %903 = vmatpush2.msra.mxu0 0.0
        %904 = vmatprep.subr.mxu0 0.0
        %905 = vmatpush2.msra.mxu0 0.0
        %906 = vmatprep.subr.mxu0 0.0
        %907 = vmatpush2.msra.mxu0 0.0
        %908 = vmatprep.subr.mxu0 0.0
        %909 = vmatpush2.msra.mxu0 0.0
        %910 = vmatprep.subr.mxu0 0.0
        %911 = vmatpush2.msra.mxu0 0.0
        %912 = vmatprep.subr.mxu0 0.0
        %913 = vmatpush2.msra.mxu0 0.0
        %914 = vmatprep.mubr.f32.mxu0 0.0
        %915 = vmatmul.mubr.f32.gmra.mxu0 %v842
        %v916 = vpop.f32.mrf.mxu0
        %v917 = vadd.f32 0.0, %v916
        %v918 = vpop.f32.mrf.mxu0
        %919 = vmatprep.mubr.f32.mxu0 0.0
        %920 = vmatmul.mubr.f32.gmra.mxu0 %v844
        %v921 = vpop.f32.mrf.mxu0
        %v922 = vadd.f32 0.0, %v921
        %v923 = vpop.f32.mrf.mxu0
        %924 = vmatprep.mubr.f32.mxu0 0.0
        %925 = vmatmul.mubr.f32.gmra.mxu0 %v846
        %v926 = vpop.f32.mrf.mxu0
        %v927 = vadd.f32 0.0, %v926
        %v928 = vpop.f32.mrf.mxu0
        %929 = vmatprep.mubr.f32.mxu0 0.0
        %930 = vmatmul.mubr.f32.gmra.mxu0 %v848
        %v931 = vpop.f32.mrf.mxu0
        %v932 = vadd.f32 0.0, %v931
        %v933 = vpop.f32.mrf.mxu0
        %934 = vdwg.mxu0
        %v935 = vadd.f32 %v811, %v917
        %v936 = vadd.f32 %v816, %v922
        %v937 = vadd.f32 %v821, %v927
        %v938 = vadd.f32 %v826, %v932
        %s939 = scalar_lea.vmem %s1, 96
        %v940 = vld [vmem:[%s939] sm:$0xff]
        %v941 = vld [vmem:[%s939 + $0x8] sm:$0xff]
        %v942 = vld [vmem:[%s939 + $0x10] sm:$0xff]
        %v943 = vld [vmem:[%s939 + $0x18] sm:$0xff]
        %vm944 = vcmask 1044480
        %v945 = vrot.slane %v617, 3
        %v946 = vrot.slane %v618, 3
        %v947 = vsel %vm944, %v945, %v946
        %v948 = vrot.slane %v619, 3
        %v949 = vsel %vm944, %v946, %v948
        %v950 = vrot.slane %v620, 3
        %v951 = vsel %vm944, %v948, %v950
        %v952 = vsel %vm642, %v947, 0
        %v954 = vsel %vm642, %v949, 0
        %v956 = vsel %vm642, %v951, 0
        %v958 = vsel %vm642, %v950, 0
        %960 = vmatprep.subr.mxu0 0.0
        %961 = vmatpush1.msra.mxu0 0.0
        %962 = vmatprep.subr.mxu0 0.0
        %963 = vmatpush1.msra.mxu0 0.0
        %964 = vmatprep.subr.mxu0 0.0
        %965 = vmatpush1.msra.mxu0 0.0
        %966 = vmatprep.subr.mxu0 0.0
        %967 = vmatpush1.msra.mxu0 0.0
        %968 = vmatprep.subr.mxu0 0.0
        %969 = vmatpush1.msra.mxu0 0.0
        %970 = vmatprep.subr.mxu0 0.0
        %971 = vmatpush1.msra.mxu0 0.0
        %972 = vmatprep.subr.mxu0 0.0
        %973 = vmatpush1.msra.mxu0 0.0
        %974 = vmatprep.subr.mxu0 0.0
        %975 = vmatpush1.msra.mxu0 0.0
        %976 = vmatprep.subr.mxu0 0.0
        %977 = vmatpush1.msra.mxu0 0.0
        %978 = vmatprep.subr.mxu0 0.0
        %979 = vmatpush1.msra.mxu0 0.0
        %980 = vmatprep.subr.mxu0 0.0
        %981 = vmatpush1.msra.mxu0 0.0
        %982 = vmatprep.subr.mxu0 0.0
        %983 = vmatpush1.msra.mxu0 0.0
        %984 = vmatprep.subr.mxu0 0.0
        %985 = vmatpush1.msra.mxu0 %v943
        %986 = vmatprep.subr.mxu0 0.0
        %987 = vmatpush1.msra.mxu0 %v942
        %988 = vmatprep.subr.mxu0 0.0
        %989 = vmatpush1.msra.mxu0 %v941
        %990 = vmatprep.subr.mxu0 0.0
        %991 = vmatpush1.msra.mxu0 %v940
        %992 = vmatprep.subr.mxu0 0.0
        %993 = vmatpush2.msra.mxu0 0.0
        %994 = vmatprep.subr.mxu0 0.0
        %995 = vmatpush2.msra.mxu0 0.0
        %996 = vmatprep.subr.mxu0 0.0
        %997 = vmatpush2.msra.mxu0 0.0
        %998 = vmatprep.subr.mxu0 0.0
        %999 = vmatpush2.msra.mxu0 0.0
        %1000 = vmatprep.subr.mxu0 0.0
        %1001 = vmatpush2.msra.mxu0 0.0
        %1002 = vmatprep.subr.mxu0 0.0
        %1003 = vmatpush2.msra.mxu0 0.0
        %1004 = vmatprep.subr.mxu0 0.0
        %1005 = vmatpush2.msra.mxu0 0.0
        %1006 = vmatprep.subr.mxu0 0.0
        %1007 = vmatpush2.msra.mxu0 0.0
        %1008 = vmatprep.subr.mxu0 0.0
        %1009 = vmatpush2.msra.mxu0 0.0
        %1010 = vmatprep.subr.mxu0 0.0
        %1011 = vmatpush2.msra.mxu0 0.0
        %1012 = vmatprep.subr.mxu0 0.0
        %1013 = vmatpush2.msra.mxu0 0.0
        %1014 = vmatprep.subr.mxu0 0.0
        %1015 = vmatpush2.msra.mxu0 0.0
        %1016 = vmatprep.subr.mxu0 0.0
        %1017 = vmatpush2.msra.mxu0 0.0
        %1018 = vmatprep.subr.mxu0 0.0
        %1019 = vmatpush2.msra.mxu0 0.0
        %1020 = vmatprep.subr.mxu0 0.0
        %1021 = vmatpush2.msra.mxu0 0.0
        %1022 = vmatprep.subr.mxu0 0.0
        %1023 = vmatpush2.msra.mxu0 0.0
        %1024 = vmatprep.mubr.f32.mxu0 0.0
        %1025 = vmatmul.mubr.f32.gmra.mxu0 %v952
        %v1026 = vpop.f32.mrf.mxu0
        %v1027 = vadd.f32 0.0, %v1026
        %v1028 = vpop.f32.mrf.mxu0
        %1029 = vmatprep.mubr.f32.mxu0 0.0
        %1030 = vmatmul.mubr.f32.gmra.mxu0 %v954
        %v1031 = vpop.f32.mrf.mxu0
        %v1032 = vadd.f32 0.0, %v1031
        %v1033 = vpop.f32.mrf.mxu0
        %1034 = vmatprep.mubr.f32.mxu0 0.0
        %1035 = vmatmul.mubr.f32.gmra.mxu0 %v956
        %v1036 = vpop.f32.mrf.mxu0
        %v1037 = vadd.f32 0.0, %v1036
        %v1038 = vpop.f32.mrf.mxu0
        %1039 = vmatprep.mubr.f32.mxu0 0.0
        %1040 = vmatmul.mubr.f32.gmra.mxu0 %v958
        %v1041 = vpop.f32.mrf.mxu0
        %v1042 = vadd.f32 0.0, %v1041
        %v1043 = vpop.f32.mrf.mxu0
        %1044 = vdwg.mxu0
        %v1045 = vadd.f32 %v935, %v1027
        %v1046 = vadd.f32 %v936, %v1032
        %v1047 = vadd.f32 %v937, %v1037
        %v1048 = vadd.f32 %v938, %v1042
        %s1049 = scalar_lea.vmem %s1, 128
        %v1050 = vld [vmem:[%s1049] sm:$0xff]
        %v1051 = vld [vmem:[%s1049 + $0x8] sm:$0xff]
        %v1052 = vld [vmem:[%s1049 + $0x10] sm:$0xff]
        %v1053 = vld [vmem:[%s1049 + $0x18] sm:$0xff]
        %vm1054 = vcmask 1043456
        %v1055 = vrot.slane %v617, 4
        %v1056 = vrot.slane %v618, 4
        %v1057 = vsel %vm1054, %v1055, %v1056
        %v1058 = vrot.slane %v619, 4
        %v1059 = vsel %vm1054, %v1056, %v1058
        %v1060 = vrot.slane %v620, 4
        %v1061 = vsel %vm1054, %v1058, %v1060
        %v1062 = vsel %vm642, %v1057, 0
        %v1064 = vsel %vm642, %v1059, 0
        %v1066 = vsel %vm642, %v1061, 0
        %v1068 = vsel %vm642, %v1060, 0
        %1070 = vmatprep.subr.mxu0 0.0
        %1071 = vmatpush1.msra.mxu0 0.0
        %1072 = vmatprep.subr.mxu0 0.0
        %1073 = vmatpush1.msra.mxu0 0.0
        %1074 = vmatprep.subr.mxu0 0.0
        %1075 = vmatpush1.msra.mxu0 0.0
        %1076 = vmatprep.subr.mxu0 0.0
        %1077 = vmatpush1.msra.mxu0 0.0
        %1078 = vmatprep.subr.mxu0 0.0
        %1079 = vmatpush1.msra.mxu0 0.0
        %1080 = vmatprep.subr.mxu0 0.0
        %1081 = vmatpush1.msra.mxu0 0.0
        %1082 = vmatprep.subr.mxu0 0.0
        %1083 = vmatpush1.msra.mxu0 0.0
        %1084 = vmatprep.subr.mxu0 0.0
        %1085 = vmatpush1.msra.mxu0 0.0
        %1086 = vmatprep.subr.mxu0 0.0
        %1087 = vmatpush1.msra.mxu0 0.0
        %1088 = vmatprep.subr.mxu0 0.0
        %1089 = vmatpush1.msra.mxu0 0.0
        %1090 = vmatprep.subr.mxu0 0.0
        %1091 = vmatpush1.msra.mxu0 0.0
        %1092 = vmatprep.subr.mxu0 0.0
        %1093 = vmatpush1.msra.mxu0 0.0
        %1094 = vmatprep.subr.mxu0 0.0
        %1095 = vmatpush1.msra.mxu0 %v1053
        %1096 = vmatprep.subr.mxu0 0.0
        %1097 = vmatpush1.msra.mxu0 %v1052
        %1098 = vmatprep.subr.mxu0 0.0
        %1099 = vmatpush1.msra.mxu0 %v1051
        %1100 = vmatprep.subr.mxu0 0.0
        %1101 = vmatpush1.msra.mxu0 %v1050
        %1102 = vmatprep.subr.mxu0 0.0
        %1103 = vmatpush2.msra.mxu0 0.0
        %1104 = vmatprep.subr.mxu0 0.0
        %1105 = vmatpush2.msra.mxu0 0.0
        %1106 = vmatprep.subr.mxu0 0.0
        %1107 = vmatpush2.msra.mxu0 0.0
        %1108 = vmatprep.subr.mxu0 0.0
        %1109 = vmatpush2.msra.mxu0 0.0
        %1110 = vmatprep.subr.mxu0 0.0
        %1111 = vmatpush2.msra.mxu0 0.0
        %1112 = vmatprep.subr.mxu0 0.0
        %1113 = vmatpush2.msra.mxu0 0.0
        %1114 = vmatprep.subr.mxu0 0.0
        %1115 = vmatpush2.msra.mxu0 0.0
        %1116 = vmatprep.subr.mxu0 0.0
        %1117 = vmatpush2.msra.mxu0 0.0
        %1118 = vmatprep.subr.mxu0 0.0
        %1119 = vmatpush2.msra.mxu0 0.0
        %1120 = vmatprep.subr.mxu0 0.0
        %1121 = vmatpush2.msra.mxu0 0.0
        %1122 = vmatprep.subr.mxu0 0.0
        %1123 = vmatpush2.msra.mxu0 0.0
        %1124 = vmatprep.subr.mxu0 0.0
        %1125 = vmatpush2.msra.mxu0 0.0
        %1126 = vmatprep.subr.mxu0 0.0
        %1127 = vmatpush2.msra.mxu0 0.0
        %1128 = vmatprep.subr.mxu0 0.0
        %1129 = vmatpush2.msra.mxu0 0.0
        %1130 = vmatprep.subr.mxu0 0.0
        %1131 = vmatpush2.msra.mxu0 0.0
        %1132 = vmatprep.subr.mxu0 0.0
        %1133 = vmatpush2.msra.mxu0 0.0
        %1134 = vmatprep.mubr.f32.mxu0 0.0
        %1135 = vmatmul.mubr.f32.gmra.mxu0 %v1062
        %v1136 = vpop.f32.mrf.mxu0
        %v1137 = vadd.f32 0.0, %v1136
        %v1138 = vpop.f32.mrf.mxu0
        %1139 = vmatprep.mubr.f32.mxu0 0.0
        %1140 = vmatmul.mubr.f32.gmra.mxu0 %v1064
        %v1141 = vpop.f32.mrf.mxu0
        %v1142 = vadd.f32 0.0, %v1141
        %v1143 = vpop.f32.mrf.mxu0
        %1144 = vmatprep.mubr.f32.mxu0 0.0
        %1145 = vmatmul.mubr.f32.gmra.mxu0 %v1066
        %v1146 = vpop.f32.mrf.mxu0
        %v1147 = vadd.f32 0.0, %v1146
        %v1148 = vpop.f32.mrf.mxu0
        %1149 = vmatprep.mubr.f32.mxu0 0.0
        %1150 = vmatmul.mubr.f32.gmra.mxu0 %v1068
        %v1151 = vpop.f32.mrf.mxu0
        %v1152 = vadd.f32 0.0, %v1151
        %v1153 = vpop.f32.mrf.mxu0
        %1154 = vdwg.mxu0
        %v1155 = vadd.f32 %v1045, %v1137
        %v1156 = vadd.f32 %v1046, %v1142
        %v1157 = vadd.f32 %v1047, %v1147
        %v1158 = vadd.f32 %v1048, %v1152
        %s1159 = scalar_lea.vmem %s616, 32
        %v1160 = vld [vmem:[%s1159] sm:$0xff]
        %v1161 = vld [vmem:[%s1159 + $0x8] sm:$0xff]
        %v1162 = vld [vmem:[%s1159 + $0x10] sm:$0xff]
        %v1163 = vld [vmem:[%s1159 + $0x18] sm:$0xff]
        %s1164 = scalar_lea.vmem %s1, 160
        %v1165 = vld [vmem:[%s1164] sm:$0xff]
        %v1166 = vld [vmem:[%s1164 + $0x8] sm:$0xff]
        %v1167 = vld [vmem:[%s1164 + $0x10] sm:$0xff]
        %v1168 = vld [vmem:[%s1164 + $0x18] sm:$0xff]
        %v1170 = vsel %vm642, %v1160, 0
        %v1173 = vsel %vm642, %v1161, 0
        %v1176 = vsel %vm642, %v1162, 0
        %v1179 = vsel %vm642, %v1163, 0
        %1181 = vmatprep.subr.mxu0 0.0
        %1182 = vmatpush1.msra.mxu0 0.0
        %1183 = vmatprep.subr.mxu0 0.0
        %1184 = vmatpush1.msra.mxu0 0.0
        %1185 = vmatprep.subr.mxu0 0.0
        %1186 = vmatpush1.msra.mxu0 0.0
        %1187 = vmatprep.subr.mxu0 0.0
        %1188 = vmatpush1.msra.mxu0 0.0
        %1189 = vmatprep.subr.mxu0 0.0
        %1190 = vmatpush1.msra.mxu0 0.0
        %1191 = vmatprep.subr.mxu0 0.0
        %1192 = vmatpush1.msra.mxu0 0.0
        %1193 = vmatprep.subr.mxu0 0.0
        %1194 = vmatpush1.msra.mxu0 0.0
        %1195 = vmatprep.subr.mxu0 0.0
        %1196 = vmatpush1.msra.mxu0 0.0
        %1197 = vmatprep.subr.mxu0 0.0
        %1198 = vmatpush1.msra.mxu0 0.0
        %1199 = vmatprep.subr.mxu0 0.0
        %1200 = vmatpush1.msra.mxu0 0.0
        %1201 = vmatprep.subr.mxu0 0.0
        %1202 = vmatpush1.msra.mxu0 0.0
        %1203 = vmatprep.subr.mxu0 0.0
        %1204 = vmatpush1.msra.mxu0 0.0
        %1205 = vmatprep.subr.mxu0 0.0
        %1206 = vmatpush1.msra.mxu0 %v1168
        %1207 = vmatprep.subr.mxu0 0.0
        %1208 = vmatpush1.msra.mxu0 %v1167
        %1209 = vmatprep.subr.mxu0 0.0
        %1210 = vmatpush1.msra.mxu0 %v1166
        %1211 = vmatprep.subr.mxu0 0.0
        %1212 = vmatpush1.msra.mxu0 %v1165
        %1213 = vmatprep.subr.mxu0 0.0
        %1214 = vmatpush2.msra.mxu0 0.0
        %1215 = vmatprep.subr.mxu0 0.0
        %1216 = vmatpush2.msra.mxu0 0.0
        %1217 = vmatprep.subr.mxu0 0.0
        %1218 = vmatpush2.msra.mxu0 0.0
        %1219 = vmatprep.subr.mxu0 0.0
        %1220 = vmatpush2.msra.mxu0 0.0
        %1221 = vmatprep.subr.mxu0 0.0
        %1222 = vmatpush2.msra.mxu0 0.0
        %1223 = vmatprep.subr.mxu0 0.0
        %1224 = vmatpush2.msra.mxu0 0.0
        %1225 = vmatprep.subr.mxu0 0.0
        %1226 = vmatpush2.msra.mxu0 0.0
        %1227 = vmatprep.subr.mxu0 0.0
        %1228 = vmatpush2.msra.mxu0 0.0
        %1229 = vmatprep.subr.mxu0 0.0
        %1230 = vmatpush2.msra.mxu0 0.0
        %1231 = vmatprep.subr.mxu0 0.0
        %1232 = vmatpush2.msra.mxu0 0.0
        %1233 = vmatprep.subr.mxu0 0.0
        %1234 = vmatpush2.msra.mxu0 0.0
        %1235 = vmatprep.subr.mxu0 0.0
        %1236 = vmatpush2.msra.mxu0 0.0
        %1237 = vmatprep.subr.mxu0 0.0
        %1238 = vmatpush2.msra.mxu0 0.0
        %1239 = vmatprep.subr.mxu0 0.0
        %1240 = vmatpush2.msra.mxu0 0.0
        %1241 = vmatprep.subr.mxu0 0.0
        %1242 = vmatpush2.msra.mxu0 0.0
        %1243 = vmatprep.subr.mxu0 0.0
        %1244 = vmatpush2.msra.mxu0 0.0
        %1245 = vmatprep.mubr.f32.mxu0 0.0
        %1246 = vmatmul.mubr.f32.gmra.mxu0 %v1170
        %v1247 = vpop.f32.mrf.mxu0
        %v1248 = vadd.f32 0.0, %v1247
        %v1249 = vpop.f32.mrf.mxu0
        %1250 = vmatprep.mubr.f32.mxu0 0.0
        %1251 = vmatmul.mubr.f32.gmra.mxu0 %v1173
        %v1252 = vpop.f32.mrf.mxu0
        %v1253 = vadd.f32 0.0, %v1252
        %v1254 = vpop.f32.mrf.mxu0
        %1255 = vmatprep.mubr.f32.mxu0 0.0
        %1256 = vmatmul.mubr.f32.gmra.mxu0 %v1176
        %v1257 = vpop.f32.mrf.mxu0
        %v1258 = vadd.f32 0.0, %v1257
        %v1259 = vpop.f32.mrf.mxu0
        %1260 = vmatprep.mubr.f32.mxu0 0.0
        %1261 = vmatmul.mubr.f32.gmra.mxu0 %v1179
        %v1262 = vpop.f32.mrf.mxu0
        %v1263 = vadd.f32 0.0, %v1262
        %v1264 = vpop.f32.mrf.mxu0
        %1265 = vdwg.mxu0
        %v1266 = vadd.f32 %v1155, %v1248
        %v1267 = vadd.f32 %v1156, %v1253
        %v1268 = vadd.f32 %v1157, %v1258
        %v1269 = vadd.f32 %v1158, %v1263
        %s1270 = scalar_lea.vmem %s1, 192
        %v1271 = vld [vmem:[%s1270] sm:$0xff]
        %v1272 = vld [vmem:[%s1270 + $0x8] sm:$0xff]
        %v1273 = vld [vmem:[%s1270 + $0x10] sm:$0xff]
        %v1274 = vld [vmem:[%s1270 + $0x18] sm:$0xff]
        %v1275 = vrot.slane %v1160, 1
        %v1276 = vrot.slane %v1161, 1
        %v1277 = vsel %vm634, %v1275, %v1276
        %v1278 = vrot.slane %v1162, 1
        %v1279 = vsel %vm634, %v1276, %v1278
        %v1280 = vrot.slane %v1163, 1
        %v1281 = vsel %vm634, %v1278, %v1280
        %v1282 = vsel %vm642, %v1277, 0
        %v1284 = vsel %vm642, %v1279, 0
        %v1286 = vsel %vm642, %v1281, 0
        %v1288 = vsel %vm642, %v1280, 0
        %1290 = vmatprep.subr.mxu0 0.0
        %1291 = vmatpush1.msra.mxu0 0.0
        %1292 = vmatprep.subr.mxu0 0.0
        %1293 = vmatpush1.msra.mxu0 0.0
        %1294 = vmatprep.subr.mxu0 0.0
        %1295 = vmatpush1.msra.mxu0 0.0
        %1296 = vmatprep.subr.mxu0 0.0
        %1297 = vmatpush1.msra.mxu0 0.0
        %1298 = vmatprep.subr.mxu0 0.0
        %1299 = vmatpush1.msra.mxu0 0.0
        %1300 = vmatprep.subr.mxu0 0.0
        %1301 = vmatpush1.msra.mxu0 0.0
        %1302 = vmatprep.subr.mxu0 0.0
        %1303 = vmatpush1.msra.mxu0 0.0
        %1304 = vmatprep.subr.mxu0 0.0
        %1305 = vmatpush1.msra.mxu0 0.0
        %1306 = vmatprep.subr.mxu0 0.0
        %1307 = vmatpush1.msra.mxu0 0.0
        %1308 = vmatprep.subr.mxu0 0.0
        %1309 = vmatpush1.msra.mxu0 0.0
        %1310 = vmatprep.subr.mxu0 0.0
        %1311 = vmatpush1.msra.mxu0 0.0
        %1312 = vmatprep.subr.mxu0 0.0
        %1313 = vmatpush1.msra.mxu0 0.0
        %1314 = vmatprep.subr.mxu0 0.0
        %1315 = vmatpush1.msra.mxu0 %v1274
        %1316 = vmatprep.subr.mxu0 0.0
        %1317 = vmatpush1.msra.mxu0 %v1273
        %1318 = vmatprep.subr.mxu0 0.0
        %1319 = vmatpush1.msra.mxu0 %v1272
        %1320 = vmatprep.subr.mxu0 0.0
        %1321 = vmatpush1.msra.mxu0 %v1271
        %1322 = vmatprep.subr.mxu0 0.0
        %1323 = vmatpush2.msra.mxu0 0.0
        %1324 = vmatprep.subr.mxu0 0.0
        %1325 = vmatpush2.msra.mxu0 0.0
        %1326 = vmatprep.subr.mxu0 0.0
        %1327 = vmatpush2.msra.mxu0 0.0
        %1328 = vmatprep.subr.mxu0 0.0
        %1329 = vmatpush2.msra.mxu0 0.0
        %1330 = vmatprep.subr.mxu0 0.0
        %1331 = vmatpush2.msra.mxu0 0.0
        %1332 = vmatprep.subr.mxu0 0.0
        %1333 = vmatpush2.msra.mxu0 0.0
        %1334 = vmatprep.subr.mxu0 0.0
        %1335 = vmatpush2.msra.mxu0 0.0
        %1336 = vmatprep.subr.mxu0 0.0
        %1337 = vmatpush2.msra.mxu0 0.0
        %1338 = vmatprep.subr.mxu0 0.0
        %1339 = vmatpush2.msra.mxu0 0.0
        %1340 = vmatprep.subr.mxu0 0.0
        %1341 = vmatpush2.msra.mxu0 0.0
        %1342 = vmatprep.subr.mxu0 0.0
        %1343 = vmatpush2.msra.mxu0 0.0
        %1344 = vmatprep.subr.mxu0 0.0
        %1345 = vmatpush2.msra.mxu0 0.0
        %1346 = vmatprep.subr.mxu0 0.0
        %1347 = vmatpush2.msra.mxu0 0.0
        %1348 = vmatprep.subr.mxu0 0.0
        %1349 = vmatpush2.msra.mxu0 0.0
        %1350 = vmatprep.subr.mxu0 0.0
        %1351 = vmatpush2.msra.mxu0 0.0
        %1352 = vmatprep.subr.mxu0 0.0
        %1353 = vmatpush2.msra.mxu0 0.0
        %1354 = vmatprep.mubr.f32.mxu0 0.0
        %1355 = vmatmul.mubr.f32.gmra.mxu0 %v1282
        %v1356 = vpop.f32.mrf.mxu0
        %v1357 = vadd.f32 0.0, %v1356
        %v1358 = vpop.f32.mrf.mxu0
        %1359 = vmatprep.mubr.f32.mxu0 0.0
        %1360 = vmatmul.mubr.f32.gmra.mxu0 %v1284
        %v1361 = vpop.f32.mrf.mxu0
        %v1362 = vadd.f32 0.0, %v1361
        %v1363 = vpop.f32.mrf.mxu0
        %1364 = vmatprep.mubr.f32.mxu0 0.0
        %1365 = vmatmul.mubr.f32.gmra.mxu0 %v1286
        %v1366 = vpop.f32.mrf.mxu0
        %v1367 = vadd.f32 0.0, %v1366
        %v1368 = vpop.f32.mrf.mxu0
        %1369 = vmatprep.mubr.f32.mxu0 0.0
        %1370 = vmatmul.mubr.f32.gmra.mxu0 %v1288
        %v1371 = vpop.f32.mrf.mxu0
        %v1372 = vadd.f32 0.0, %v1371
        %v1373 = vpop.f32.mrf.mxu0
        %1374 = vdwg.mxu0
        %v1375 = vadd.f32 %v1266, %v1357
        %v1376 = vadd.f32 %v1267, %v1362
        %v1377 = vadd.f32 %v1268, %v1367
        %v1378 = vadd.f32 %v1269, %v1372
        %s1379 = scalar_lea.vmem %s1, 224
        %v1380 = vld [vmem:[%s1379] sm:$0xff]
        %v1381 = vld [vmem:[%s1379 + $0x8] sm:$0xff]
        %v1382 = vld [vmem:[%s1379 + $0x10] sm:$0xff]
        %v1383 = vld [vmem:[%s1379 + $0x18] sm:$0xff]
        %v1384 = vrot.slane %v1160, 2
        %v1385 = vrot.slane %v1161, 2
        %v1386 = vsel %vm834, %v1384, %v1385
        %v1387 = vrot.slane %v1162, 2
        %v1388 = vsel %vm834, %v1385, %v1387
        %v1389 = vrot.slane %v1163, 2
        %v1390 = vsel %vm834, %v1387, %v1389
        %v1391 = vsel %vm642, %v1386, 0
        %v1393 = vsel %vm642, %v1388, 0
        %v1395 = vsel %vm642, %v1390, 0
        %v1397 = vsel %vm642, %v1389, 0
        %1399 = vmatprep.subr.mxu0 0.0
        %1400 = vmatpush1.msra.mxu0 0.0
        %1401 = vmatprep.subr.mxu0 0.0
        %1402 = vmatpush1.msra.mxu0 0.0
        %1403 = vmatprep.subr.mxu0 0.0
        %1404 = vmatpush1.msra.mxu0 0.0
        %1405 = vmatprep.subr.mxu0 0.0
        %1406 = vmatpush1.msra.mxu0 0.0
        %1407 = vmatprep.subr.mxu0 0.0
        %1408 = vmatpush1.msra.mxu0 0.0
        %1409 = vmatprep.subr.mxu0 0.0
        %1410 = vmatpush1.msra.mxu0 0.0
        %1411 = vmatprep.subr.mxu0 0.0
        %1412 = vmatpush1.msra.mxu0 0.0
        %1413 = vmatprep.subr.mxu0 0.0
        %1414 = vmatpush1.msra.mxu0 0.0
        %1415 = vmatprep.subr.mxu0 0.0
        %1416 = vmatpush1.msra.mxu0 0.0
        %1417 = vmatprep.subr.mxu0 0.0
        %1418 = vmatpush1.msra.mxu0 0.0
        %1419 = vmatprep.subr.mxu0 0.0
        %1420 = vmatpush1.msra.mxu0 0.0
        %1421 = vmatprep.subr.mxu0 0.0
        %1422 = vmatpush1.msra.mxu0 0.0
        %1423 = vmatprep.subr.mxu0 0.0
        %1424 = vmatpush1.msra.mxu0 %v1383
        %1425 = vmatprep.subr.mxu0 0.0
        %1426 = vmatpush1.msra.mxu0 %v1382
        %1427 = vmatprep.subr.mxu0 0.0
        %1428 = vmatpush1.msra.mxu0 %v1381
        %1429 = vmatprep.subr.mxu0 0.0
        %1430 = vmatpush1.msra.mxu0 %v1380
        %1431 = vmatprep.subr.mxu0 0.0
        %1432 = vmatpush2.msra.mxu0 0.0
        %1433 = vmatprep.subr.mxu0 0.0
        %1434 = vmatpush2.msra.mxu0 0.0
        %1435 = vmatprep.subr.mxu0 0.0
        %1436 = vmatpush2.msra.mxu0 0.0
        %1437 = vmatprep.subr.mxu0 0.0
        %1438 = vmatpush2.msra.mxu0 0.0
        %1439 = vmatprep.subr.mxu0 0.0
        %1440 = vmatpush2.msra.mxu0 0.0
        %1441 = vmatprep.subr.mxu0 0.0
        %1442 = vmatpush2.msra.mxu0 0.0
        %1443 = vmatprep.subr.mxu0 0.0
        %1444 = vmatpush2.msra.mxu0 0.0
        %1445 = vmatprep.subr.mxu0 0.0
        %1446 = vmatpush2.msra.mxu0 0.0
        %1447 = vmatprep.subr.mxu0 0.0
        %1448 = vmatpush2.msra.mxu0 0.0
        %1449 = vmatprep.subr.mxu0 0.0
        %1450 = vmatpush2.msra.mxu0 0.0
        %1451 = vmatprep.subr.mxu0 0.0
        %1452 = vmatpush2.msra.mxu0 0.0
        %1453 = vmatprep.subr.mxu0 0.0
        %1454 = vmatpush2.msra.mxu0 0.0
        %1455 = vmatprep.subr.mxu0 0.0
        %1456 = vmatpush2.msra.mxu0 0.0
        %1457 = vmatprep.subr.mxu0 0.0
        %1458 = vmatpush2.msra.mxu0 0.0
        %1459 = vmatprep.subr.mxu0 0.0
        %1460 = vmatpush2.msra.mxu0 0.0
        %1461 = vmatprep.subr.mxu0 0.0
        %1462 = vmatpush2.msra.mxu0 0.0
        %1463 = vmatprep.mubr.f32.mxu0 0.0
        %1464 = vmatmul.mubr.f32.gmra.mxu0 %v1391
        %v1465 = vpop.f32.mrf.mxu0
        %v1466 = vadd.f32 0.0, %v1465
        %v1467 = vpop.f32.mrf.mxu0
        %1468 = vmatprep.mubr.f32.mxu0 0.0
        %1469 = vmatmul.mubr.f32.gmra.mxu0 %v1393
        %v1470 = vpop.f32.mrf.mxu0
        %v1471 = vadd.f32 0.0, %v1470
        %v1472 = vpop.f32.mrf.mxu0
        %1473 = vmatprep.mubr.f32.mxu0 0.0
        %1474 = vmatmul.mubr.f32.gmra.mxu0 %v1395
        %v1475 = vpop.f32.mrf.mxu0
        %v1476 = vadd.f32 0.0, %v1475
        %v1477 = vpop.f32.mrf.mxu0
        %1478 = vmatprep.mubr.f32.mxu0 0.0
        %1479 = vmatmul.mubr.f32.gmra.mxu0 %v1397
        %v1480 = vpop.f32.mrf.mxu0
        %v1481 = vadd.f32 0.0, %v1480
        %v1482 = vpop.f32.mrf.mxu0
        %1483 = vdwg.mxu0
        %v1484 = vadd.f32 %v1375, %v1466
        %v1485 = vadd.f32 %v1376, %v1471
        %v1486 = vadd.f32 %v1377, %v1476
        %v1487 = vadd.f32 %v1378, %v1481
        %s1488 = scalar_lea.vmem %s1, 256
        %v1489 = vld [vmem:[%s1488] sm:$0xff]
        %v1490 = vld [vmem:[%s1488 + $0x8] sm:$0xff]
        %v1491 = vld [vmem:[%s1488 + $0x10] sm:$0xff]
        %v1492 = vld [vmem:[%s1488 + $0x18] sm:$0xff]
        %v1493 = vrot.slane %v1160, 3
        %v1494 = vrot.slane %v1161, 3
        %v1495 = vsel %vm944, %v1493, %v1494
        %v1496 = vrot.slane %v1162, 3
        %v1497 = vsel %vm944, %v1494, %v1496
        %v1498 = vrot.slane %v1163, 3
        %v1499 = vsel %vm944, %v1496, %v1498
        %v1500 = vsel %vm642, %v1495, 0
        %v1502 = vsel %vm642, %v1497, 0
        %v1504 = vsel %vm642, %v1499, 0
        %v1506 = vsel %vm642, %v1498, 0
        %1508 = vmatprep.subr.mxu0 0.0
        %1509 = vmatpush1.msra.mxu0 0.0
        %1510 = vmatprep.subr.mxu0 0.0
        %1511 = vmatpush1.msra.mxu0 0.0
        %1512 = vmatprep.subr.mxu0 0.0
        %1513 = vmatpush1.msra.mxu0 0.0
        %1514 = vmatprep.subr.mxu0 0.0
        %1515 = vmatpush1.msra.mxu0 0.0
        %1516 = vmatprep.subr.mxu0 0.0
        %1517 = vmatpush1.msra.mxu0 0.0
        %1518 = vmatprep.subr.mxu0 0.0
        %1519 = vmatpush1.msra.mxu0 0.0
        %1520 = vmatprep.subr.mxu0 0.0
        %1521 = vmatpush1.msra.mxu0 0.0
        %1522 = vmatprep.subr.mxu0 0.0
        %1523 = vmatpush1.msra.mxu0 0.0
        %1524 = vmatprep.subr.mxu0 0.0
        %1525 = vmatpush1.msra.mxu0 0.0
        %1526 = vmatprep.subr.mxu0 0.0
        %1527 = vmatpush1.msra.mxu0 0.0
        %1528 = vmatprep.subr.mxu0 0.0
        %1529 = vmatpush1.msra.mxu0 0.0
        %1530 = vmatprep.subr.mxu0 0.0
        %1531 = vmatpush1.msra.mxu0 0.0
        %1532 = vmatprep.subr.mxu0 0.0
        %1533 = vmatpush1.msra.mxu0 %v1492
        %1534 = vmatprep.subr.mxu0 0.0
        %1535 = vmatpush1.msra.mxu0 %v1491
        %1536 = vmatprep.subr.mxu0 0.0
        %1537 = vmatpush1.msra.mxu0 %v1490
        %1538 = vmatprep.subr.mxu0 0.0
        %1539 = vmatpush1.msra.mxu0 %v1489
        %1540 = vmatprep.subr.mxu0 0.0
        %1541 = vmatpush2.msra.mxu0 0.0
        %1542 = vmatprep.subr.mxu0 0.0
        %1543 = vmatpush2.msra.mxu0 0.0
        %1544 = vmatprep.subr.mxu0 0.0
        %1545 = vmatpush2.msra.mxu0 0.0
        %1546 = vmatprep.subr.mxu0 0.0
        %1547 = vmatpush2.msra.mxu0 0.0
        %1548 = vmatprep.subr.mxu0 0.0
        %1549 = vmatpush2.msra.mxu0 0.0
        %1550 = vmatprep.subr.mxu0 0.0
        %1551 = vmatpush2.msra.mxu0 0.0
        %1552 = vmatprep.subr.mxu0 0.0
        %1553 = vmatpush2.msra.mxu0 0.0
        %1554 = vmatprep.subr.mxu0 0.0
        %1555 = vmatpush2.msra.mxu0 0.0
        %1556 = vmatprep.subr.mxu0 0.0
        %1557 = vmatpush2.msra.mxu0 0.0
        %1558 = vmatprep.subr.mxu0 0.0
        %1559 = vmatpush2.msra.mxu0 0.0
        %1560 = vmatprep.subr.mxu0 0.0
        %1561 = vmatpush2.msra.mxu0 0.0
        %1562 = vmatprep.subr.mxu0 0.0
        %1563 = vmatpush2.msra.mxu0 0.0
        %1564 = vmatprep.subr.mxu0 0.0
        %1565 = vmatpush2.msra.mxu0 0.0
        %1566 = vmatprep.subr.mxu0 0.0
        %1567 = vmatpush2.msra.mxu0 0.0
        %1568 = vmatprep.subr.mxu0 0.0
        %1569 = vmatpush2.msra.mxu0 0.0
        %1570 = vmatprep.subr.mxu0 0.0
        %1571 = vmatpush2.msra.mxu0 0.0
        %1572 = vmatprep.mubr.f32.mxu0 0.0
        %1573 = vmatmul.mubr.f32.gmra.mxu0 %v1500
        %v1574 = vpop.f32.mrf.mxu0
        %v1575 = vadd.f32 0.0, %v1574
        %v1576 = vpop.f32.mrf.mxu0
        %1577 = vmatprep.mubr.f32.mxu0 0.0
        %1578 = vmatmul.mubr.f32.gmra.mxu0 %v1502
        %v1579 = vpop.f32.mrf.mxu0
        %v1580 = vadd.f32 0.0, %v1579
        %v1581 = vpop.f32.mrf.mxu0
        %1582 = vmatprep.mubr.f32.mxu0 0.0
        %1583 = vmatmul.mubr.f32.gmra.mxu0 %v1504
        %v1584 = vpop.f32.mrf.mxu0
        %v1585 = vadd.f32 0.0, %v1584
        %v1586 = vpop.f32.mrf.mxu0
        %1587 = vmatprep.mubr.f32.mxu0 0.0
        %1588 = vmatmul.mubr.f32.gmra.mxu0 %v1506
        %v1589 = vpop.f32.mrf.mxu0
        %v1590 = vadd.f32 0.0, %v1589
        %v1591 = vpop.f32.mrf.mxu0
        %1592 = vdwg.mxu0
        %v1593 = vadd.f32 %v1484, %v1575
        %v1594 = vadd.f32 %v1485, %v1580
        %v1595 = vadd.f32 %v1486, %v1585
        %v1596 = vadd.f32 %v1487, %v1590
        %s1597 = scalar_lea.vmem %s1, 288
        %v1598 = vld [vmem:[%s1597] sm:$0xff]
        %v1599 = vld [vmem:[%s1597 + $0x8] sm:$0xff]
        %v1600 = vld [vmem:[%s1597 + $0x10] sm:$0xff]
        %v1601 = vld [vmem:[%s1597 + $0x18] sm:$0xff]
        %v1602 = vrot.slane %v1160, 4
        %v1603 = vrot.slane %v1161, 4
        %v1604 = vsel %vm1054, %v1602, %v1603
        %v1605 = vrot.slane %v1162, 4
        %v1606 = vsel %vm1054, %v1603, %v1605
        %v1607 = vrot.slane %v1163, 4
        %v1608 = vsel %vm1054, %v1605, %v1607
        %v1609 = vsel %vm642, %v1604, 0
        %v1611 = vsel %vm642, %v1606, 0
        %v1613 = vsel %vm642, %v1608, 0
        %v1615 = vsel %vm642, %v1607, 0
        %1617 = vmatprep.subr.mxu0 0.0
        %1618 = vmatpush1.msra.mxu0 0.0
        %1619 = vmatprep.subr.mxu0 0.0
        %1620 = vmatpush1.msra.mxu0 0.0
        %1621 = vmatprep.subr.mxu0 0.0
        %1622 = vmatpush1.msra.mxu0 0.0
        %1623 = vmatprep.subr.mxu0 0.0
        %1624 = vmatpush1.msra.mxu0 0.0
        %1625 = vmatprep.subr.mxu0 0.0
        %1626 = vmatpush1.msra.mxu0 0.0
        %1627 = vmatprep.subr.mxu0 0.0
        %1628 = vmatpush1.msra.mxu0 0.0
        %1629 = vmatprep.subr.mxu0 0.0
        %1630 = vmatpush1.msra.mxu0 0.0
        %1631 = vmatprep.subr.mxu0 0.0
        %1632 = vmatpush1.msra.mxu0 0.0
        %1633 = vmatprep.subr.mxu0 0.0
        %1634 = vmatpush1.msra.mxu0 0.0
        %1635 = vmatprep.subr.mxu0 0.0
        %1636 = vmatpush1.msra.mxu0 0.0
        %1637 = vmatprep.subr.mxu0 0.0
        %1638 = vmatpush1.msra.mxu0 0.0
        %1639 = vmatprep.subr.mxu0 0.0
        %1640 = vmatpush1.msra.mxu0 0.0
        %1641 = vmatprep.subr.mxu0 0.0
        %1642 = vmatpush1.msra.mxu0 %v1601
        %1643 = vmatprep.subr.mxu0 0.0
        %1644 = vmatpush1.msra.mxu0 %v1600
        %1645 = vmatprep.subr.mxu0 0.0
        %1646 = vmatpush1.msra.mxu0 %v1599
        %1647 = vmatprep.subr.mxu0 0.0
        %1648 = vmatpush1.msra.mxu0 %v1598
        %1649 = vmatprep.subr.mxu0 0.0
        %1650 = vmatpush2.msra.mxu0 0.0
        %1651 = vmatprep.subr.mxu0 0.0
        %1652 = vmatpush2.msra.mxu0 0.0
        %1653 = vmatprep.subr.mxu0 0.0
        %1654 = vmatpush2.msra.mxu0 0.0
        %1655 = vmatprep.subr.mxu0 0.0
        %1656 = vmatpush2.msra.mxu0 0.0
        %1657 = vmatprep.subr.mxu0 0.0
        %1658 = vmatpush2.msra.mxu0 0.0
        %1659 = vmatprep.subr.mxu0 0.0
        %1660 = vmatpush2.msra.mxu0 0.0
        %1661 = vmatprep.subr.mxu0 0.0
        %1662 = vmatpush2.msra.mxu0 0.0
        %1663 = vmatprep.subr.mxu0 0.0
        %1664 = vmatpush2.msra.mxu0 0.0
        %1665 = vmatprep.subr.mxu0 0.0
        %1666 = vmatpush2.msra.mxu0 0.0
        %1667 = vmatprep.subr.mxu0 0.0
        %1668 = vmatpush2.msra.mxu0 0.0
        %1669 = vmatprep.subr.mxu0 0.0
        %1670 = vmatpush2.msra.mxu0 0.0
        %1671 = vmatprep.subr.mxu0 0.0
        %1672 = vmatpush2.msra.mxu0 0.0
        %1673 = vmatprep.subr.mxu0 0.0
        %1674 = vmatpush2.msra.mxu0 0.0
        %1675 = vmatprep.subr.mxu0 0.0
        %1676 = vmatpush2.msra.mxu0 0.0
        %1677 = vmatprep.subr.mxu0 0.0
        %1678 = vmatpush2.msra.mxu0 0.0
        %1679 = vmatprep.subr.mxu0 0.0
        %1680 = vmatpush2.msra.mxu0 0.0
        %1681 = vmatprep.mubr.f32.mxu0 0.0
        %1682 = vmatmul.mubr.f32.gmra.mxu0 %v1609
        %v1683 = vpop.f32.mrf.mxu0
        %v1684 = vadd.f32 0.0, %v1683
        %v1685 = vpop.f32.mrf.mxu0
        %1686 = vmatprep.mubr.f32.mxu0 0.0
        %1687 = vmatmul.mubr.f32.gmra.mxu0 %v1611
        %v1688 = vpop.f32.mrf.mxu0
        %v1689 = vadd.f32 0.0, %v1688
        %v1690 = vpop.f32.mrf.mxu0
        %1691 = vmatprep.mubr.f32.mxu0 0.0
        %1692 = vmatmul.mubr.f32.gmra.mxu0 %v1613
        %v1693 = vpop.f32.mrf.mxu0
        %v1694 = vadd.f32 0.0, %v1693
        %v1695 = vpop.f32.mrf.mxu0
        %1696 = vmatprep.mubr.f32.mxu0 0.0
        %1697 = vmatmul.mubr.f32.gmra.mxu0 %v1615
        %v1698 = vpop.f32.mrf.mxu0
        %v1699 = vadd.f32 0.0, %v1698
        %v1700 = vpop.f32.mrf.mxu0
        %1701 = vdwg.mxu0
        %v1702 = vadd.f32 %v1593, %v1684
        %v1703 = vadd.f32 %v1594, %v1689
        %v1704 = vadd.f32 %v1595, %v1694
        %v1705 = vadd.f32 %v1596, %v1699
        %s1706 = scalar_lea.vmem %s616, 64
        %v1707 = vld [vmem:[%s1706] sm:$0xff]
        %v1708 = vld [vmem:[%s1706 + $0x8] sm:$0xff]
        %v1709 = vld [vmem:[%s1706 + $0x10] sm:$0xff]
        %v1710 = vld [vmem:[%s1706 + $0x18] sm:$0xff]
        %s1711 = scalar_lea.vmem %s1, 320
        %v1712 = vld [vmem:[%s1711] sm:$0xff]
        %v1713 = vld [vmem:[%s1711 + $0x8] sm:$0xff]
        %v1714 = vld [vmem:[%s1711 + $0x10] sm:$0xff]
        %v1715 = vld [vmem:[%s1711 + $0x18] sm:$0xff]
        %v1717 = vsel %vm642, %v1707, 0
        %v1720 = vsel %vm642, %v1708, 0
        %v1723 = vsel %vm642, %v1709, 0
        %v1726 = vsel %vm642, %v1710, 0
        %1728 = vmatprep.subr.mxu0 0.0
        %1729 = vmatpush1.msra.mxu0 0.0
        %1730 = vmatprep.subr.mxu0 0.0
        %1731 = vmatpush1.msra.mxu0 0.0
        %1732 = vmatprep.subr.mxu0 0.0
        %1733 = vmatpush1.msra.mxu0 0.0
        %1734 = vmatprep.subr.mxu0 0.0
        %1735 = vmatpush1.msra.mxu0 0.0
        %1736 = vmatprep.subr.mxu0 0.0
        %1737 = vmatpush1.msra.mxu0 0.0
        %1738 = vmatprep.subr.mxu0 0.0
        %1739 = vmatpush1.msra.mxu0 0.0
        %1740 = vmatprep.subr.mxu0 0.0
        %1741 = vmatpush1.msra.mxu0 0.0
        %1742 = vmatprep.subr.mxu0 0.0
        %1743 = vmatpush1.msra.mxu0 0.0
        %1744 = vmatprep.subr.mxu0 0.0
        %1745 = vmatpush1.msra.mxu0 0.0
        %1746 = vmatprep.subr.mxu0 0.0
        %1747 = vmatpush1.msra.mxu0 0.0
        %1748 = vmatprep.subr.mxu0 0.0
        %1749 = vmatpush1.msra.mxu0 0.0
        %1750 = vmatprep.subr.mxu0 0.0
        %1751 = vmatpush1.msra.mxu0 0.0
        %1752 = vmatprep.subr.mxu0 0.0
        %1753 = vmatpush1.msra.mxu0 %v1715
        %1754 = vmatprep.subr.mxu0 0.0
        %1755 = vmatpush1.msra.mxu0 %v1714
        %1756 = vmatprep.subr.mxu0 0.0
        %1757 = vmatpush1.msra.mxu0 %v1713
        %1758 = vmatprep.subr.mxu0 0.0
        %1759 = vmatpush1.msra.mxu0 %v1712
        %1760 = vmatprep.subr.mxu0 0.0
        %1761 = vmatpush2.msra.mxu0 0.0
        %1762 = vmatprep.subr.mxu0 0.0
        %1763 = vmatpush2.msra.mxu0 0.0
        %1764 = vmatprep.subr.mxu0 0.0
        %1765 = vmatpush2.msra.mxu0 0.0
        %1766 = vmatprep.subr.mxu0 0.0
        %1767 = vmatpush2.msra.mxu0 0.0
        %1768 = vmatprep.subr.mxu0 0.0
        %1769 = vmatpush2.msra.mxu0 0.0
        %1770 = vmatprep.subr.mxu0 0.0
        %1771 = vmatpush2.msra.mxu0 0.0
        %1772 = vmatprep.subr.mxu0 0.0
        %1773 = vmatpush2.msra.mxu0 0.0
        %1774 = vmatprep.subr.mxu0 0.0
        %1775 = vmatpush2.msra.mxu0 0.0
        %1776 = vmatprep.subr.mxu0 0.0
        %1777 = vmatpush2.msra.mxu0 0.0
        %1778 = vmatprep.subr.mxu0 0.0
        %1779 = vmatpush2.msra.mxu0 0.0
        %1780 = vmatprep.subr.mxu0 0.0
        %1781 = vmatpush2.msra.mxu0 0.0
        %1782 = vmatprep.subr.mxu0 0.0
        %1783 = vmatpush2.msra.mxu0 0.0
        %1784 = vmatprep.subr.mxu0 0.0
        %1785 = vmatpush2.msra.mxu0 0.0
        %1786 = vmatprep.subr.mxu0 0.0
        %1787 = vmatpush2.msra.mxu0 0.0
        %1788 = vmatprep.subr.mxu0 0.0
        %1789 = vmatpush2.msra.mxu0 0.0
        %1790 = vmatprep.subr.mxu0 0.0
        %1791 = vmatpush2.msra.mxu0 0.0
        %1792 = vmatprep.mubr.f32.mxu0 0.0
        %1793 = vmatmul.mubr.f32.gmra.mxu0 %v1717
        %v1794 = vpop.f32.mrf.mxu0
        %v1795 = vadd.f32 0.0, %v1794
        %v1796 = vpop.f32.mrf.mxu0
        %1797 = vmatprep.mubr.f32.mxu0 0.0
        %1798 = vmatmul.mubr.f32.gmra.mxu0 %v1720
        %v1799 = vpop.f32.mrf.mxu0
        %v1800 = vadd.f32 0.0, %v1799
        %v1801 = vpop.f32.mrf.mxu0
        %1802 = vmatprep.mubr.f32.mxu0 0.0
        %1803 = vmatmul.mubr.f32.gmra.mxu0 %v1723
        %v1804 = vpop.f32.mrf.mxu0
        %v1805 = vadd.f32 0.0, %v1804
        %v1806 = vpop.f32.mrf.mxu0
        %1807 = vmatprep.mubr.f32.mxu0 0.0
        %1808 = vmatmul.mubr.f32.gmra.mxu0 %v1726
        %v1809 = vpop.f32.mrf.mxu0
        %v1810 = vadd.f32 0.0, %v1809
        %v1811 = vpop.f32.mrf.mxu0
        %1812 = vdwg.mxu0
        %v1813 = vadd.f32 %v1702, %v1795
        %v1814 = vadd.f32 %v1703, %v1800
        %v1815 = vadd.f32 %v1704, %v1805
        %v1816 = vadd.f32 %v1705, %v1810
        %s1817 = scalar_lea.vmem %s1, 352
        %v1818 = vld [vmem:[%s1817] sm:$0xff]
        %v1819 = vld [vmem:[%s1817 + $0x8] sm:$0xff]
        %v1820 = vld [vmem:[%s1817 + $0x10] sm:$0xff]
        %v1821 = vld [vmem:[%s1817 + $0x18] sm:$0xff]
        %v1822 = vrot.slane %v1707, 1
        %v1823 = vrot.slane %v1708, 1
        %v1824 = vsel %vm634, %v1822, %v1823
        %v1825 = vrot.slane %v1709, 1
        %v1826 = vsel %vm634, %v1823, %v1825
        %v1827 = vrot.slane %v1710, 1
        %v1828 = vsel %vm634, %v1825, %v1827
        %v1829 = vsel %vm642, %v1824, 0
        %v1831 = vsel %vm642, %v1826, 0
        %v1833 = vsel %vm642, %v1828, 0
        %v1835 = vsel %vm642, %v1827, 0
        %1837 = vmatprep.subr.mxu0 0.0
        %1838 = vmatpush1.msra.mxu0 0.0
        %1839 = vmatprep.subr.mxu0 0.0
        %1840 = vmatpush1.msra.mxu0 0.0
        %1841 = vmatprep.subr.mxu0 0.0
        %1842 = vmatpush1.msra.mxu0 0.0
        %1843 = vmatprep.subr.mxu0 0.0
        %1844 = vmatpush1.msra.mxu0 0.0
        %1845 = vmatprep.subr.mxu0 0.0
        %1846 = vmatpush1.msra.mxu0 0.0
        %1847 = vmatprep.subr.mxu0 0.0
        %1848 = vmatpush1.msra.mxu0 0.0
        %1849 = vmatprep.subr.mxu0 0.0
        %1850 = vmatpush1.msra.mxu0 0.0
        %1851 = vmatprep.subr.mxu0 0.0
        %1852 = vmatpush1.msra.mxu0 0.0
        %1853 = vmatprep.subr.mxu0 0.0
        %1854 = vmatpush1.msra.mxu0 0.0
        %1855 = vmatprep.subr.mxu0 0.0
        %1856 = vmatpush1.msra.mxu0 0.0
        %1857 = vmatprep.subr.mxu0 0.0
        %1858 = vmatpush1.msra.mxu0 0.0
        %1859 = vmatprep.subr.mxu0 0.0
        %1860 = vmatpush1.msra.mxu0 0.0
        %1861 = vmatprep.subr.mxu0 0.0
        %1862 = vmatpush1.msra.mxu0 %v1821
        %1863 = vmatprep.subr.mxu0 0.0
        %1864 = vmatpush1.msra.mxu0 %v1820
        %1865 = vmatprep.subr.mxu0 0.0
        %1866 = vmatpush1.msra.mxu0 %v1819
        %1867 = vmatprep.subr.mxu0 0.0
        %1868 = vmatpush1.msra.mxu0 %v1818
        %1869 = vmatprep.subr.mxu0 0.0
        %1870 = vmatpush2.msra.mxu0 0.0
        %1871 = vmatprep.subr.mxu0 0.0
        %1872 = vmatpush2.msra.mxu0 0.0
        %1873 = vmatprep.subr.mxu0 0.0
        %1874 = vmatpush2.msra.mxu0 0.0
        %1875 = vmatprep.subr.mxu0 0.0
        %1876 = vmatpush2.msra.mxu0 0.0
        %1877 = vmatprep.subr.mxu0 0.0
        %1878 = vmatpush2.msra.mxu0 0.0
        %1879 = vmatprep.subr.mxu0 0.0
        %1880 = vmatpush2.msra.mxu0 0.0
        %1881 = vmatprep.subr.mxu0 0.0
        %1882 = vmatpush2.msra.mxu0 0.0
        %1883 = vmatprep.subr.mxu0 0.0
        %1884 = vmatpush2.msra.mxu0 0.0
        %1885 = vmatprep.subr.mxu0 0.0
        %1886 = vmatpush2.msra.mxu0 0.0
        %1887 = vmatprep.subr.mxu0 0.0
        %1888 = vmatpush2.msra.mxu0 0.0
        %1889 = vmatprep.subr.mxu0 0.0
        %1890 = vmatpush2.msra.mxu0 0.0
        %1891 = vmatprep.subr.mxu0 0.0
        %1892 = vmatpush2.msra.mxu0 0.0
        %1893 = vmatprep.subr.mxu0 0.0
        %1894 = vmatpush2.msra.mxu0 0.0
        %1895 = vmatprep.subr.mxu0 0.0
        %1896 = vmatpush2.msra.mxu0 0.0
        %1897 = vmatprep.subr.mxu0 0.0
        %1898 = vmatpush2.msra.mxu0 0.0
        %1899 = vmatprep.subr.mxu0 0.0
        %1900 = vmatpush2.msra.mxu0 0.0
        %1901 = vmatprep.mubr.f32.mxu0 0.0
        %1902 = vmatmul.mubr.f32.gmra.mxu0 %v1829
        %v1903 = vpop.f32.mrf.mxu0
        %v1904 = vadd.f32 0.0, %v1903
        %v1905 = vpop.f32.mrf.mxu0
        %1906 = vmatprep.mubr.f32.mxu0 0.0
        %1907 = vmatmul.mubr.f32.gmra.mxu0 %v1831
        %v1908 = vpop.f32.mrf.mxu0
        %v1909 = vadd.f32 0.0, %v1908
        %v1910 = vpop.f32.mrf.mxu0
        %1911 = vmatprep.mubr.f32.mxu0 0.0
        %1912 = vmatmul.mubr.f32.gmra.mxu0 %v1833
        %v1913 = vpop.f32.mrf.mxu0
        %v1914 = vadd.f32 0.0, %v1913
        %v1915 = vpop.f32.mrf.mxu0
        %1916 = vmatprep.mubr.f32.mxu0 0.0
        %1917 = vmatmul.mubr.f32.gmra.mxu0 %v1835
        %v1918 = vpop.f32.mrf.mxu0
        %v1919 = vadd.f32 0.0, %v1918
        %v1920 = vpop.f32.mrf.mxu0
        %1921 = vdwg.mxu0
        %v1922 = vadd.f32 %v1813, %v1904
        %v1923 = vadd.f32 %v1814, %v1909
        %v1924 = vadd.f32 %v1815, %v1914
        %v1925 = vadd.f32 %v1816, %v1919
        %s1926 = scalar_lea.vmem %s1, 384
        %v1927 = vld [vmem:[%s1926] sm:$0xff]
        %v1928 = vld [vmem:[%s1926 + $0x8] sm:$0xff]
        %v1929 = vld [vmem:[%s1926 + $0x10] sm:$0xff]
        %v1930 = vld [vmem:[%s1926 + $0x18] sm:$0xff]
        %v1931 = vrot.slane %v1707, 2
        %v1932 = vrot.slane %v1708, 2
        %v1933 = vsel %vm834, %v1931, %v1932
        %v1934 = vrot.slane %v1709, 2
        %v1935 = vsel %vm834, %v1932, %v1934
        %v1936 = vrot.slane %v1710, 2
        %v1937 = vsel %vm834, %v1934, %v1936
        %v1938 = vsel %vm642, %v1933, 0
        %v1940 = vsel %vm642, %v1935, 0
        %v1942 = vsel %vm642, %v1937, 0
        %v1944 = vsel %vm642, %v1936, 0
        %1946 = vmatprep.subr.mxu0 0.0
        %1947 = vmatpush1.msra.mxu0 0.0
        %1948 = vmatprep.subr.mxu0 0.0
        %1949 = vmatpush1.msra.mxu0 0.0
        %1950 = vmatprep.subr.mxu0 0.0
        %1951 = vmatpush1.msra.mxu0 0.0
        %1952 = vmatprep.subr.mxu0 0.0
        %1953 = vmatpush1.msra.mxu0 0.0
        %1954 = vmatprep.subr.mxu0 0.0
        %1955 = vmatpush1.msra.mxu0 0.0
        %1956 = vmatprep.subr.mxu0 0.0
        %1957 = vmatpush1.msra.mxu0 0.0
        %1958 = vmatprep.subr.mxu0 0.0
        %1959 = vmatpush1.msra.mxu0 0.0
        %1960 = vmatprep.subr.mxu0 0.0
        %1961 = vmatpush1.msra.mxu0 0.0
        %1962 = vmatprep.subr.mxu0 0.0
        %1963 = vmatpush1.msra.mxu0 0.0
        %1964 = vmatprep.subr.mxu0 0.0
        %1965 = vmatpush1.msra.mxu0 0.0
        %1966 = vmatprep.subr.mxu0 0.0
        %1967 = vmatpush1.msra.mxu0 0.0
        %1968 = vmatprep.subr.mxu0 0.0
        %1969 = vmatpush1.msra.mxu0 0.0
        %1970 = vmatprep.subr.mxu0 0.0
        %1971 = vmatpush1.msra.mxu0 %v1930
        %1972 = vmatprep.subr.mxu0 0.0
        %1973 = vmatpush1.msra.mxu0 %v1929
        %1974 = vmatprep.subr.mxu0 0.0
        %1975 = vmatpush1.msra.mxu0 %v1928
        %1976 = vmatprep.subr.mxu0 0.0
        %1977 = vmatpush1.msra.mxu0 %v1927
        %1978 = vmatprep.subr.mxu0 0.0
        %1979 = vmatpush2.msra.mxu0 0.0
        %1980 = vmatprep.subr.mxu0 0.0
        %1981 = vmatpush2.msra.mxu0 0.0
        %1982 = vmatprep.subr.mxu0 0.0
        %1983 = vmatpush2.msra.mxu0 0.0
        %1984 = vmatprep.subr.mxu0 0.0
        %1985 = vmatpush2.msra.mxu0 0.0
        %1986 = vmatprep.subr.mxu0 0.0
        %1987 = vmatpush2.msra.mxu0 0.0
        %1988 = vmatprep.subr.mxu0 0.0
        %1989 = vmatpush2.msra.mxu0 0.0
        %1990 = vmatprep.subr.mxu0 0.0
        %1991 = vmatpush2.msra.mxu0 0.0
        %1992 = vmatprep.subr.mxu0 0.0
        %1993 = vmatpush2.msra.mxu0 0.0
        %1994 = vmatprep.subr.mxu0 0.0
        %1995 = vmatpush2.msra.mxu0 0.0
        %1996 = vmatprep.subr.mxu0 0.0
        %1997 = vmatpush2.msra.mxu0 0.0
        %1998 = vmatprep.subr.mxu0 0.0
        %1999 = vmatpush2.msra.mxu0 0.0
        %2000 = vmatprep.subr.mxu0 0.0
        %2001 = vmatpush2.msra.mxu0 0.0
        %2002 = vmatprep.subr.mxu0 0.0
        %2003 = vmatpush2.msra.mxu0 0.0
        %2004 = vmatprep.subr.mxu0 0.0
        %2005 = vmatpush2.msra.mxu0 0.0
        %2006 = vmatprep.subr.mxu0 0.0
        %2007 = vmatpush2.msra.mxu0 0.0
        %2008 = vmatprep.subr.mxu0 0.0
        %2009 = vmatpush2.msra.mxu0 0.0
        %2010 = vmatprep.mubr.f32.mxu0 0.0
        %2011 = vmatmul.mubr.f32.gmra.mxu0 %v1938
        %v2012 = vpop.f32.mrf.mxu0
        %v2013 = vadd.f32 0.0, %v2012
        %v2014 = vpop.f32.mrf.mxu0
        %2015 = vmatprep.mubr.f32.mxu0 0.0
        %2016 = vmatmul.mubr.f32.gmra.mxu0 %v1940
        %v2017 = vpop.f32.mrf.mxu0
        %v2018 = vadd.f32 0.0, %v2017
        %v2019 = vpop.f32.mrf.mxu0
        %2020 = vmatprep.mubr.f32.mxu0 0.0
        %2021 = vmatmul.mubr.f32.gmra.mxu0 %v1942
        %v2022 = vpop.f32.mrf.mxu0
        %v2023 = vadd.f32 0.0, %v2022
        %v2024 = vpop.f32.mrf.mxu0
        %2025 = vmatprep.mubr.f32.mxu0 0.0
        %2026 = vmatmul.mubr.f32.gmra.mxu0 %v1944
        %v2027 = vpop.f32.mrf.mxu0
        %v2028 = vadd.f32 0.0, %v2027
        %v2029 = vpop.f32.mrf.mxu0
        %2030 = vdwg.mxu0
        %v2031 = vadd.f32 %v1922, %v2013
        %v2032 = vadd.f32 %v1923, %v2018
        %v2033 = vadd.f32 %v1924, %v2023
        %v2034 = vadd.f32 %v1925, %v2028
        %s2035 = scalar_lea.vmem %s1, 416
        %v2036 = vld [vmem:[%s2035] sm:$0xff]
        %v2037 = vld [vmem:[%s2035 + $0x8] sm:$0xff]
        %v2038 = vld [vmem:[%s2035 + $0x10] sm:$0xff]
        %v2039 = vld [vmem:[%s2035 + $0x18] sm:$0xff]
        %v2040 = vrot.slane %v1707, 3
        %v2041 = vrot.slane %v1708, 3
        %v2042 = vsel %vm944, %v2040, %v2041
        %v2043 = vrot.slane %v1709, 3
        %v2044 = vsel %vm944, %v2041, %v2043
        %v2045 = vrot.slane %v1710, 3
        %v2046 = vsel %vm944, %v2043, %v2045
        %v2047 = vsel %vm642, %v2042, 0
        %v2049 = vsel %vm642, %v2044, 0
        %v2051 = vsel %vm642, %v2046, 0
        %v2053 = vsel %vm642, %v2045, 0
        %2055 = vmatprep.subr.mxu0 0.0
        %2056 = vmatpush1.msra.mxu0 0.0
        %2057 = vmatprep.subr.mxu0 0.0
        %2058 = vmatpush1.msra.mxu0 0.0
        %2059 = vmatprep.subr.mxu0 0.0
        %2060 = vmatpush1.msra.mxu0 0.0
        %2061 = vmatprep.subr.mxu0 0.0
        %2062 = vmatpush1.msra.mxu0 0.0
        %2063 = vmatprep.subr.mxu0 0.0
        %2064 = vmatpush1.msra.mxu0 0.0
        %2065 = vmatprep.subr.mxu0 0.0
        %2066 = vmatpush1.msra.mxu0 0.0
        %2067 = vmatprep.subr.mxu0 0.0
        %2068 = vmatpush1.msra.mxu0 0.0
        %2069 = vmatprep.subr.mxu0 0.0
        %2070 = vmatpush1.msra.mxu0 0.0
        %2071 = vmatprep.subr.mxu0 0.0
        %2072 = vmatpush1.msra.mxu0 0.0
        %2073 = vmatprep.subr.mxu0 0.0
        %2074 = vmatpush1.msra.mxu0 0.0
        %2075 = vmatprep.subr.mxu0 0.0
        %2076 = vmatpush1.msra.mxu0 0.0
        %2077 = vmatprep.subr.mxu0 0.0
        %2078 = vmatpush1.msra.mxu0 0.0
        %2079 = vmatprep.subr.mxu0 0.0
        %2080 = vmatpush1.msra.mxu0 %v2039
        %2081 = vmatprep.subr.mxu0 0.0
        %2082 = vmatpush1.msra.mxu0 %v2038
        %2083 = vmatprep.subr.mxu0 0.0
        %2084 = vmatpush1.msra.mxu0 %v2037
        %2085 = vmatprep.subr.mxu0 0.0
        %2086 = vmatpush1.msra.mxu0 %v2036
        %2087 = vmatprep.subr.mxu0 0.0
        %2088 = vmatpush2.msra.mxu0 0.0
        %2089 = vmatprep.subr.mxu0 0.0
        %2090 = vmatpush2.msra.mxu0 0.0
        %2091 = vmatprep.subr.mxu0 0.0
        %2092 = vmatpush2.msra.mxu0 0.0
        %2093 = vmatprep.subr.mxu0 0.0
        %2094 = vmatpush2.msra.mxu0 0.0
        %2095 = vmatprep.subr.mxu0 0.0
        %2096 = vmatpush2.msra.mxu0 0.0
        %2097 = vmatprep.subr.mxu0 0.0
        %2098 = vmatpush2.msra.mxu0 0.0
        %2099 = vmatprep.subr.mxu0 0.0
        %2100 = vmatpush2.msra.mxu0 0.0
        %2101 = vmatprep.subr.mxu0 0.0
        %2102 = vmatpush2.msra.mxu0 0.0
        %2103 = vmatprep.subr.mxu0 0.0
        %2104 = vmatpush2.msra.mxu0 0.0
        %2105 = vmatprep.subr.mxu0 0.0
        %2106 = vmatpush2.msra.mxu0 0.0
        %2107 = vmatprep.subr.mxu0 0.0
        %2108 = vmatpush2.msra.mxu0 0.0
        %2109 = vmatprep.subr.mxu0 0.0
        %2110 = vmatpush2.msra.mxu0 0.0
        %2111 = vmatprep.subr.mxu0 0.0
        %2112 = vmatpush2.msra.mxu0 0.0
        %2113 = vmatprep.subr.mxu0 0.0
        %2114 = vmatpush2.msra.mxu0 0.0
        %2115 = vmatprep.subr.mxu0 0.0
        %2116 = vmatpush2.msra.mxu0 0.0
        %2117 = vmatprep.subr.mxu0 0.0
        %2118 = vmatpush2.msra.mxu0 0.0
        %2119 = vmatprep.mubr.f32.mxu0 0.0
        %2120 = vmatmul.mubr.f32.gmra.mxu0 %v2047
        %v2121 = vpop.f32.mrf.mxu0
        %v2122 = vadd.f32 0.0, %v2121
        %v2123 = vpop.f32.mrf.mxu0
        %2124 = vmatprep.mubr.f32.mxu0 0.0
        %2125 = vmatmul.mubr.f32.gmra.mxu0 %v2049
        %v2126 = vpop.f32.mrf.mxu0
        %v2127 = vadd.f32 0.0, %v2126
        %v2128 = vpop.f32.mrf.mxu0
        %2129 = vmatprep.mubr.f32.mxu0 0.0
        %2130 = vmatmul.mubr.f32.gmra.mxu0 %v2051
        %v2131 = vpop.f32.mrf.mxu0
        %v2132 = vadd.f32 0.0, %v2131
        %v2133 = vpop.f32.mrf.mxu0
        %2134 = vmatprep.mubr.f32.mxu0 0.0
        %2135 = vmatmul.mubr.f32.gmra.mxu0 %v2053
        %v2136 = vpop.f32.mrf.mxu0
        %v2137 = vadd.f32 0.0, %v2136
        %v2138 = vpop.f32.mrf.mxu0
        %2139 = vdwg.mxu0
        %v2140 = vadd.f32 %v2031, %v2122
        %v2141 = vadd.f32 %v2032, %v2127
        %v2142 = vadd.f32 %v2033, %v2132
        %v2143 = vadd.f32 %v2034, %v2137
        %s2144 = scalar_lea.vmem %s1, 448
        %v2145 = vld [vmem:[%s2144] sm:$0xff]
        %v2146 = vld [vmem:[%s2144 + $0x8] sm:$0xff]
        %v2147 = vld [vmem:[%s2144 + $0x10] sm:$0xff]
        %v2148 = vld [vmem:[%s2144 + $0x18] sm:$0xff]
        %v2149 = vrot.slane %v1707, 4
        %v2150 = vrot.slane %v1708, 4
        %v2151 = vsel %vm1054, %v2149, %v2150
        %v2152 = vrot.slane %v1709, 4
        %v2153 = vsel %vm1054, %v2150, %v2152
        %v2154 = vrot.slane %v1710, 4
        %v2155 = vsel %vm1054, %v2152, %v2154
        %v2156 = vsel %vm642, %v2151, 0
        %v2158 = vsel %vm642, %v2153, 0
        %v2160 = vsel %vm642, %v2155, 0
        %v2162 = vsel %vm642, %v2154, 0
        %2164 = vmatprep.subr.mxu0 0.0
        %2165 = vmatpush1.msra.mxu0 0.0
        %2166 = vmatprep.subr.mxu0 0.0
        %2167 = vmatpush1.msra.mxu0 0.0
        %2168 = vmatprep.subr.mxu0 0.0
        %2169 = vmatpush1.msra.mxu0 0.0
        %2170 = vmatprep.subr.mxu0 0.0
        %2171 = vmatpush1.msra.mxu0 0.0
        %2172 = vmatprep.subr.mxu0 0.0
        %2173 = vmatpush1.msra.mxu0 0.0
        %2174 = vmatprep.subr.mxu0 0.0
        %2175 = vmatpush1.msra.mxu0 0.0
        %2176 = vmatprep.subr.mxu0 0.0
        %2177 = vmatpush1.msra.mxu0 0.0
        %2178 = vmatprep.subr.mxu0 0.0
        %2179 = vmatpush1.msra.mxu0 0.0
        %2180 = vmatprep.subr.mxu0 0.0
        %2181 = vmatpush1.msra.mxu0 0.0
        %2182 = vmatprep.subr.mxu0 0.0
        %2183 = vmatpush1.msra.mxu0 0.0
        %2184 = vmatprep.subr.mxu0 0.0
        %2185 = vmatpush1.msra.mxu0 0.0
        %2186 = vmatprep.subr.mxu0 0.0
        %2187 = vmatpush1.msra.mxu0 0.0
        %2188 = vmatprep.subr.mxu0 0.0
        %2189 = vmatpush1.msra.mxu0 %v2148
        %2190 = vmatprep.subr.mxu0 0.0
        %2191 = vmatpush1.msra.mxu0 %v2147
        %2192 = vmatprep.subr.mxu0 0.0
        %2193 = vmatpush1.msra.mxu0 %v2146
        %2194 = vmatprep.subr.mxu0 0.0
        %2195 = vmatpush1.msra.mxu0 %v2145
        %2196 = vmatprep.subr.mxu0 0.0
        %2197 = vmatpush2.msra.mxu0 0.0
        %2198 = vmatprep.subr.mxu0 0.0
        %2199 = vmatpush2.msra.mxu0 0.0
        %2200 = vmatprep.subr.mxu0 0.0
        %2201 = vmatpush2.msra.mxu0 0.0
        %2202 = vmatprep.subr.mxu0 0.0
        %2203 = vmatpush2.msra.mxu0 0.0
        %2204 = vmatprep.subr.mxu0 0.0
        %2205 = vmatpush2.msra.mxu0 0.0
        %2206 = vmatprep.subr.mxu0 0.0
        %2207 = vmatpush2.msra.mxu0 0.0
        %2208 = vmatprep.subr.mxu0 0.0
        %2209 = vmatpush2.msra.mxu0 0.0
        %2210 = vmatprep.subr.mxu0 0.0
        %2211 = vmatpush2.msra.mxu0 0.0
        %2212 = vmatprep.subr.mxu0 0.0
        %2213 = vmatpush2.msra.mxu0 0.0
        %2214 = vmatprep.subr.mxu0 0.0
        %2215 = vmatpush2.msra.mxu0 0.0
        %2216 = vmatprep.subr.mxu0 0.0
        %2217 = vmatpush2.msra.mxu0 0.0
        %2218 = vmatprep.subr.mxu0 0.0
        %2219 = vmatpush2.msra.mxu0 0.0
        %2220 = vmatprep.subr.mxu0 0.0
        %2221 = vmatpush2.msra.mxu0 0.0
        %2222 = vmatprep.subr.mxu0 0.0
        %2223 = vmatpush2.msra.mxu0 0.0
        %2224 = vmatprep.subr.mxu0 0.0
        %2225 = vmatpush2.msra.mxu0 0.0
        %2226 = vmatprep.subr.mxu0 0.0
        %2227 = vmatpush2.msra.mxu0 0.0
        %2228 = vmatprep.mubr.f32.mxu0 0.0
        %2229 = vmatmul.mubr.f32.gmra.mxu0 %v2156
        %v2230 = vpop.f32.mrf.mxu0
        %v2231 = vadd.f32 0.0, %v2230
        %v2232 = vpop.f32.mrf.mxu0
        %2233 = vmatprep.mubr.f32.mxu0 0.0
        %2234 = vmatmul.mubr.f32.gmra.mxu0 %v2158
        %v2235 = vpop.f32.mrf.mxu0
        %v2236 = vadd.f32 0.0, %v2235
        %v2237 = vpop.f32.mrf.mxu0
        %2238 = vmatprep.mubr.f32.mxu0 0.0
        %2239 = vmatmul.mubr.f32.gmra.mxu0 %v2160
        %v2240 = vpop.f32.mrf.mxu0
        %v2241 = vadd.f32 0.0, %v2240
        %v2242 = vpop.f32.mrf.mxu0
        %2243 = vmatprep.mubr.f32.mxu0 0.0
        %2244 = vmatmul.mubr.f32.gmra.mxu0 %v2162
        %v2245 = vpop.f32.mrf.mxu0
        %v2246 = vadd.f32 0.0, %v2245
        %v2247 = vpop.f32.mrf.mxu0
        %2248 = vdwg.mxu0
        %v2249 = vadd.f32 %v2140, %v2231
        %v2250 = vadd.f32 %v2141, %v2236
        %v2251 = vadd.f32 %v2142, %v2241
        %v2252 = vadd.f32 %v2143, %v2246
        %v2253 = vld [vmem:[%s2] sm:$0x1]
        %v2255 = vlaneseq
        %v2256 = vshrl.u32 %v2255, 7
        %v2257 = vsub.s32 0, %v2256
        %v2258 = vrot.slane %v2253, %v2257
        %v2260 = vadd.f32 %v2249, %v2258
        %v2261 = vadd.f32 %v2250, %v2258
        %v2262 = vadd.f32 %v2251, %v2258
        %v2263 = vadd.f32 %v2252, %v2258
        %v2264 = vld [vmem:[%s3] sm:$0xff]
        %v2265 = vld [vmem:[%s3 + $0x8] sm:$0xff]
        %v2266 = vld [vmem:[%s3 + $0x10] sm:$0xff]
        %v2267 = vld [vmem:[%s3 + $0x18] sm:$0xff]
        %v2268 = vld [vmem:[%s3 + $0x20] sm:$0xff]
        %v2269 = vld [vmem:[%s3 + $0x28] sm:$0xff]
        %v2270 = vld [vmem:[%s3 + $0x30] sm:$0xff]
        %v2271 = vld [vmem:[%s3 + $0x38] sm:$0xff]
        %v2272 = vld [vmem:[%s3 + $0x40] sm:$0xff]
        %v2273 = vld [vmem:[%s3 + $0x48] sm:$0xff]
        %v2274 = vld [vmem:[%s3 + $0x50] sm:$0xff]
        %v2275 = vld [vmem:[%s3 + $0x58] sm:$0xff]
        %v2276 = vld [vmem:[%s3 + $0x60] sm:$0xff]
        %v2277 = vld [vmem:[%s3 + $0x68] sm:$0xff]
        %vm2278 = vcmask 916480
        %v2280 = vsel %vm2278, %v2260, 0
        %v2283 = vsel %vm2278, %v2261, 0
        %v2286 = vsel %vm2278, %v2262, 0
        %v2289 = vsel %vm2278, %v2263, 0
        %2291 = vmatprep.subr.mxu0 0.0
        %2292 = vmatpush1.msra.mxu0 0.0
        %2293 = vmatprep.subr.mxu0 0.0
        %2294 = vmatpush1.msra.mxu0 0.0
        %2295 = vmatprep.subr.mxu0 0.0
        %2296 = vmatpush1.msra.mxu0 %v2277
        %2297 = vmatprep.subr.mxu0 0.0
        %2298 = vmatpush1.msra.mxu0 %v2276
        %2299 = vmatprep.subr.mxu0 0.0
        %2300 = vmatpush1.msra.mxu0 %v2275
        %2301 = vmatprep.subr.mxu0 0.0
        %2302 = vmatpush1.msra.mxu0 %v2274
        %2303 = vmatprep.subr.mxu0 0.0
        %2304 = vmatpush1.msra.mxu0 %v2273
        %2305 = vmatprep.subr.mxu0 0.0
        %2306 = vmatpush1.msra.mxu0 %v2272
        %2307 = vmatprep.subr.mxu0 0.0
        %2308 = vmatpush1.msra.mxu0 %v2271
        %2309 = vmatprep.subr.mxu0 0.0
        %2310 = vmatpush1.msra.mxu0 %v2270
        %2311 = vmatprep.subr.mxu0 0.0
        %2312 = vmatpush1.msra.mxu0 %v2269
        %2313 = vmatprep.subr.mxu0 0.0
        %2314 = vmatpush1.msra.mxu0 %v2268
        %2315 = vmatprep.subr.mxu0 0.0
        %2316 = vmatpush1.msra.mxu0 %v2267
        %2317 = vmatprep.subr.mxu0 0.0
        %2318 = vmatpush1.msra.mxu0 %v2266
        %2319 = vmatprep.subr.mxu0 0.0
        %2320 = vmatpush1.msra.mxu0 %v2265
        %2321 = vmatprep.subr.mxu0 0.0
        %2322 = vmatpush1.msra.mxu0 %v2264
        %2323 = vmatprep.subr.mxu0 0.0
        %2324 = vmatpush2.msra.mxu0 0.0
        %2325 = vmatprep.subr.mxu0 0.0
        %2326 = vmatpush2.msra.mxu0 0.0
        %2327 = vmatprep.subr.mxu0 0.0
        %2328 = vmatpush2.msra.mxu0 0.0
        %2329 = vmatprep.subr.mxu0 0.0
        %2330 = vmatpush2.msra.mxu0 0.0
        %2331 = vmatprep.subr.mxu0 0.0
        %2332 = vmatpush2.msra.mxu0 0.0
        %2333 = vmatprep.subr.mxu0 0.0
        %2334 = vmatpush2.msra.mxu0 0.0
        %2335 = vmatprep.subr.mxu0 0.0
        %2336 = vmatpush2.msra.mxu0 0.0
        %2337 = vmatprep.subr.mxu0 0.0
        %2338 = vmatpush2.msra.mxu0 0.0
        %2339 = vmatprep.subr.mxu0 0.0
        %2340 = vmatpush2.msra.mxu0 0.0
        %2341 = vmatprep.subr.mxu0 0.0
        %2342 = vmatpush2.msra.mxu0 0.0
        %2343 = vmatprep.subr.mxu0 0.0
        %2344 = vmatpush2.msra.mxu0 0.0
        %2345 = vmatprep.subr.mxu0 0.0
        %2346 = vmatpush2.msra.mxu0 0.0
        %2347 = vmatprep.subr.mxu0 0.0
        %2348 = vmatpush2.msra.mxu0 0.0
        %2349 = vmatprep.subr.mxu0 0.0
        %2350 = vmatpush2.msra.mxu0 0.0
        %2351 = vmatprep.subr.mxu0 0.0
        %2352 = vmatpush2.msra.mxu0 0.0
        %2353 = vmatprep.subr.mxu0 0.0
        %2354 = vmatpush2.msra.mxu0 0.0
        %2355 = vmatprep.mubr.f32.mxu0 0.0
        %2356 = vmatmul.mubr.f32.gmra.mxu0 %v2280
        %v2357 = vpop.f32.mrf.mxu0
        %v2358 = vadd.f32 0.0, %v2357
        %v2359 = vpop.f32.mrf.mxu0
        %2360 = vmatprep.mubr.f32.mxu0 0.0
        %2361 = vmatmul.mubr.f32.gmra.mxu0 %v2283
        %v2362 = vpop.f32.mrf.mxu0
        %v2363 = vadd.f32 0.0, %v2362
        %v2364 = vpop.f32.mrf.mxu0
        %2365 = vmatprep.mubr.f32.mxu0 0.0
        %2366 = vmatmul.mubr.f32.gmra.mxu0 %v2286
        %v2367 = vpop.f32.mrf.mxu0
        %v2368 = vadd.f32 0.0, %v2367
        %v2369 = vpop.f32.mrf.mxu0
        %2370 = vmatprep.mubr.f32.mxu0 0.0
        %2371 = vmatmul.mubr.f32.gmra.mxu0 %v2289
        %v2372 = vpop.f32.mrf.mxu0
        %v2373 = vadd.f32 0.0, %v2372
        %v2374 = vpop.f32.mrf.mxu0
        %2375 = vdwg.mxu0
        %v2376 = vld [vmem:[%s4] sm:$0xff]
        %v2377 = vld [vmem:[%s4 + $0x8] sm:$0xff]
        %v2378 = vld [vmem:[%s4 + $0x10] sm:$0xff]
        %v2379 = vld [vmem:[%s4 + $0x18] sm:$0xff]
        %v2380 = vld [vmem:[%s4 + $0x20] sm:$0xff]
        %v2381 = vld [vmem:[%s4 + $0x28] sm:$0xff]
        %v2382 = vld [vmem:[%s4 + $0x30] sm:$0xff]
        %v2383 = vld [vmem:[%s4 + $0x38] sm:$0xff]
        %v2384 = vld [vmem:[%s4 + $0x40] sm:$0xff]
        %v2385 = vld [vmem:[%s4 + $0x48] sm:$0xff]
        %v2386 = vld [vmem:[%s4 + $0x50] sm:$0xff]
        %v2387 = vld [vmem:[%s4 + $0x58] sm:$0xff]
        %v2388 = vld [vmem:[%s4 + $0x60] sm:$0xff]
        %v2389 = vld [vmem:[%s4 + $0x68] sm:$0xff]
        %2390 = vmatprep.subr.mxu0 0.0
        %2391 = vmatpush1.msra.mxu0 0.0
        %2392 = vmatprep.subr.mxu0 0.0
        %2393 = vmatpush1.msra.mxu0 0.0
        %2394 = vmatprep.subr.mxu0 0.0
        %2395 = vmatpush1.msra.mxu0 %v2389
        %2396 = vmatprep.subr.mxu0 0.0
        %2397 = vmatpush1.msra.mxu0 %v2388
        %2398 = vmatprep.subr.mxu0 0.0
        %2399 = vmatpush1.msra.mxu0 %v2387
        %2400 = vmatprep.subr.mxu0 0.0
        %2401 = vmatpush1.msra.mxu0 %v2386
        %2402 = vmatprep.subr.mxu0 0.0
        %2403 = vmatpush1.msra.mxu0 %v2385
        %2404 = vmatprep.subr.mxu0 0.0
        %2405 = vmatpush1.msra.mxu0 %v2384
        %2406 = vmatprep.subr.mxu0 0.0
        %2407 = vmatpush1.msra.mxu0 %v2383
        %2408 = vmatprep.subr.mxu0 0.0
        %2409 = vmatpush1.msra.mxu0 %v2382
        %2410 = vmatprep.subr.mxu0 0.0
        %2411 = vmatpush1.msra.mxu0 %v2381
        %2412 = vmatprep.subr.mxu0 0.0
        %2413 = vmatpush1.msra.mxu0 %v2380
        %2414 = vmatprep.subr.mxu0 0.0
        %2415 = vmatpush1.msra.mxu0 %v2379
        %2416 = vmatprep.subr.mxu0 0.0
        %2417 = vmatpush1.msra.mxu0 %v2378
        %2418 = vmatprep.subr.mxu0 0.0
        %2419 = vmatpush1.msra.mxu0 %v2377
        %2420 = vmatprep.subr.mxu0 0.0
        %2421 = vmatpush1.msra.mxu0 %v2376
        %2422 = vmatprep.subr.mxu0 0.0
        %2423 = vmatpush2.msra.mxu0 0.0
        %2424 = vmatprep.subr.mxu0 0.0
        %2425 = vmatpush2.msra.mxu0 0.0
        %2426 = vmatprep.subr.mxu0 0.0
        %2427 = vmatpush2.msra.mxu0 0.0
        %2428 = vmatprep.subr.mxu0 0.0
        %2429 = vmatpush2.msra.mxu0 0.0
        %2430 = vmatprep.subr.mxu0 0.0
        %2431 = vmatpush2.msra.mxu0 0.0
        %2432 = vmatprep.subr.mxu0 0.0
        %2433 = vmatpush2.msra.mxu0 0.0
        %2434 = vmatprep.subr.mxu0 0.0
        %2435 = vmatpush2.msra.mxu0 0.0
        %2436 = vmatprep.subr.mxu0 0.0
        %2437 = vmatpush2.msra.mxu0 0.0
        %2438 = vmatprep.subr.mxu0 0.0
        %2439 = vmatpush2.msra.mxu0 0.0
        %2440 = vmatprep.subr.mxu0 0.0
        %2441 = vmatpush2.msra.mxu0 0.0
        %2442 = vmatprep.subr.mxu0 0.0
        %2443 = vmatpush2.msra.mxu0 0.0
        %2444 = vmatprep.subr.mxu0 0.0
        %2445 = vmatpush2.msra.mxu0 0.0
        %2446 = vmatprep.subr.mxu0 0.0
        %2447 = vmatpush2.msra.mxu0 0.0
        %2448 = vmatprep.subr.mxu0 0.0
        %2449 = vmatpush2.msra.mxu0 0.0
        %2450 = vmatprep.subr.mxu0 0.0
        %2451 = vmatpush2.msra.mxu0 0.0
        %2452 = vmatprep.subr.mxu0 0.0
        %2453 = vmatpush2.msra.mxu0 0.0
        %2454 = vmatprep.mubr.f32.mxu0 0.0
        %2455 = vmatmul.mubr.f32.gmra.mxu0 %v2280
        %v2456 = vpop.f32.mrf.mxu0
        %v2457 = vadd.f32 0.0, %v2456
        %v2458 = vpop.f32.mrf.mxu0
        %2459 = vmatprep.mubr.f32.mxu0 0.0
        %2460 = vmatmul.mubr.f32.gmra.mxu0 %v2283
        %v2461 = vpop.f32.mrf.mxu0
        %v2462 = vadd.f32 0.0, %v2461
        %v2463 = vpop.f32.mrf.mxu0
        %2464 = vmatprep.mubr.f32.mxu0 0.0
        %2465 = vmatmul.mubr.f32.gmra.mxu0 %v2286
        %v2466 = vpop.f32.mrf.mxu0
        %v2467 = vadd.f32 0.0, %v2466
        %v2468 = vpop.f32.mrf.mxu0
        %2469 = vmatprep.mubr.f32.mxu0 0.0
        %2470 = vmatmul.mubr.f32.gmra.mxu0 %v2289
        %v2471 = vpop.f32.mrf.mxu0
        %v2472 = vadd.f32 0.0, %v2471
        %v2473 = vpop.f32.mrf.mxu0
        %2474 = vdwg.mxu0
        %v2475 = vmax.f32 %v2358, %v2457
        %v2476 = vmax.f32 %v2363, %v2462
        %v2477 = vmax.f32 %v2368, %v2467
        %v2478 = vmax.f32 %v2373, %v2472
        %v2479 = vld [vmem:[#allocation2] sm:$0xff]
        %v2480 = vld [vmem:[#allocation2 + $0x8] sm:$0x3f]
        %vm2481 = vcmask 228352
        %v2483 = vsel %vm2481, %v2479, 0
        %v2486 = vsel %vm2481, %v2480, 0
        %v2489 = vsel %vm1054, %v2478, 0
        %2491 = vmatprep.subr.mxu0 0.0
        %2492 = vmatpush1.msra.mxu0 0.0
        %2493 = vmatprep.subr.mxu0 0.0
        %2494 = vmatpush1.msra.mxu0 0.0
        %2495 = vmatprep.subr.mxu0 0.0
        %2496 = vmatpush1.msra.mxu0 0.0
        %2497 = vmatprep.subr.mxu0 0.0
        %2498 = vmatpush1.msra.mxu0 0.0
        %2499 = vmatprep.subr.mxu0 0.0
        %2500 = vmatpush1.msra.mxu0 0.0
        %2501 = vmatprep.subr.mxu0 0.0
        %2502 = vmatpush1.msra.mxu0 0.0
        %2503 = vmatprep.subr.mxu0 0.0
        %2504 = vmatpush1.msra.mxu0 0.0
        %2505 = vmatprep.subr.mxu0 0.0
        %2506 = vmatpush1.msra.mxu0 0.0
        %2507 = vmatprep.subr.mxu0 0.0
        %2508 = vmatpush1.msra.mxu0 0.0
        %2509 = vmatprep.subr.mxu0 0.0
        %2510 = vmatpush1.msra.mxu0 0.0
        %2511 = vmatprep.subr.mxu0 0.0
        %2512 = vmatpush1.msra.mxu0 0.0
        %2513 = vmatprep.subr.mxu0 0.0
        %2514 = vmatpush1.msra.mxu0 0.0
        %2515 = vmatprep.subr.mxu0 0.0
        %2516 = vmatpush1.msra.mxu0 %v2489
        %2517 = vmatprep.subr.mxu0 0.0
        %2518 = vmatpush1.msra.mxu0 %v2477
        %2519 = vmatprep.subr.mxu0 0.0
        %2520 = vmatpush1.msra.mxu0 %v2476
        %2521 = vmatprep.subr.mxu0 0.0
        %2522 = vmatpush1.msra.mxu0 %v2475
        %2523 = vmatprep.subr.mxu0 0.0
        %2524 = vmatpush2.msra.mxu0 0.0
        %2525 = vmatprep.subr.mxu0 0.0
        %2526 = vmatpush2.msra.mxu0 0.0
        %2527 = vmatprep.subr.mxu0 0.0
        %2528 = vmatpush2.msra.mxu0 0.0
        %2529 = vmatprep.subr.mxu0 0.0
        %2530 = vmatpush2.msra.mxu0 0.0
        %2531 = vmatprep.subr.mxu0 0.0
        %2532 = vmatpush2.msra.mxu0 0.0
        %2533 = vmatprep.subr.mxu0 0.0
        %2534 = vmatpush2.msra.mxu0 0.0
        %2535 = vmatprep.subr.mxu0 0.0
        %2536 = vmatpush2.msra.mxu0 0.0
        %2537 = vmatprep.subr.mxu0 0.0
        %2538 = vmatpush2.msra.mxu0 0.0
        %2539 = vmatprep.subr.mxu0 0.0
        %2540 = vmatpush2.msra.mxu0 0.0
        %2541 = vmatprep.subr.mxu0 0.0
        %2542 = vmatpush2.msra.mxu0 0.0
        %2543 = vmatprep.subr.mxu0 0.0
        %2544 = vmatpush2.msra.mxu0 0.0
        %2545 = vmatprep.subr.mxu0 0.0
        %2546 = vmatpush2.msra.mxu0 0.0
        %2547 = vmatprep.subr.mxu0 0.0
        %2548 = vmatpush2.msra.mxu0 0.0
        %2549 = vmatprep.subr.mxu0 0.0
        %2550 = vmatpush2.msra.mxu0 0.0
        %2551 = vmatprep.subr.mxu0 0.0
        %2552 = vmatpush2.msra.mxu0 0.0
        %2553 = vmatprep.subr.mxu0 0.0
        %2554 = vmatpush2.msra.mxu0 0.0
        %2555 = vmatprep.mubr.f32.mxu0 0.0
        %2556 = vmatmul.mubr.f32.gmra.mxu0 %v2483
        %v2557 = vpop.f32.mrf.mxu0
        %v2558 = vadd.f32 0.0, %v2557
        %v2559 = vpop.f32.mrf.mxu0
        %2560 = vmatprep.mubr.f32.mxu0 0.0
        %2561 = vmatmul.mubr.f32.gmra.mxu0 %v2486
        %v2562 = vpop.f32.mrf.mxu0
        %v2563 = vadd.f32 0.0, %v2562
        %v2564 = vpop.f32.mrf.mxu0
        %2565 = vdwg.mxu0
        %v2566 = vld [vmem:[#allocation5] sm:$0xff]
        %v2567 = vld [vmem:[#allocation5 + $0x8] sm:$0x3f]
        %v2569 = vsel %vm2481, %v2566, 0
        %v2572 = vsel %vm2481, %v2567, 0
        %2574 = vmatprep.subr.mxu0 0.0
        %2575 = vmatpush1.msra.mxu0 0.0
        %2576 = vmatprep.subr.mxu0 0.0
        %2577 = vmatpush1.msra.mxu0 0.0
        %2578 = vmatprep.subr.mxu0 0.0
        %2579 = vmatpush1.msra.mxu0 0.0
        %2580 = vmatprep.subr.mxu0 0.0
        %2581 = vmatpush1.msra.mxu0 0.0
        %2582 = vmatprep.subr.mxu0 0.0
        %2583 = vmatpush1.msra.mxu0 0.0
        %2584 = vmatprep.subr.mxu0 0.0
        %2585 = vmatpush1.msra.mxu0 0.0
        %2586 = vmatprep.subr.mxu0 0.0
        %2587 = vmatpush1.msra.mxu0 0.0
        %2588 = vmatprep.subr.mxu0 0.0
        %2589 = vmatpush1.msra.mxu0 0.0
        %2590 = vmatprep.subr.mxu0 0.0
        %2591 = vmatpush1.msra.mxu0 0.0
        %2592 = vmatprep.subr.mxu0 0.0
        %2593 = vmatpush1.msra.mxu0 0.0
        %2594 = vmatprep.subr.mxu0 0.0
        %2595 = vmatpush1.msra.mxu0 0.0
        %2596 = vmatprep.subr.mxu0 0.0
        %2597 = vmatpush1.msra.mxu0 0.0
        %2598 = vmatprep.subr.mxu0 0.0
        %2599 = vmatpush1.msra.mxu0 %v2489
        %2600 = vmatprep.subr.mxu0 0.0
        %2601 = vmatpush1.msra.mxu0 %v2477
        %2602 = vmatprep.subr.mxu0 0.0
        %2603 = vmatpush1.msra.mxu0 %v2476
        %2604 = vmatprep.subr.mxu0 0.0
        %2605 = vmatpush1.msra.mxu0 %v2475
        %2606 = vmatprep.subr.mxu0 0.0
        %2607 = vmatpush2.msra.mxu0 0.0
        %2608 = vmatprep.subr.mxu0 0.0
        %2609 = vmatpush2.msra.mxu0 0.0
        %2610 = vmatprep.subr.mxu0 0.0
        %2611 = vmatpush2.msra.mxu0 0.0
        %2612 = vmatprep.subr.mxu0 0.0
        %2613 = vmatpush2.msra.mxu0 0.0
        %2614 = vmatprep.subr.mxu0 0.0
        %2615 = vmatpush2.msra.mxu0 0.0
        %2616 = vmatprep.subr.mxu0 0.0
        %2617 = vmatpush2.msra.mxu0 0.0
        %2618 = vmatprep.subr.mxu0 0.0
        %2619 = vmatpush2.msra.mxu0 0.0
        %2620 = vmatprep.subr.mxu0 0.0
        %2621 = vmatpush2.msra.mxu0 0.0
        %2622 = vmatprep.subr.mxu0 0.0
        %2623 = vmatpush2.msra.mxu0 0.0
        %2624 = vmatprep.subr.mxu0 0.0
        %2625 = vmatpush2.msra.mxu0 0.0
        %2626 = vmatprep.subr.mxu0 0.0
        %2627 = vmatpush2.msra.mxu0 0.0
        %2628 = vmatprep.subr.mxu0 0.0
        %2629 = vmatpush2.msra.mxu0 0.0
        %2630 = vmatprep.subr.mxu0 0.0
        %2631 = vmatpush2.msra.mxu0 0.0
        %2632 = vmatprep.subr.mxu0 0.0
        %2633 = vmatpush2.msra.mxu0 0.0
        %2634 = vmatprep.subr.mxu0 0.0
        %2635 = vmatpush2.msra.mxu0 0.0
        %2636 = vmatprep.subr.mxu0 0.0
        %2637 = vmatpush2.msra.mxu0 0.0
        %2638 = vmatprep.mubr.f32.mxu0 0.0
        %2639 = vmatmul.mubr.f32.gmra.mxu0 %v2569
        %v2640 = vpop.f32.mrf.mxu0
        %v2641 = vadd.f32 0.0, %v2640
        %v2642 = vpop.f32.mrf.mxu0
        %2643 = vmatprep.mubr.f32.mxu0 0.0
        %2644 = vmatmul.mubr.f32.gmra.mxu0 %v2572
        %v2645 = vpop.f32.mrf.mxu0
        %v2646 = vadd.f32 0.0, %v2645
        %v2647 = vpop.f32.mrf.mxu0
        %2648 = vdwg.mxu0
        %v2649 = vmax.f32 %v2558, %v2641
        %v2650 = vmax.f32 %v2563, %v2646
        %v2651 = vmax.f32 %v2649, 0.0
        %v2652 = vmax.f32 %v2650, 0.0
        %v2653 = vld [vmem:[%s7] sm:$0xff]
        %v2654 = vld [vmem:[%s7 + $0x8] sm:$0xff]
        %v2655 = vld [vmem:[%s7 + $0x10] sm:$0xff]
        %v2656 = vld [vmem:[%s7 + $0x18] sm:$0xff]
        %v2657 = vld [vmem:[%s7 + $0x20] sm:$0xff]
        %v2658 = vld [vmem:[%s7 + $0x28] sm:$0xff]
        %v2659 = vld [vmem:[%s7 + $0x30] sm:$0xff]
        %s2660 = scalar_lea.vmem %s7, 56
        %v2661 = vld [vmem:[%s2660] sm:$0xff]
        %v2662 = vld [vmem:[%s2660 + $0x8] sm:$0xff]
        %v2663 = vld [vmem:[%s2660 + $0x10] sm:$0xff]
        %v2664 = vld [vmem:[%s2660 + $0x18] sm:$0xff]
        %v2665 = vld [vmem:[%s2660 + $0x20] sm:$0xff]
        %v2666 = vld [vmem:[%s2660 + $0x28] sm:$0xff]
        %v2667 = vld [vmem:[%s2660 + $0x30] sm:$0xff]
        %v2670 = vrot.slane %v2651, 1
        %v2671 = vrot.slane %v2652, 1
        %v2672 = vsel %vm634, %v2670, %v2671
        %vm2673 = vcmask 457728
        %v2674 = vsel %vm2673, %v2672, 0
        %v2676 = vsel %vm2673, %v2671, 0
        %2678 = vmatprep.subr.mxu0 0.0
        %2679 = vmatpush1.msra.mxu0 0.0
        %2680 = vmatprep.subr.mxu0 0.0
        %2681 = vmatpush1.msra.mxu0 0.0
        %2682 = vmatprep.subr.mxu0 0.0
        %2683 = vmatpush1.msra.mxu0 0.0
        %2684 = vmatprep.subr.mxu0 0.0
        %2685 = vmatpush1.msra.mxu0 0.0
        %2686 = vmatprep.subr.mxu0 0.0
        %2687 = vmatpush1.msra.mxu0 0.0
        %2688 = vmatprep.subr.mxu0 0.0
        %2689 = vmatpush1.msra.mxu0 0.0
        %2690 = vmatprep.subr.mxu0 0.0
        %2691 = vmatpush1.msra.mxu0 0.0
        %2692 = vmatprep.subr.mxu0 0.0
        %2693 = vmatpush1.msra.mxu0 0.0
        %2694 = vmatprep.subr.mxu0 0.0
        %2695 = vmatpush1.msra.mxu0 0.0
        %2696 = vmatprep.subr.mxu0 0.0
        %2697 = vmatpush1.msra.mxu0 %v2667
        %2698 = vmatprep.subr.mxu0 0.0
        %2699 = vmatpush1.msra.mxu0 %v2666
        %2700 = vmatprep.subr.mxu0 0.0
        %2701 = vmatpush1.msra.mxu0 %v2665
        %2702 = vmatprep.subr.mxu0 0.0
        %2703 = vmatpush1.msra.mxu0 %v2664
        %2704 = vmatprep.subr.mxu0 0.0
        %2705 = vmatpush1.msra.mxu0 %v2663
        %2706 = vmatprep.subr.mxu0 0.0
        %2707 = vmatpush1.msra.mxu0 %v2662
        %2708 = vmatprep.subr.mxu0 0.0
        %2709 = vmatpush1.msra.mxu0 %v2661
        %2710 = vmatprep.subr.mxu0 0.0
        %2711 = vmatpush2.msra.mxu0 0.0
        %2712 = vmatprep.subr.mxu0 0.0
        %2713 = vmatpush2.msra.mxu0 0.0
        %2714 = vmatprep.subr.mxu0 0.0
        %2715 = vmatpush2.msra.mxu0 0.0
        %2716 = vmatprep.subr.mxu0 0.0
        %2717 = vmatpush2.msra.mxu0 0.0
        %2718 = vmatprep.subr.mxu0 0.0
        %2719 = vmatpush2.msra.mxu0 0.0
        %2720 = vmatprep.subr.mxu0 0.0
        %2721 = vmatpush2.msra.mxu0 0.0
        %2722 = vmatprep.subr.mxu0 0.0
        %2723 = vmatpush2.msra.mxu0 0.0
        %2724 = vmatprep.subr.mxu0 0.0
        %2725 = vmatpush2.msra.mxu0 0.0
        %2726 = vmatprep.subr.mxu0 0.0
        %2727 = vmatpush2.msra.mxu0 0.0
        %2728 = vmatprep.subr.mxu0 0.0
        %2729 = vmatpush2.msra.mxu0 0.0
        %2730 = vmatprep.subr.mxu0 0.0
        %2731 = vmatpush2.msra.mxu0 0.0
        %2732 = vmatprep.subr.mxu0 0.0
        %2733 = vmatpush2.msra.mxu0 0.0
        %2734 = vmatprep.subr.mxu0 0.0
        %2735 = vmatpush2.msra.mxu0 0.0
        %2736 = vmatprep.subr.mxu0 0.0
        %2737 = vmatpush2.msra.mxu0 0.0
        %2738 = vmatprep.subr.mxu0 0.0
        %2739 = vmatpush2.msra.mxu0 0.0
        %2740 = vmatprep.subr.mxu0 0.0
        %2741 = vmatpush2.msra.mxu0 0.0
        %2742 = vmatprep.mubr.f32.mxu0 0.0
        %2743 = vmatmul.mubr.f32.gmra.mxu0 %v2674
        %v2744 = vpop.f32.mrf.mxu0
        %v2745 = vadd.f32 0.0, %v2744
        %v2746 = vpop.f32.mrf.mxu0
        %2747 = vmatprep.mubr.f32.mxu0 0.0
        %2748 = vmatmul.mubr.f32.gmra.mxu0 %v2676
        %v2749 = vpop.f32.mrf.mxu0
        %v2750 = vadd.f32 0.0, %v2749
        %v2751 = vpop.f32.mrf.mxu0
        %2752 = vdwg.mxu0
        %v2753 = vsel %vm2673, %v2651, 0
        %v2755 = vsel %vm2673, %v2652, 0
        %2757 = vmatprep.subr.mxu0 0.0
        %2758 = vmatpush1.msra.mxu0 0.0
        %2759 = vmatprep.subr.mxu0 0.0
        %2760 = vmatpush1.msra.mxu0 0.0
        %2761 = vmatprep.subr.mxu0 0.0
        %2762 = vmatpush1.msra.mxu0 0.0
        %2763 = vmatprep.subr.mxu0 0.0
        %2764 = vmatpush1.msra.mxu0 0.0
        %2765 = vmatprep.subr.mxu0 0.0
        %2766 = vmatpush1.msra.mxu0 0.0
        %2767 = vmatprep.subr.mxu0 0.0
        %2768 = vmatpush1.msra.mxu0 0.0
        %2769 = vmatprep.subr.mxu0 0.0
        %2770 = vmatpush1.msra.mxu0 0.0
        %2771 = vmatprep.subr.mxu0 0.0
        %2772 = vmatpush1.msra.mxu0 0.0
        %2773 = vmatprep.subr.mxu0 0.0
        %2774 = vmatpush1.msra.mxu0 0.0
        %2775 = vmatprep.subr.mxu0 0.0
        %2776 = vmatpush1.msra.mxu0 %v2659
        %2777 = vmatprep.subr.mxu0 0.0
        %2778 = vmatpush1.msra.mxu0 %v2658
        %2779 = vmatprep.subr.mxu0 0.0
        %2780 = vmatpush1.msra.mxu0 %v2657
        %2781 = vmatprep.subr.mxu0 0.0
        %2782 = vmatpush1.msra.mxu0 %v2656
        %2783 = vmatprep.subr.mxu0 0.0
        %2784 = vmatpush1.msra.mxu0 %v2655
        %2785 = vmatprep.subr.mxu0 0.0
        %2786 = vmatpush1.msra.mxu0 %v2654
        %2787 = vmatprep.subr.mxu0 0.0
        %2788 = vmatpush1.msra.mxu0 %v2653
        %2789 = vmatprep.subr.mxu0 0.0
        %2790 = vmatpush2.msra.mxu0 0.0
        %2791 = vmatprep.subr.mxu0 0.0
        %2792 = vmatpush2.msra.mxu0 0.0
        %2793 = vmatprep.subr.mxu0 0.0
        %2794 = vmatpush2.msra.mxu0 0.0
        %2795 = vmatprep.subr.mxu0 0.0
        %2796 = vmatpush2.msra.mxu0 0.0
        %2797 = vmatprep.subr.mxu0 0.0
        %2798 = vmatpush2.msra.mxu0 0.0
        %2799 = vmatprep.subr.mxu0 0.0
        %2800 = vmatpush2.msra.mxu0 0.0
        %2801 = vmatprep.subr.mxu0 0.0
        %2802 = vmatpush2.msra.mxu0 0.0
        %2803 = vmatprep.subr.mxu0 0.0
        %2804 = vmatpush2.msra.mxu0 0.0
        %2805 = vmatprep.subr.mxu0 0.0
        %2806 = vmatpush2.msra.mxu0 0.0
        %2807 = vmatprep.subr.mxu0 0.0
        %2808 = vmatpush2.msra.mxu0 0.0
        %2809 = vmatprep.subr.mxu0 0.0
        %2810 = vmatpush2.msra.mxu0 0.0
        %2811 = vmatprep.subr.mxu0 0.0
        %2812 = vmatpush2.msra.mxu0 0.0
        %2813 = vmatprep.subr.mxu0 0.0
        %2814 = vmatpush2.msra.mxu0 0.0
        %2815 = vmatprep.subr.mxu0 0.0
        %2816 = vmatpush2.msra.mxu0 0.0
        %2817 = vmatprep.subr.mxu0 0.0
        %2818 = vmatpush2.msra.mxu0 0.0
        %2819 = vmatprep.subr.mxu0 0.0
        %2820 = vmatpush2.msra.mxu0 0.0
        %2821 = vmatprep.mubr.f32.mxu0 0.0
        %2822 = vmatmul.mubr.f32.gmra.mxu0 %v2753
        %v2823 = vpop.f32.mrf.mxu0
        %v2824 = vadd.f32 %v2745, %v2823
        %v2825 = vpop.f32.mrf.mxu0
        %2826 = vmatprep.mubr.f32.mxu0 0.0
        %2827 = vmatmul.mubr.f32.gmra.mxu0 %v2755
        %v2828 = vpop.f32.mrf.mxu0
        %v2829 = vadd.f32 %v2750, %v2828
        %v2830 = vpop.f32.mrf.mxu0
        %2831 = vdwg.mxu0
        %s2832 = scalar_lea.vmem %s7, 112
        %v2833 = vld [vmem:[%s2832] sm:$0xff]
        %v2834 = vld [vmem:[%s2832 + $0x8] sm:$0xff]
        %v2835 = vld [vmem:[%s2832 + $0x10] sm:$0xff]
        %v2836 = vld [vmem:[%s2832 + $0x18] sm:$0xff]
        %v2837 = vld [vmem:[%s2832 + $0x20] sm:$0xff]
        %v2838 = vld [vmem:[%s2832 + $0x28] sm:$0xff]
        %v2839 = vld [vmem:[%s2832 + $0x30] sm:$0xff]
        %v2840 = vrot.slane %v2651, 2
        %v2841 = vrot.slane %v2652, 2
        %v2842 = vsel %vm834, %v2840, %v2841
        %v2843 = vsel %vm2673, %v2842, 0
        %v2845 = vsel %vm2673, %v2841, 0
        %2847 = vmatprep.subr.mxu0 0.0
        %2848 = vmatpush1.msra.mxu0 0.0
        %2849 = vmatprep.subr.mxu0 0.0
        %2850 = vmatpush1.msra.mxu0 0.0
        %2851 = vmatprep.subr.mxu0 0.0
        %2852 = vmatpush1.msra.mxu0 0.0
        %2853 = vmatprep.subr.mxu0 0.0
        %2854 = vmatpush1.msra.mxu0 0.0
        %2855 = vmatprep.subr.mxu0 0.0
        %2856 = vmatpush1.msra.mxu0 0.0
        %2857 = vmatprep.subr.mxu0 0.0
        %2858 = vmatpush1.msra.mxu0 0.0
        %2859 = vmatprep.subr.mxu0 0.0
        %2860 = vmatpush1.msra.mxu0 0.0
        %2861 = vmatprep.subr.mxu0 0.0
        %2862 = vmatpush1.msra.mxu0 0.0
        %2863 = vmatprep.subr.mxu0 0.0
        %2864 = vmatpush1.msra.mxu0 0.0
        %2865 = vmatprep.subr.mxu0 0.0
        %2866 = vmatpush1.msra.mxu0 %v2839
        %2867 = vmatprep.subr.mxu0 0.0
        %2868 = vmatpush1.msra.mxu0 %v2838
        %2869 = vmatprep.subr.mxu0 0.0
        %2870 = vmatpush1.msra.mxu0 %v2837
        %2871 = vmatprep.subr.mxu0 0.0
        %2872 = vmatpush1.msra.mxu0 %v2836
        %2873 = vmatprep.subr.mxu0 0.0
        %2874 = vmatpush1.msra.mxu0 %v2835
        %2875 = vmatprep.subr.mxu0 0.0
        %2876 = vmatpush1.msra.mxu0 %v2834
        %2877 = vmatprep.subr.mxu0 0.0
        %2878 = vmatpush1.msra.mxu0 %v2833
        %2879 = vmatprep.subr.mxu0 0.0
        %2880 = vmatpush2.msra.mxu0 0.0
        %2881 = vmatprep.subr.mxu0 0.0
        %2882 = vmatpush2.msra.mxu0 0.0
        %2883 = vmatprep.subr.mxu0 0.0
        %2884 = vmatpush2.msra.mxu0 0.0
        %2885 = vmatprep.subr.mxu0 0.0
        %2886 = vmatpush2.msra.mxu0 0.0
        %2887 = vmatprep.subr.mxu0 0.0
        %2888 = vmatpush2.msra.mxu0 0.0
        %2889 = vmatprep.subr.mxu0 0.0
        %2890 = vmatpush2.msra.mxu0 0.0
        %2891 = vmatprep.subr.mxu0 0.0
        %2892 = vmatpush2.msra.mxu0 0.0
        %2893 = vmatprep.subr.mxu0 0.0
        %2894 = vmatpush2.msra.mxu0 0.0
        %2895 = vmatprep.subr.mxu0 0.0
        %2896 = vmatpush2.msra.mxu0 0.0
        %2897 = vmatprep.subr.mxu0 0.0
        %2898 = vmatpush2.msra.mxu0 0.0
        %2899 = vmatprep.subr.mxu0 0.0
        %2900 = vmatpush2.msra.mxu0 0.0
        %2901 = vmatprep.subr.mxu0 0.0
        %2902 = vmatpush2.msra.mxu0 0.0
        %2903 = vmatprep.subr.mxu0 0.0
        %2904 = vmatpush2.msra.mxu0 0.0
        %2905 = vmatprep.subr.mxu0 0.0
        %2906 = vmatpush2.msra.mxu0 0.0
        %2907 = vmatprep.subr.mxu0 0.0
        %2908 = vmatpush2.msra.mxu0 0.0
        %2909 = vmatprep.subr.mxu0 0.0
        %2910 = vmatpush2.msra.mxu0 0.0
        %2911 = vmatprep.mubr.f32.mxu0 0.0
        %2912 = vmatmul.mubr.f32.gmra.mxu0 %v2843
        %v2913 = vpop.f32.mrf.mxu0
        %v2914 = vadd.f32 0.0, %v2913
        %v2915 = vpop.f32.mrf.mxu0
        %2916 = vmatprep.mubr.f32.mxu0 0.0
        %2917 = vmatmul.mubr.f32.gmra.mxu0 %v2845
        %v2918 = vpop.f32.mrf.mxu0
        %v2919 = vadd.f32 0.0, %v2918
        %v2920 = vpop.f32.mrf.mxu0
        %2921 = vdwg.mxu0
        %v2922 = vadd.f32 %v2824, %v2914
        %v2923 = vadd.f32 %v2829, %v2919
        %s2924 = scalar_lea.vmem %s7, 168
        %v2925 = vld [vmem:[%s2924] sm:$0xff]
        %v2926 = vld [vmem:[%s2924 + $0x8] sm:$0xff]
        %v2927 = vld [vmem:[%s2924 + $0x10] sm:$0xff]
        %v2928 = vld [vmem:[%s2924 + $0x18] sm:$0xff]
        %v2929 = vld [vmem:[%s2924 + $0x20] sm:$0xff]
        %v2930 = vld [vmem:[%s2924 + $0x28] sm:$0xff]
        %v2931 = vld [vmem:[%s2924 + $0x30] sm:$0xff]
        %v2932 = vrot.slane %v2651, 3
        %v2933 = vrot.slane %v2652, 3
        %v2934 = vsel %vm944, %v2932, %v2933
        %v2935 = vsel %vm2673, %v2934, 0
        %v2937 = vsel %vm2673, %v2933, 0
        %2939 = vmatprep.subr.mxu0 0.0
        %2940 = vmatpush1.msra.mxu0 0.0
        %2941 = vmatprep.subr.mxu0 0.0
        %2942 = vmatpush1.msra.mxu0 0.0
        %2943 = vmatprep.subr.mxu0 0.0
        %2944 = vmatpush1.msra.mxu0 0.0
        %2945 = vmatprep.subr.mxu0 0.0
        %2946 = vmatpush1.msra.mxu0 0.0
        %2947 = vmatprep.subr.mxu0 0.0
        %2948 = vmatpush1.msra.mxu0 0.0
        %2949 = vmatprep.subr.mxu0 0.0
        %2950 = vmatpush1.msra.mxu0 0.0
        %2951 = vmatprep.subr.mxu0 0.0
        %2952 = vmatpush1.msra.mxu0 0.0
        %2953 = vmatprep.subr.mxu0 0.0
        %2954 = vmatpush1.msra.mxu0 0.0
        %2955 = vmatprep.subr.mxu0 0.0
        %2956 = vmatpush1.msra.mxu0 0.0
        %2957 = vmatprep.subr.mxu0 0.0
        %2958 = vmatpush1.msra.mxu0 %v2931
        %2959 = vmatprep.subr.mxu0 0.0
        %2960 = vmatpush1.msra.mxu0 %v2930
        %2961 = vmatprep.subr.mxu0 0.0
        %2962 = vmatpush1.msra.mxu0 %v2929
        %2963 = vmatprep.subr.mxu0 0.0
        %2964 = vmatpush1.msra.mxu0 %v2928
        %2965 = vmatprep.subr.mxu0 0.0
        %2966 = vmatpush1.msra.mxu0 %v2927
        %2967 = vmatprep.subr.mxu0 0.0
        %2968 = vmatpush1.msra.mxu0 %v2926
        %2969 = vmatprep.subr.mxu0 0.0
        %2970 = vmatpush1.msra.mxu0 %v2925
        %2971 = vmatprep.subr.mxu0 0.0
        %2972 = vmatpush2.msra.mxu0 0.0
        %2973 = vmatprep.subr.mxu0 0.0
        %2974 = vmatpush2.msra.mxu0 0.0
        %2975 = vmatprep.subr.mxu0 0.0
        %2976 = vmatpush2.msra.mxu0 0.0
        %2977 = vmatprep.subr.mxu0 0.0
        %2978 = vmatpush2.msra.mxu0 0.0
        %2979 = vmatprep.subr.mxu0 0.0
        %2980 = vmatpush2.msra.mxu0 0.0
        %2981 = vmatprep.subr.mxu0 0.0
        %2982 = vmatpush2.msra.mxu0 0.0
        %2983 = vmatprep.subr.mxu0 0.0
        %2984 = vmatpush2.msra.mxu0 0.0
        %2985 = vmatprep.subr.mxu0 0.0
        %2986 = vmatpush2.msra.mxu0 0.0
        %2987 = vmatprep.subr.mxu0 0.0
        %2988 = vmatpush2.msra.mxu0 0.0
        %2989 = vmatprep.subr.mxu0 0.0
        %2990 = vmatpush2.msra.mxu0 0.0
        %2991 = vmatprep.subr.mxu0 0.0
        %2992 = vmatpush2.msra.mxu0 0.0
        %2993 = vmatprep.subr.mxu0 0.0
        %2994 = vmatpush2.msra.mxu0 0.0
        %2995 = vmatprep.subr.mxu0 0.0
        %2996 = vmatpush2.msra.mxu0 0.0
        %2997 = vmatprep.subr.mxu0 0.0
        %2998 = vmatpush2.msra.mxu0 0.0
        %2999 = vmatprep.subr.mxu0 0.0
        %3000 = vmatpush2.msra.mxu0 0.0
        %3001 = vmatprep.subr.mxu0 0.0
        %3002 = vmatpush2.msra.mxu0 0.0
        %3003 = vmatprep.mubr.f32.mxu0 0.0
        %3004 = vmatmul.mubr.f32.gmra.mxu0 %v2935
        %v3005 = vpop.f32.mrf.mxu0
        %v3006 = vadd.f32 0.0, %v3005
        %v3007 = vpop.f32.mrf.mxu0
        %3008 = vmatprep.mubr.f32.mxu0 0.0
        %3009 = vmatmul.mubr.f32.gmra.mxu0 %v2937
        %v3010 = vpop.f32.mrf.mxu0
        %v3011 = vadd.f32 0.0, %v3010
        %v3012 = vpop.f32.mrf.mxu0
        %3013 = vdwg.mxu0
        %v3014 = vadd.f32 %v2922, %v3006
        %v3015 = vadd.f32 %v2923, %v3011
        %s3016 = scalar_lea.vmem %s7, 224
        %v3017 = vld [vmem:[%s3016] sm:$0xff]
        %v3018 = vld [vmem:[%s3016 + $0x8] sm:$0xff]
        %v3019 = vld [vmem:[%s3016 + $0x10] sm:$0xff]
        %v3020 = vld [vmem:[%s3016 + $0x18] sm:$0xff]
        %v3021 = vld [vmem:[%s3016 + $0x20] sm:$0xff]
        %v3022 = vld [vmem:[%s3016 + $0x28] sm:$0xff]
        %v3023 = vld [vmem:[%s3016 + $0x30] sm:$0xff]
        %v3024 = vrot.slane %v2651, 4
        %v3025 = vrot.slane %v2652, 4
        %v3026 = vsel %vm1054, %v3024, %v3025
        %v3027 = vsel %vm2673, %v3026, 0
        %v3029 = vsel %vm2673, %v3025, 0
        %3031 = vmatprep.subr.mxu0 0.0
        %3032 = vmatpush1.msra.mxu0 0.0
        %3033 = vmatprep.subr.mxu0 0.0
        %3034 = vmatpush1.msra.mxu0 0.0
        %3035 = vmatprep.subr.mxu0 0.0
        %3036 = vmatpush1.msra.mxu0 0.0
        %3037 = vmatprep.subr.mxu0 0.0
        %3038 = vmatpush1.msra.mxu0 0.0
        %3039 = vmatprep.subr.mxu0 0.0
        %3040 = vmatpush1.msra.mxu0 0.0
        %3041 = vmatprep.subr.mxu0 0.0
        %3042 = vmatpush1.msra.mxu0 0.0
        %3043 = vmatprep.subr.mxu0 0.0
        %3044 = vmatpush1.msra.mxu0 0.0
        %3045 = vmatprep.subr.mxu0 0.0
        %3046 = vmatpush1.msra.mxu0 0.0
        %3047 = vmatprep.subr.mxu0 0.0
        %3048 = vmatpush1.msra.mxu0 0.0
        %3049 = vmatprep.subr.mxu0 0.0
        %3050 = vmatpush1.msra.mxu0 %v3023
        %3051 = vmatprep.subr.mxu0 0.0
        %3052 = vmatpush1.msra.mxu0 %v3022
        %3053 = vmatprep.subr.mxu0 0.0
        %3054 = vmatpush1.msra.mxu0 %v3021
        %3055 = vmatprep.subr.mxu0 0.0
        %3056 = vmatpush1.msra.mxu0 %v3020
        %3057 = vmatprep.subr.mxu0 0.0
        %3058 = vmatpush1.msra.mxu0 %v3019
        %3059 = vmatprep.subr.mxu0 0.0
        %3060 = vmatpush1.msra.mxu0 %v3018
        %3061 = vmatprep.subr.mxu0 0.0
        %3062 = vmatpush1.msra.mxu0 %v3017
        %3063 = vmatprep.subr.mxu0 0.0
        %3064 = vmatpush2.msra.mxu0 0.0
        %3065 = vmatprep.subr.mxu0 0.0
        %3066 = vmatpush2.msra.mxu0 0.0
        %3067 = vmatprep.subr.mxu0 0.0
        %3068 = vmatpush2.msra.mxu0 0.0
        %3069 = vmatprep.subr.mxu0 0.0
        %3070 = vmatpush2.msra.mxu0 0.0
        %3071 = vmatprep.subr.mxu0 0.0
        %3072 = vmatpush2.msra.mxu0 0.0
        %3073 = vmatprep.subr.mxu0 0.0
        %3074 = vmatpush2.msra.mxu0 0.0
        %3075 = vmatprep.subr.mxu0 0.0
        %3076 = vmatpush2.msra.mxu0 0.0
        %3077 = vmatprep.subr.mxu0 0.0
        %3078 = vmatpush2.msra.mxu0 0.0
        %3079 = vmatprep.subr.mxu0 0.0
        %3080 = vmatpush2.msra.mxu0 0.0
        %3081 = vmatprep.subr.mxu0 0.0
        %3082 = vmatpush2.msra.mxu0 0.0
        %3083 = vmatprep.subr.mxu0 0.0
        %3084 = vmatpush2.msra.mxu0 0.0
        %3085 = vmatprep.subr.mxu0 0.0
        %3086 = vmatpush2.msra.mxu0 0.0
        %3087 = vmatprep.subr.mxu0 0.0
        %3088 = vmatpush2.msra.mxu0 0.0
        %3089 = vmatprep.subr.mxu0 0.0
        %3090 = vmatpush2.msra.mxu0 0.0
        %3091 = vmatprep.subr.mxu0 0.0
        %3092 = vmatpush2.msra.mxu0 0.0
        %3093 = vmatprep.subr.mxu0 0.0
        %3094 = vmatpush2.msra.mxu0 0.0
        %3095 = vmatprep.mubr.f32.mxu0 0.0
        %3096 = vmatmul.mubr.f32.gmra.mxu0 %v3027
        %v3097 = vpop.f32.mrf.mxu0
        %v3098 = vadd.f32 0.0, %v3097
        %v3099 = vpop.f32.mrf.mxu0
        %3100 = vmatprep.mubr.f32.mxu0 0.0
        %3101 = vmatmul.mubr.f32.gmra.mxu0 %v3029
        %v3102 = vpop.f32.mrf.mxu0
        %v3103 = vadd.f32 0.0, %v3102
        %v3104 = vpop.f32.mrf.mxu0
        %3105 = vdwg.mxu0
        %v3106 = vadd.f32 %v3014, %v3098
        %v3107 = vadd.f32 %v3015, %v3103
        %v3108 = vld [vmem:[%s8] sm:$0x1]
        %v3110 = vlaneseq
        %v3111 = vshrl.u32 %v3110, 7
        %v3112 = vsub.s32 0, %v3111
        %v3113 = vrot.slane %v3108, %v3112
        %v3115 = vadd.f32 %v3106, %v3113
        %v3116 = vadd.f32 %v3107, %v3113
        %v3117 = vld [vmem:[%s9] sm:$0xff]
        %v3118 = vld [vmem:[%s9 + $0x8] sm:$0xff]
        %v3119 = vld [vmem:[%s9 + $0x10] sm:$0xff]
        %v3120 = vld [vmem:[%s9 + $0x18] sm:$0xff]
        %v3121 = vld [vmem:[%s9 + $0x20] sm:$0xff]
        %vm3122 = vcmask 326656
        %v3124 = vsel %vm3122, %v3115, 0
        %v3127 = vsel %vm3122, %v3116, 0
        %3129 = vmatprep.subr.mxu0 0.0
        %3130 = vmatpush1.msra.mxu0 0.0
        %3131 = vmatprep.subr.mxu0 0.0
        %3132 = vmatpush1.msra.mxu0 0.0
        %3133 = vmatprep.subr.mxu0 0.0
        %3134 = vmatpush1.msra.mxu0 0.0
        %3135 = vmatprep.subr.mxu0 0.0
        %3136 = vmatpush1.msra.mxu0 0.0
        %3137 = vmatprep.subr.mxu0 0.0
        %3138 = vmatpush1.msra.mxu0 0.0
        %3139 = vmatprep.subr.mxu0 0.0
        %3140 = vmatpush1.msra.mxu0 0.0
        %3141 = vmatprep.subr.mxu0 0.0
        %3142 = vmatpush1.msra.mxu0 0.0
        %3143 = vmatprep.subr.mxu0 0.0
        %3144 = vmatpush1.msra.mxu0 0.0
        %3145 = vmatprep.subr.mxu0 0.0
        %3146 = vmatpush1.msra.mxu0 0.0
        %3147 = vmatprep.subr.mxu0 0.0
        %3148 = vmatpush1.msra.mxu0 0.0
        %3149 = vmatprep.subr.mxu0 0.0
        %3150 = vmatpush1.msra.mxu0 0.0
        %3151 = vmatprep.subr.mxu0 0.0
        %3152 = vmatpush1.msra.mxu0 %v3121
        %3153 = vmatprep.subr.mxu0 0.0
        %3154 = vmatpush1.msra.mxu0 %v3120
        %3155 = vmatprep.subr.mxu0 0.0
        %3156 = vmatpush1.msra.mxu0 %v3119
        %3157 = vmatprep.subr.mxu0 0.0
        %3158 = vmatpush1.msra.mxu0 %v3118
        %3159 = vmatprep.subr.mxu0 0.0
        %3160 = vmatpush1.msra.mxu0 %v3117
        %3161 = vmatprep.subr.mxu0 0.0
        %3162 = vmatpush2.msra.mxu0 0.0
        %3163 = vmatprep.subr.mxu0 0.0
        %3164 = vmatpush2.msra.mxu0 0.0
        %3165 = vmatprep.subr.mxu0 0.0
        %3166 = vmatpush2.msra.mxu0 0.0
        %3167 = vmatprep.subr.mxu0 0.0
        %3168 = vmatpush2.msra.mxu0 0.0
        %3169 = vmatprep.subr.mxu0 0.0
        %3170 = vmatpush2.msra.mxu0 0.0
        %3171 = vmatprep.subr.mxu0 0.0
        %3172 = vmatpush2.msra.mxu0 0.0
        %3173 = vmatprep.subr.mxu0 0.0
        %3174 = vmatpush2.msra.mxu0 0.0
        %3175 = vmatprep.subr.mxu0 0.0
        %3176 = vmatpush2.msra.mxu0 0.0
        %3177 = vmatprep.subr.mxu0 0.0
        %3178 = vmatpush2.msra.mxu0 0.0
        %3179 = vmatprep.subr.mxu0 0.0
        %3180 = vmatpush2.msra.mxu0 0.0
        %3181 = vmatprep.subr.mxu0 0.0
        %3182 = vmatpush2.msra.mxu0 0.0
        %3183 = vmatprep.subr.mxu0 0.0
        %3184 = vmatpush2.msra.mxu0 0.0
        %3185 = vmatprep.subr.mxu0 0.0
        %3186 = vmatpush2.msra.mxu0 0.0
        %3187 = vmatprep.subr.mxu0 0.0
        %3188 = vmatpush2.msra.mxu0 0.0
        %3189 = vmatprep.subr.mxu0 0.0
        %3190 = vmatpush2.msra.mxu0 0.0
        %3191 = vmatprep.subr.mxu0 0.0
        %3192 = vmatpush2.msra.mxu0 0.0
        %3193 = vmatprep.mubr.f32.mxu0 0.0
        %3194 = vmatmul.mubr.f32.gmra.mxu0 %v3124
        %v3195 = vpop.f32.mrf.mxu0
        %v3196 = vadd.f32 0.0, %v3195
        %v3197 = vpop.f32.mrf.mxu0
        %3198 = vmatprep.mubr.f32.mxu0 0.0
        %3199 = vmatmul.mubr.f32.gmra.mxu0 %v3127
        %v3200 = vpop.f32.mrf.mxu0
        %v3201 = vadd.f32 0.0, %v3200
        %v3202 = vpop.f32.mrf.mxu0
        %3203 = vdwg.mxu0
        %v3204 = vld [vmem:[%s10] sm:$0xff]
        %v3205 = vld [vmem:[%s10 + $0x8] sm:$0xff]
        %v3206 = vld [vmem:[%s10 + $0x10] sm:$0xff]
        %v3207 = vld [vmem:[%s10 + $0x18] sm:$0xff]
        %v3208 = vld [vmem:[%s10 + $0x20] sm:$0xff]
        %3209 = vmatprep.subr.mxu0 0.0
        %3210 = vmatpush1.msra.mxu0 0.0
        %3211 = vmatprep.subr.mxu0 0.0
        %3212 = vmatpush1.msra.mxu0 0.0
        %3213 = vmatprep.subr.mxu0 0.0
        %3214 = vmatpush1.msra.mxu0 0.0
        %3215 = vmatprep.subr.mxu0 0.0
        %3216 = vmatpush1.msra.mxu0 0.0
        %3217 = vmatprep.subr.mxu0 0.0
        %3218 = vmatpush1.msra.mxu0 0.0
        %3219 = vmatprep.subr.mxu0 0.0
        %3220 = vmatpush1.msra.mxu0 0.0
        %3221 = vmatprep.subr.mxu0 0.0
        %3222 = vmatpush1.msra.mxu0 0.0
        %3223 = vmatprep.subr.mxu0 0.0
        %3224 = vmatpush1.msra.mxu0 0.0
        %3225 = vmatprep.subr.mxu0 0.0
        %3226 = vmatpush1.msra.mxu0 0.0
        %3227 = vmatprep.subr.mxu0 0.0
        %3228 = vmatpush1.msra.mxu0 0.0
        %3229 = vmatprep.subr.mxu0 0.0
        %3230 = vmatpush1.msra.mxu0 0.0
        %3231 = vmatprep.subr.mxu0 0.0
        %3232 = vmatpush1.msra.mxu0 %v3208
        %3233 = vmatprep.subr.mxu0 0.0
        %3234 = vmatpush1.msra.mxu0 %v3207
        %3235 = vmatprep.subr.mxu0 0.0
        %3236 = vmatpush1.msra.mxu0 %v3206
        %3237 = vmatprep.subr.mxu0 0.0
        %3238 = vmatpush1.msra.mxu0 %v3205
        %3239 = vmatprep.subr.mxu0 0.0
        %3240 = vmatpush1.msra.mxu0 %v3204
        %3241 = vmatprep.subr.mxu0 0.0
        %3242 = vmatpush2.msra.mxu0 0.0
        %3243 = vmatprep.subr.mxu0 0.0
        %3244 = vmatpush2.msra.mxu0 0.0
        %3245 = vmatprep.subr.mxu0 0.0
        %3246 = vmatpush2.msra.mxu0 0.0
        %3247 = vmatprep.subr.mxu0 0.0
        %3248 = vmatpush2.msra.mxu0 0.0
        %3249 = vmatprep.subr.mxu0 0.0
        %3250 = vmatpush2.msra.mxu0 0.0
        %3251 = vmatprep.subr.mxu0 0.0
        %3252 = vmatpush2.msra.mxu0 0.0
        %3253 = vmatprep.subr.mxu0 0.0
        %3254 = vmatpush2.msra.mxu0 0.0
        %3255 = vmatprep.subr.mxu0 0.0
        %3256 = vmatpush2.msra.mxu0 0.0
        %3257 = vmatprep.subr.mxu0 0.0
        %3258 = vmatpush2.msra.mxu0 0.0
        %3259 = vmatprep.subr.mxu0 0.0
        %3260 = vmatpush2.msra.mxu0 0.0
        %3261 = vmatprep.subr.mxu0 0.0
        %3262 = vmatpush2.msra.mxu0 0.0
        %3263 = vmatprep.subr.mxu0 0.0
        %3264 = vmatpush2.msra.mxu0 0.0
        %3265 = vmatprep.subr.mxu0 0.0
        %3266 = vmatpush2.msra.mxu0 0.0
        %3267 = vmatprep.subr.mxu0 0.0
        %3268 = vmatpush2.msra.mxu0 0.0
        %3269 = vmatprep.subr.mxu0 0.0
        %3270 = vmatpush2.msra.mxu0 0.0
        %3271 = vmatprep.subr.mxu0 0.0
        %3272 = vmatpush2.msra.mxu0 0.0
        %3273 = vmatprep.mubr.f32.mxu0 0.0
        %3274 = vmatmul.mubr.f32.gmra.mxu0 %v3124
        %v3275 = vpop.f32.mrf.mxu0
        %v3276 = vadd.f32 0.0, %v3275
        %v3277 = vpop.f32.mrf.mxu0
        %3278 = vmatprep.mubr.f32.mxu0 0.0
        %3279 = vmatmul.mubr.f32.gmra.mxu0 %v3127
        %v3280 = vpop.f32.mrf.mxu0
        %v3281 = vadd.f32 0.0, %v3280
        %v3282 = vpop.f32.mrf.mxu0
        %3283 = vdwg.mxu0
        %v3284 = vmax.f32 %v3196, %v3276
        %v3285 = vmax.f32 %v3201, %v3281
        %v3286 = vld [vmem:[#allocation7] sm:$0x1f]
        %vm3287 = vcmask 80896
        %v3289 = vsel %vm3287, %v3286, 0
        %vm3291 = vcmask 1041408
        %v3293 = vsel %vm3291, %v3285, 0
        %3295 = vmatprep.subr.mxu0 0.0
        %3296 = vmatpush1.msra.mxu0 0.0
        %3297 = vmatprep.subr.mxu0 0.0
        %3298 = vmatpush1.msra.mxu0 0.0
        %3299 = vmatprep.subr.mxu0 0.0
        %3300 = vmatpush1.msra.mxu0 0.0
        %3301 = vmatprep.subr.mxu0 0.0
        %3302 = vmatpush1.msra.mxu0 0.0
        %3303 = vmatprep.subr.mxu0 0.0
        %3304 = vmatpush1.msra.mxu0 0.0
        %3305 = vmatprep.subr.mxu0 0.0
        %3306 = vmatpush1.msra.mxu0 0.0
        %3307 = vmatprep.subr.mxu0 0.0
        %3308 = vmatpush1.msra.mxu0 0.0
        %3309 = vmatprep.subr.mxu0 0.0
        %3310 = vmatpush1.msra.mxu0 0.0
        %3311 = vmatprep.subr.mxu0 0.0
        %3312 = vmatpush1.msra.mxu0 0.0
        %3313 = vmatprep.subr.mxu0 0.0
        %3314 = vmatpush1.msra.mxu0 0.0
        %3315 = vmatprep.subr.mxu0 0.0
        %3316 = vmatpush1.msra.mxu0 0.0
        %3317 = vmatprep.subr.mxu0 0.0
        %3318 = vmatpush1.msra.mxu0 0.0
        %3319 = vmatprep.subr.mxu0 0.0
        %3320 = vmatpush1.msra.mxu0 0.0
        %3321 = vmatprep.subr.mxu0 0.0
        %3322 = vmatpush1.msra.mxu0 0.0
        %3323 = vmatprep.subr.mxu0 0.0
        %3324 = vmatpush1.msra.mxu0 %v3293
        %3325 = vmatprep.subr.mxu0 0.0
        %3326 = vmatpush1.msra.mxu0 %v3284
        %3327 = vmatprep.subr.mxu0 0.0
        %3328 = vmatpush2.msra.mxu0 0.0
        %3329 = vmatprep.subr.mxu0 0.0
        %3330 = vmatpush2.msra.mxu0 0.0
        %3331 = vmatprep.subr.mxu0 0.0
        %3332 = vmatpush2.msra.mxu0 0.0
        %3333 = vmatprep.subr.mxu0 0.0
        %3334 = vmatpush2.msra.mxu0 0.0
        %3335 = vmatprep.subr.mxu0 0.0
        %3336 = vmatpush2.msra.mxu0 0.0
        %3337 = vmatprep.subr.mxu0 0.0
        %3338 = vmatpush2.msra.mxu0 0.0
        %3339 = vmatprep.subr.mxu0 0.0
        %3340 = vmatpush2.msra.mxu0 0.0
        %3341 = vmatprep.subr.mxu0 0.0
        %3342 = vmatpush2.msra.mxu0 0.0
        %3343 = vmatprep.subr.mxu0 0.0
        %3344 = vmatpush2.msra.mxu0 0.0
        %3345 = vmatprep.subr.mxu0 0.0
        %3346 = vmatpush2.msra.mxu0 0.0
        %3347 = vmatprep.subr.mxu0 0.0
        %3348 = vmatpush2.msra.mxu0 0.0
        %3349 = vmatprep.subr.mxu0 0.0
        %3350 = vmatpush2.msra.mxu0 0.0
        %3351 = vmatprep.subr.mxu0 0.0
        %3352 = vmatpush2.msra.mxu0 0.0
        %3353 = vmatprep.subr.mxu0 0.0
        %3354 = vmatpush2.msra.mxu0 0.0
        %3355 = vmatprep.subr.mxu0 0.0
        %3356 = vmatpush2.msra.mxu0 0.0
        %3357 = vmatprep.subr.mxu0 0.0
        %3358 = vmatpush2.msra.mxu0 0.0
        %3359 = vmatprep.mubr.f32.mxu0 0.0
        %3360 = vmatmul.mubr.f32.gmra.mxu0 %v3289
        %v3361 = vpop.f32.mrf.mxu0
        %v3362 = vadd.f32 0.0, %v3361
        %v3363 = vpop.f32.mrf.mxu0
        %3364 = vdwg.mxu0
        %v3365 = vld [vmem:[%s12] sm:$0x1f]
        %v3367 = vsel %vm3287, %v3365, 0
        %3369 = vmatprep.subr.mxu0 0.0
        %3370 = vmatpush1.msra.mxu0 0.0
        %3371 = vmatprep.subr.mxu0 0.0
        %3372 = vmatpush1.msra.mxu0 0.0
        %3373 = vmatprep.subr.mxu0 0.0
        %3374 = vmatpush1.msra.mxu0 0.0
        %3375 = vmatprep.subr.mxu0 0.0
        %3376 = vmatpush1.msra.mxu0 0.0
        %3377 = vmatprep.subr.mxu0 0.0
        %3378 = vmatpush1.msra.mxu0 0.0
        %3379 = vmatprep.subr.mxu0 0.0
        %3380 = vmatpush1.msra.mxu0 0.0
        %3381 = vmatprep.subr.mxu0 0.0
        %3382 = vmatpush1.msra.mxu0 0.0
        %3383 = vmatprep.subr.mxu0 0.0
        %3384 = vmatpush1.msra.mxu0 0.0
        %3385 = vmatprep.subr.mxu0 0.0
        %3386 = vmatpush1.msra.mxu0 0.0
        %3387 = vmatprep.subr.mxu0 0.0
        %3388 = vmatpush1.msra.mxu0 0.0
        %3389 = vmatprep.subr.mxu0 0.0
        %3390 = vmatpush1.msra.mxu0 0.0
        %3391 = vmatprep.subr.mxu0 0.0
        %3392 = vmatpush1.msra.mxu0 0.0
        %3393 = vmatprep.subr.mxu0 0.0
        %3394 = vmatpush1.msra.mxu0 0.0
        %3395 = vmatprep.subr.mxu0 0.0
        %3396 = vmatpush1.msra.mxu0 0.0
        %3397 = vmatprep.subr.mxu0 0.0
        %3398 = vmatpush1.msra.mxu0 %v3293
        %3399 = vmatprep.subr.mxu0 0.0
        %3400 = vmatpush1.msra.mxu0 %v3284
        %3401 = vmatprep.subr.mxu0 0.0
        %3402 = vmatpush2.msra.mxu0 0.0
        %3403 = vmatprep.subr.mxu0 0.0
        %3404 = vmatpush2.msra.mxu0 0.0
        %3405 = vmatprep.subr.mxu0 0.0
        %3406 = vmatpush2.msra.mxu0 0.0
        %3407 = vmatprep.subr.mxu0 0.0
        %3408 = vmatpush2.msra.mxu0 0.0
        %3409 = vmatprep.subr.mxu0 0.0
        %3410 = vmatpush2.msra.mxu0 0.0
        %3411 = vmatprep.subr.mxu0 0.0
        %3412 = vmatpush2.msra.mxu0 0.0
        %3413 = vmatprep.subr.mxu0 0.0
        %3414 = vmatpush2.msra.mxu0 0.0
        %3415 = vmatprep.subr.mxu0 0.0
        %3416 = vmatpush2.msra.mxu0 0.0
        %3417 = vmatprep.subr.mxu0 0.0
        %3418 = vmatpush2.msra.mxu0 0.0
        %3419 = vmatprep.subr.mxu0 0.0
        %3420 = vmatpush2.msra.mxu0 0.0
        %3421 = vmatprep.subr.mxu0 0.0
        %3422 = vmatpush2.msra.mxu0 0.0
        %3423 = vmatprep.subr.mxu0 0.0
        %3424 = vmatpush2.msra.mxu0 0.0
        %3425 = vmatprep.subr.mxu0 0.0
        %3426 = vmatpush2.msra.mxu0 0.0
        %3427 = vmatprep.subr.mxu0 0.0
        %3428 = vmatpush2.msra.mxu0 0.0
        %3429 = vmatprep.subr.mxu0 0.0
        %3430 = vmatpush2.msra.mxu0 0.0
        %3431 = vmatprep.subr.mxu0 0.0
        %3432 = vmatpush2.msra.mxu0 0.0
        %3433 = vmatprep.mubr.f32.mxu0 0.0
        %3434 = vmatmul.mubr.f32.gmra.mxu0 %v3367
        %v3435 = vpop.f32.mrf.mxu0
        %v3436 = vadd.f32 0.0, %v3435
        %v3437 = vpop.f32.mrf.mxu0
        %3438 = vdwg.mxu0
        %v3439 = vmax.f32 %v3362, %v3436
        %v3440 = vmax.f32 %v3439, 0.0
        %v3441 = vld [vmem:[#allocation8] sm:$0xff]
        %v3442 = vld [vmem:[#allocation8 + $0x8] sm:$0xff]
        %v3443 = vld [vmem:[#allocation8 + $0x10] sm:$0xf]
        %s3444 = scalar_lea.vmem [#allocation8], 24
        %v3445 = vld [vmem:[%s3444] sm:$0xff]
        %v3446 = vld [vmem:[%s3444 + $0x8] sm:$0xff]
        %v3447 = vld [vmem:[%s3444 + $0x10] sm:$0xf]
        %v3449 = vrot.slane %v3440, 1
        %vm3450 = vcmask 162816
        %v3451 = vsel %vm3450, %v3449, 0
        %v3454 = vsel %vm1054, %v3447, 0
        %3456 = vmatprep.subr.mxu0 0.0
        %3457 = vmatpush1.msra.mxu0 0.0
        %3458 = vmatprep.subr.mxu0 0.0
        %3459 = vmatpush1.msra.mxu0 0.0
        %3460 = vmatprep.subr.mxu0 0.0
        %3461 = vmatpush1.msra.mxu0 0.0
        %3462 = vmatprep.subr.mxu0 0.0
        %3463 = vmatpush1.msra.mxu0 0.0
        %3464 = vmatprep.subr.mxu0 0.0
        %3465 = vmatpush1.msra.mxu0 0.0
        %3466 = vmatprep.subr.mxu0 0.0
        %3467 = vmatpush1.msra.mxu0 0.0
        %3468 = vmatprep.subr.mxu0 0.0
        %3469 = vmatpush1.msra.mxu0 0.0
        %3470 = vmatprep.subr.mxu0 0.0
        %3471 = vmatpush1.msra.mxu0 0.0
        %3472 = vmatprep.subr.mxu0 0.0
        %3473 = vmatpush1.msra.mxu0 0.0
        %3474 = vmatprep.subr.mxu0 0.0
        %3475 = vmatpush1.msra.mxu0 0.0
        %3476 = vmatprep.subr.mxu0 0.0
        %3477 = vmatpush1.msra.mxu0 0.0
        %3478 = vmatprep.subr.mxu0 0.0
        %3479 = vmatpush1.msra.mxu0 0.0
        %3480 = vmatprep.subr.mxu0 0.0
        %3481 = vmatpush1.msra.mxu0 0.0
        %3482 = vmatprep.subr.mxu0 0.0
        %3483 = vmatpush1.msra.mxu0 %v3454
        %3484 = vmatprep.subr.mxu0 0.0
        %3485 = vmatpush1.msra.mxu0 %v3446
        %3486 = vmatprep.subr.mxu0 0.0
        %3487 = vmatpush1.msra.mxu0 %v3445
        %3488 = vmatprep.subr.mxu0 0.0
        %3489 = vmatpush2.msra.mxu0 0.0
        %3490 = vmatprep.subr.mxu0 0.0
        %3491 = vmatpush2.msra.mxu0 0.0
        %3492 = vmatprep.subr.mxu0 0.0
        %3493 = vmatpush2.msra.mxu0 0.0
        %3494 = vmatprep.subr.mxu0 0.0
        %3495 = vmatpush2.msra.mxu0 0.0
        %3496 = vmatprep.subr.mxu0 0.0
        %3497 = vmatpush2.msra.mxu0 0.0
        %3498 = vmatprep.subr.mxu0 0.0
        %3499 = vmatpush2.msra.mxu0 0.0
        %3500 = vmatprep.subr.mxu0 0.0
        %3501 = vmatpush2.msra.mxu0 0.0
        %3502 = vmatprep.subr.mxu0 0.0
        %3503 = vmatpush2.msra.mxu0 0.0
        %3504 = vmatprep.subr.mxu0 0.0
        %3505 = vmatpush2.msra.mxu0 0.0
        %3506 = vmatprep.subr.mxu0 0.0
        %3507 = vmatpush2.msra.mxu0 0.0
        %3508 = vmatprep.subr.mxu0 0.0
        %3509 = vmatpush2.msra.mxu0 0.0
        %3510 = vmatprep.subr.mxu0 0.0
        %3511 = vmatpush2.msra.mxu0 0.0
        %3512 = vmatprep.subr.mxu0 0.0
        %3513 = vmatpush2.msra.mxu0 0.0
        %3514 = vmatprep.subr.mxu0 0.0
        %3515 = vmatpush2.msra.mxu0 0.0
        %3516 = vmatprep.subr.mxu0 0.0
        %3517 = vmatpush2.msra.mxu0 0.0
        %3518 = vmatprep.subr.mxu0 0.0
        %3519 = vmatpush2.msra.mxu0 0.0
        %3520 = vmatprep.mubr.f32.mxu0 0.0
        %3521 = vmatmul.mubr.f32.gmra.mxu0 %v3451
        %v3522 = vpop.f32.mrf.mxu0
        %v3523 = vadd.f32 0.0, %v3522
        %v3524 = vpop.f32.mrf.mxu0
        %3525 = vdwg.mxu0
        %v3526 = vsel %vm3450, %v3440, 0
        %v3529 = vsel %vm1054, %v3443, 0
        %3531 = vmatprep.subr.mxu0 0.0
        %3532 = vmatpush1.msra.mxu0 0.0
        %3533 = vmatprep.subr.mxu0 0.0
        %3534 = vmatpush1.msra.mxu0 0.0
        %3535 = vmatprep.subr.mxu0 0.0
        %3536 = vmatpush1.msra.mxu0 0.0
        %3537 = vmatprep.subr.mxu0 0.0
        %3538 = vmatpush1.msra.mxu0 0.0
        %3539 = vmatprep.subr.mxu0 0.0
        %3540 = vmatpush1.msra.mxu0 0.0
        %3541 = vmatprep.subr.mxu0 0.0
        %3542 = vmatpush1.msra.mxu0 0.0
        %3543 = vmatprep.subr.mxu0 0.0
        %3544 = vmatpush1.msra.mxu0 0.0
        %3545 = vmatprep.subr.mxu0 0.0
        %3546 = vmatpush1.msra.mxu0 0.0
        %3547 = vmatprep.subr.mxu0 0.0
        %3548 = vmatpush1.msra.mxu0 0.0
        %3549 = vmatprep.subr.mxu0 0.0
        %3550 = vmatpush1.msra.mxu0 0.0
        %3551 = vmatprep.subr.mxu0 0.0
        %3552 = vmatpush1.msra.mxu0 0.0
        %3553 = vmatprep.subr.mxu0 0.0
        %3554 = vmatpush1.msra.mxu0 0.0
        %3555 = vmatprep.subr.mxu0 0.0
        %3556 = vmatpush1.msra.mxu0 0.0
        %3557 = vmatprep.subr.mxu0 0.0
        %3558 = vmatpush1.msra.mxu0 %v3529
        %3559 = vmatprep.subr.mxu0 0.0
        %3560 = vmatpush1.msra.mxu0 %v3442
        %3561 = vmatprep.subr.mxu0 0.0
        %3562 = vmatpush1.msra.mxu0 %v3441
        %3563 = vmatprep.subr.mxu0 0.0
        %3564 = vmatpush2.msra.mxu0 0.0
        %3565 = vmatprep.subr.mxu0 0.0
        %3566 = vmatpush2.msra.mxu0 0.0
        %3567 = vmatprep.subr.mxu0 0.0
        %3568 = vmatpush2.msra.mxu0 0.0
        %3569 = vmatprep.subr.mxu0 0.0
        %3570 = vmatpush2.msra.mxu0 0.0
        %3571 = vmatprep.subr.mxu0 0.0
        %3572 = vmatpush2.msra.mxu0 0.0
        %3573 = vmatprep.subr.mxu0 0.0
        %3574 = vmatpush2.msra.mxu0 0.0
        %3575 = vmatprep.subr.mxu0 0.0
        %3576 = vmatpush2.msra.mxu0 0.0
        %3577 = vmatprep.subr.mxu0 0.0
        %3578 = vmatpush2.msra.mxu0 0.0
        %3579 = vmatprep.subr.mxu0 0.0
        %3580 = vmatpush2.msra.mxu0 0.0
        %3581 = vmatprep.subr.mxu0 0.0
        %3582 = vmatpush2.msra.mxu0 0.0
        %3583 = vmatprep.subr.mxu0 0.0
        %3584 = vmatpush2.msra.mxu0 0.0
        %3585 = vmatprep.subr.mxu0 0.0
        %3586 = vmatpush2.msra.mxu0 0.0
        %3587 = vmatprep.subr.mxu0 0.0
        %3588 = vmatpush2.msra.mxu0 0.0
        %3589 = vmatprep.subr.mxu0 0.0
        %3590 = vmatpush2.msra.mxu0 0.0
        %3591 = vmatprep.subr.mxu0 0.0
        %3592 = vmatpush2.msra.mxu0 0.0
        %3593 = vmatprep.subr.mxu0 0.0
        %3594 = vmatpush2.msra.mxu0 0.0
        %3595 = vmatprep.mubr.f32.mxu0 0.0
        %3596 = vmatmul.mubr.f32.gmra.mxu0 %v3526
        %v3597 = vpop.f32.mrf.mxu0
        %v3598 = vadd.f32 %v3523, %v3597
        %v3599 = vpop.f32.mrf.mxu0
        %3600 = vdwg.mxu0
        %s3601 = scalar_lea.vmem [#allocation8], 48
        %v3602 = vld [vmem:[%s3601] sm:$0xff]
        %v3603 = vld [vmem:[%s3601 + $0x8] sm:$0xff]
        %v3604 = vld [vmem:[%s3601 + $0x10] sm:$0xf]
        %v3605 = vrot.slane %v3440, 2
        %v3606 = vsel %vm3450, %v3605, 0
        %v3609 = vsel %vm1054, %v3604, 0
        %3611 = vmatprep.subr.mxu0 0.0
        %3612 = vmatpush1.msra.mxu0 0.0
        %3613 = vmatprep.subr.mxu0 0.0
        %3614 = vmatpush1.msra.mxu0 0.0
        %3615 = vmatprep.subr.mxu0 0.0
        %3616 = vmatpush1.msra.mxu0 0.0
        %3617 = vmatprep.subr.mxu0 0.0
        %3618 = vmatpush1.msra.mxu0 0.0
        %3619 = vmatprep.subr.mxu0 0.0
        %3620 = vmatpush1.msra.mxu0 0.0
        %3621 = vmatprep.subr.mxu0 0.0
        %3622 = vmatpush1.msra.mxu0 0.0
        %3623 = vmatprep.subr.mxu0 0.0
        %3624 = vmatpush1.msra.mxu0 0.0
        %3625 = vmatprep.subr.mxu0 0.0
        %3626 = vmatpush1.msra.mxu0 0.0
        %3627 = vmatprep.subr.mxu0 0.0
        %3628 = vmatpush1.msra.mxu0 0.0
        %3629 = vmatprep.subr.mxu0 0.0
        %3630 = vmatpush1.msra.mxu0 0.0
        %3631 = vmatprep.subr.mxu0 0.0
        %3632 = vmatpush1.msra.mxu0 0.0
        %3633 = vmatprep.subr.mxu0 0.0
        %3634 = vmatpush1.msra.mxu0 0.0
        %3635 = vmatprep.subr.mxu0 0.0
        %3636 = vmatpush1.msra.mxu0 0.0
        %3637 = vmatprep.subr.mxu0 0.0
        %3638 = vmatpush1.msra.mxu0 %v3609
        %3639 = vmatprep.subr.mxu0 0.0
        %3640 = vmatpush1.msra.mxu0 %v3603
        %3641 = vmatprep.subr.mxu0 0.0
        %3642 = vmatpush1.msra.mxu0 %v3602
        %3643 = vmatprep.subr.mxu0 0.0
        %3644 = vmatpush2.msra.mxu0 0.0
        %3645 = vmatprep.subr.mxu0 0.0
        %3646 = vmatpush2.msra.mxu0 0.0
        %3647 = vmatprep.subr.mxu0 0.0
        %3648 = vmatpush2.msra.mxu0 0.0
        %3649 = vmatprep.subr.mxu0 0.0
        %3650 = vmatpush2.msra.mxu0 0.0
        %3651 = vmatprep.subr.mxu0 0.0
        %3652 = vmatpush2.msra.mxu0 0.0
        %3653 = vmatprep.subr.mxu0 0.0
        %3654 = vmatpush2.msra.mxu0 0.0
        %3655 = vmatprep.subr.mxu0 0.0
        %3656 = vmatpush2.msra.mxu0 0.0
        %3657 = vmatprep.subr.mxu0 0.0
        %3658 = vmatpush2.msra.mxu0 0.0
        %3659 = vmatprep.subr.mxu0 0.0
        %3660 = vmatpush2.msra.mxu0 0.0
        %3661 = vmatprep.subr.mxu0 0.0
        %3662 = vmatpush2.msra.mxu0 0.0
        %3663 = vmatprep.subr.mxu0 0.0
        %3664 = vmatpush2.msra.mxu0 0.0
        %3665 = vmatprep.subr.mxu0 0.0
        %3666 = vmatpush2.msra.mxu0 0.0
        %3667 = vmatprep.subr.mxu0 0.0
        %3668 = vmatpush2.msra.mxu0 0.0
        %3669 = vmatprep.subr.mxu0 0.0
        %3670 = vmatpush2.msra.mxu0 0.0
        %3671 = vmatprep.subr.mxu0 0.0
        %3672 = vmatpush2.msra.mxu0 0.0
        %3673 = vmatprep.subr.mxu0 0.0
        %3674 = vmatpush2.msra.mxu0 0.0
        %3675 = vmatprep.mubr.f32.mxu0 0.0
        %3676 = vmatmul.mubr.f32.gmra.mxu0 %v3606
        %v3677 = vpop.f32.mrf.mxu0
        %v3678 = vadd.f32 0.0, %v3677
        %v3679 = vpop.f32.mrf.mxu0
        %3680 = vdwg.mxu0
        %v3681 = vadd.f32 %v3598, %v3678
        %s3682 = scalar_lea.vmem [#allocation8], 72
        %v3683 = vld [vmem:[%s3682] sm:$0xff]
        %v3684 = vld [vmem:[%s3682 + $0x8] sm:$0xff]
        %v3685 = vld [vmem:[%s3682 + $0x10] sm:$0xf]
        %v3686 = vrot.slane %v3440, 3
        %v3687 = vsel %vm3450, %v3686, 0
        %v3690 = vsel %vm1054, %v3685, 0
        %3692 = vmatprep.subr.mxu0 0.0
        %3693 = vmatpush1.msra.mxu0 0.0
        %3694 = vmatprep.subr.mxu0 0.0
        %3695 = vmatpush1.msra.mxu0 0.0
        %3696 = vmatprep.subr.mxu0 0.0
        %3697 = vmatpush1.msra.mxu0 0.0
        %3698 = vmatprep.subr.mxu0 0.0
        %3699 = vmatpush1.msra.mxu0 0.0
        %3700 = vmatprep.subr.mxu0 0.0
        %3701 = vmatpush1.msra.mxu0 0.0
        %3702 = vmatprep.subr.mxu0 0.0
        %3703 = vmatpush1.msra.mxu0 0.0
        %3704 = vmatprep.subr.mxu0 0.0
        %3705 = vmatpush1.msra.mxu0 0.0
        %3706 = vmatprep.subr.mxu0 0.0
        %3707 = vmatpush1.msra.mxu0 0.0
        %3708 = vmatprep.subr.mxu0 0.0
        %3709 = vmatpush1.msra.mxu0 0.0
        %3710 = vmatprep.subr.mxu0 0.0
        %3711 = vmatpush1.msra.mxu0 0.0
        %3712 = vmatprep.subr.mxu0 0.0
        %3713 = vmatpush1.msra.mxu0 0.0
        %3714 = vmatprep.subr.mxu0 0.0
        %3715 = vmatpush1.msra.mxu0 0.0
        %3716 = vmatprep.subr.mxu0 0.0
        %3717 = vmatpush1.msra.mxu0 0.0
        %3718 = vmatprep.subr.mxu0 0.0
        %3719 = vmatpush1.msra.mxu0 %v3690
        %3720 = vmatprep.subr.mxu0 0.0
        %3721 = vmatpush1.msra.mxu0 %v3684
        %3722 = vmatprep.subr.mxu0 0.0
        %3723 = vmatpush1.msra.mxu0 %v3683
        %3724 = vmatprep.subr.mxu0 0.0
        %3725 = vmatpush2.msra.mxu0 0.0
        %3726 = vmatprep.subr.mxu0 0.0
        %3727 = vmatpush2.msra.mxu0 0.0
        %3728 = vmatprep.subr.mxu0 0.0
        %3729 = vmatpush2.msra.mxu0 0.0
        %3730 = vmatprep.subr.mxu0 0.0
        %3731 = vmatpush2.msra.mxu0 0.0
        %3732 = vmatprep.subr.mxu0 0.0
        %3733 = vmatpush2.msra.mxu0 0.0
        %3734 = vmatprep.subr.mxu0 0.0
        %3735 = vmatpush2.msra.mxu0 0.0
        %3736 = vmatprep.subr.mxu0 0.0
        %3737 = vmatpush2.msra.mxu0 0.0
        %3738 = vmatprep.subr.mxu0 0.0
        %3739 = vmatpush2.msra.mxu0 0.0
        %3740 = vmatprep.subr.mxu0 0.0
        %3741 = vmatpush2.msra.mxu0 0.0
        %3742 = vmatprep.subr.mxu0 0.0
        %3743 = vmatpush2.msra.mxu0 0.0
        %3744 = vmatprep.subr.mxu0 0.0
        %3745 = vmatpush2.msra.mxu0 0.0
        %3746 = vmatprep.subr.mxu0 0.0
        %3747 = vmatpush2.msra.mxu0 0.0
        %3748 = vmatprep.subr.mxu0 0.0
        %3749 = vmatpush2.msra.mxu0 0.0
        %3750 = vmatprep.subr.mxu0 0.0
        %3751 = vmatpush2.msra.mxu0 0.0
        %3752 = vmatprep.subr.mxu0 0.0
        %3753 = vmatpush2.msra.mxu0 0.0
        %3754 = vmatprep.subr.mxu0 0.0
        %3755 = vmatpush2.msra.mxu0 0.0
        %3756 = vmatprep.mubr.f32.mxu0 0.0
        %3757 = vmatmul.mubr.f32.gmra.mxu0 %v3687
        %v3758 = vpop.f32.mrf.mxu0
        %v3759 = vadd.f32 0.0, %v3758
        %v3760 = vpop.f32.mrf.mxu0
        %3761 = vdwg.mxu0
        %v3762 = vadd.f32 %v3681, %v3759
        %s3763 = scalar_lea.vmem [#allocation8], 96
        %v3764 = vld [vmem:[%s3763] sm:$0xff]
        %v3765 = vld [vmem:[%s3763 + $0x8] sm:$0xff]
        %v3766 = vld [vmem:[%s3763 + $0x10] sm:$0xf]
        %v3767 = vrot.slane %v3440, 4
        %v3768 = vsel %vm3450, %v3767, 0
        %v3771 = vsel %vm1054, %v3766, 0
        %3773 = vmatprep.subr.mxu0 0.0
        %3774 = vmatpush1.msra.mxu0 0.0
        %3775 = vmatprep.subr.mxu0 0.0
        %3776 = vmatpush1.msra.mxu0 0.0
        %3777 = vmatprep.subr.mxu0 0.0
        %3778 = vmatpush1.msra.mxu0 0.0
        %3779 = vmatprep.subr.mxu0 0.0
        %3780 = vmatpush1.msra.mxu0 0.0
        %3781 = vmatprep.subr.mxu0 0.0
        %3782 = vmatpush1.msra.mxu0 0.0
        %3783 = vmatprep.subr.mxu0 0.0
        %3784 = vmatpush1.msra.mxu0 0.0
        %3785 = vmatprep.subr.mxu0 0.0
        %3786 = vmatpush1.msra.mxu0 0.0
        %3787 = vmatprep.subr.mxu0 0.0
        %3788 = vmatpush1.msra.mxu0 0.0
        %3789 = vmatprep.subr.mxu0 0.0
        %3790 = vmatpush1.msra.mxu0 0.0
        %3791 = vmatprep.subr.mxu0 0.0
        %3792 = vmatpush1.msra.mxu0 0.0
        %3793 = vmatprep.subr.mxu0 0.0
        %3794 = vmatpush1.msra.mxu0 0.0
        %3795 = vmatprep.subr.mxu0 0.0
        %3796 = vmatpush1.msra.mxu0 0.0
        %3797 = vmatprep.subr.mxu0 0.0
        %3798 = vmatpush1.msra.mxu0 0.0
        %3799 = vmatprep.subr.mxu0 0.0
        %3800 = vmatpush1.msra.mxu0 %v3771
        %3801 = vmatprep.subr.mxu0 0.0
        %3802 = vmatpush1.msra.mxu0 %v3765
        %3803 = vmatprep.subr.mxu0 0.0
        %3804 = vmatpush1.msra.mxu0 %v3764
        %3805 = vmatprep.subr.mxu0 0.0
        %3806 = vmatpush2.msra.mxu0 0.0
        %3807 = vmatprep.subr.mxu0 0.0
        %3808 = vmatpush2.msra.mxu0 0.0
        %3809 = vmatprep.subr.mxu0 0.0
        %3810 = vmatpush2.msra.mxu0 0.0
        %3811 = vmatprep.subr.mxu0 0.0
        %3812 = vmatpush2.msra.mxu0 0.0
        %3813 = vmatprep.subr.mxu0 0.0
        %3814 = vmatpush2.msra.mxu0 0.0
        %3815 = vmatprep.subr.mxu0 0.0
        %3816 = vmatpush2.msra.mxu0 0.0
        %3817 = vmatprep.subr.mxu0 0.0
        %3818 = vmatpush2.msra.mxu0 0.0
        %3819 = vmatprep.subr.mxu0 0.0
        %3820 = vmatpush2.msra.mxu0 0.0
        %3821 = vmatprep.subr.mxu0 0.0
        %3822 = vmatpush2.msra.mxu0 0.0
        %3823 = vmatprep.subr.mxu0 0.0
        %3824 = vmatpush2.msra.mxu0 0.0
        %3825 = vmatprep.subr.mxu0 0.0
        %3826 = vmatpush2.msra.mxu0 0.0
        %3827 = vmatprep.subr.mxu0 0.0
        %3828 = vmatpush2.msra.mxu0 0.0
        %3829 = vmatprep.subr.mxu0 0.0
        %3830 = vmatpush2.msra.mxu0 0.0
        %3831 = vmatprep.subr.mxu0 0.0
        %3832 = vmatpush2.msra.mxu0 0.0
        %3833 = vmatprep.subr.mxu0 0.0
        %3834 = vmatpush2.msra.mxu0 0.0
        %3835 = vmatprep.subr.mxu0 0.0
        %3836 = vmatpush2.msra.mxu0 0.0
        %3837 = vmatprep.mubr.f32.mxu0 0.0
        %3838 = vmatmul.mubr.f32.gmra.mxu0 %v3768
        %v3839 = vpop.f32.mrf.mxu0
        %v3840 = vadd.f32 0.0, %v3839
        %v3841 = vpop.f32.mrf.mxu0
        %3842 = vdwg.mxu0
        %v3843 = vadd.f32 %v3762, %v3840
        %v3844 = vld [vmem:[%s14] sm:$0x1]
        %v3845 = vadd.f32 %v3843, %v3844
        %v3846 = vmax.f32 %v3845, 0.0
        %v3847 = vld [vmem:[#allocation10] sm:$0xff]
        %v3848 = vld [vmem:[#allocation10 + $0x8] sm:$0xff]
        %v3849 = vld [vmem:[#allocation10 + $0x10] sm:$0xff]
        %v3850 = vld [vmem:[#allocation10 + $0x18] sm:$0xff]
        %v3851 = vld [vmem:[#allocation10 + $0x20] sm:$0xff]
        %v3852 = vld [vmem:[#allocation10 + $0x28] sm:$0xff]
        %v3853 = vld [vmem:[#allocation10 + $0x30] sm:$0xff]
        %v3854 = vld [vmem:[#allocation10 + $0x38] sm:$0xff]
        %v3855 = vld [vmem:[#allocation10 + $0x40] sm:$0xff]
        %v3856 = vld [vmem:[#allocation10 + $0x48] sm:$0xff]
        %v3857 = vld [vmem:[#allocation10 + $0x50] sm:$0xff]
        %v3858 = vld [vmem:[#allocation10 + $0x58] sm:$0xff]
        %v3859 = vld [vmem:[#allocation10 + $0x60] sm:$0xff]
        %v3860 = vld [vmem:[#allocation10 + $0x68] sm:$0xff]
        %v3861 = vld [vmem:[#allocation10 + $0x70] sm:$0xff]
        %v3862 = vld [vmem:[#allocation10 + $0x78] sm:$0xff]
        %v3863 = vld [vmem:[%s16] sm:$0x1]
        %3864 = vmatprep.subr.mxu0 0.0
        %3865 = vmatpush1.msra.mxu0 %v3862
        %3866 = vmatprep.subr.mxu0 0.0
        %3867 = vmatpush1.msra.mxu0 %v3861
        %3868 = vmatprep.subr.mxu0 0.0
        %3869 = vmatpush1.msra.mxu0 %v3860
        %3870 = vmatprep.subr.mxu0 0.0
        %3871 = vmatpush1.msra.mxu0 %v3859
        %3872 = vmatprep.subr.mxu0 0.0
        %3873 = vmatpush1.msra.mxu0 %v3858
        %3874 = vmatprep.subr.mxu0 0.0
        %3875 = vmatpush1.msra.mxu0 %v3857
        %3876 = vmatprep.subr.mxu0 0.0
        %3877 = vmatpush1.msra.mxu0 %v3856
        %3878 = vmatprep.subr.mxu0 0.0
        %3879 = vmatpush1.msra.mxu0 %v3855
        %3880 = vmatprep.subr.mxu0 0.0
        %3881 = vmatpush1.msra.mxu0 %v3854
        %3882 = vmatprep.subr.mxu0 0.0
        %3883 = vmatpush1.msra.mxu0 %v3853
        %3884 = vmatprep.subr.mxu0 0.0
        %3885 = vmatpush1.msra.mxu0 %v3852
        %3886 = vmatprep.subr.mxu0 0.0
        %3887 = vmatpush1.msra.mxu0 %v3851
        %3888 = vmatprep.subr.mxu0 0.0
        %3889 = vmatpush1.msra.mxu0 %v3850
        %3890 = vmatprep.subr.mxu0 0.0
        %3891 = vmatpush1.msra.mxu0 %v3849
        %3892 = vmatprep.subr.mxu0 0.0
        %3893 = vmatpush1.msra.mxu0 %v3848
        %3894 = vmatprep.subr.mxu0 0.0
        %3895 = vmatpush1.msra.mxu0 %v3847
        %3896 = vmatprep.subr.mxu0 0.0
        %3897 = vmatpush2.msra.mxu0 0.0
        %3898 = vmatprep.subr.mxu0 0.0
        %3899 = vmatpush2.msra.mxu0 0.0
        %3900 = vmatprep.subr.mxu0 0.0
        %3901 = vmatpush2.msra.mxu0 0.0
        %3902 = vmatprep.subr.mxu0 0.0
        %3903 = vmatpush2.msra.mxu0 0.0
        %3904 = vmatprep.subr.mxu0 0.0
        %3905 = vmatpush2.msra.mxu0 0.0
        %3906 = vmatprep.subr.mxu0 0.0
        %3907 = vmatpush2.msra.mxu0 0.0
        %3908 = vmatprep.subr.mxu0 0.0
        %3909 = vmatpush2.msra.mxu0 0.0
        %3910 = vmatprep.subr.mxu0 0.0
        %3911 = vmatpush2.msra.mxu0 0.0
        %3912 = vmatprep.subr.mxu0 0.0
        %3913 = vmatpush2.msra.mxu0 0.0
        %3914 = vmatprep.subr.mxu0 0.0
        %3915 = vmatpush2.msra.mxu0 0.0
        %3916 = vmatprep.subr.mxu0 0.0
        %3917 = vmatpush2.msra.mxu0 0.0
        %3918 = vmatprep.subr.mxu0 0.0
        %3919 = vmatpush2.msra.mxu0 0.0
        %3920 = vmatprep.subr.mxu0 0.0
        %3921 = vmatpush2.msra.mxu0 0.0
        %3922 = vmatprep.subr.mxu0 0.0
        %3923 = vmatpush2.msra.mxu0 0.0
        %3924 = vmatprep.subr.mxu0 0.0
        %3925 = vmatpush2.msra.mxu0 0.0
        %3926 = vmatprep.subr.mxu0 0.0
        %3927 = vmatpush2.msra.mxu0 0.0
        %3928 = vmatprep.mubr.f32.mxu0 0.0
        %3929 = vmatmul.mubr.f32.gmra.mxu0 %v3846
        %v3930 = vpop.f32.mrf.mxu0
        %v3931 = vadd.f32 %v3863, %v3930
        %v3932 = vpop.f32.mrf.mxu0
        %3933 = vdwg.mxu0
        %vm3934 = vcmask 1040384
        %v3935 = vsel %vm3934, %v3931, -inf
        %3936 = vmax.xlane.f32.xlu0 %v3935
        %v3937 = vpop.xlane.xlu0 %3936
        %v3938 = vsub.f32 %v3931, %v3937
        %v3939 = vmul.f32 %v3938, 1.442695
        %v3940 = vpow.pop %v3939
        %v3941 = vsel %vm3934, %v3940, 0.0
        %3942 = vadd.xlane.f32.xlu0 %v3941
        %v3943 = vpop.xlane.xlu0 %3942
        %v3944 = vrcp.pop %v3943
        %v3945 = vmul.f32 %v3940, %v3944
        %vm3946 = vcmask 811008
        %3947 = vst.msk [vmem:[%s611] sm:$0x1] %vm3946, %v3945
        %s3948 = sand.u32 %s404, 1
        %s3949 = scalar_lea.sflag [#allocation4], %s3948
        %s3950 = sand.u32 %s404, 1
        %s3951 = scalar_lea.vmem [#allocation11], %s3950
        // Predicated region
        $region109: #{net_forward.1} parent=87 // pred_check
          %p3952 = pneg %p414
        $region110: #{net_forward.1} parent=87 // pred_check_branch
          %3954 = sbr.rel (%p3952) target = $region112
        $region111: #{net_forward.1} parent=87 // pred_region
          %s3956 = ssub.s32 16, 16
          %3957 = vsyncadd %s3949, %s3956
          %s3958 = smul.addr %s34, 16
          %s3959 = scalar_lea.hbm %s17, %s3958
          %s3961 = sshll.u32 %s3951, 4
          %s3962 = int_to_ptr.vmem [resolvable:$true] %s3961
          %3964 = dma.vmem_to_hbm [thread:$0]  %s3962, 16, %s3959, %s3949
        $region112: #{net_forward.1} parent=87 // pred_fallthru
          _
      $region88: #{net_forward.1} parent=5 // pred_fallthru
        _
      %p3965 = scmp.le.s32.totalorder 2, %s29
      // Predicated region
      $region113: #{net_forward.1} parent=5 // pred_check
        %p3966 = pneg %p3965
      $region114: #{net_forward.1} parent=5 // pred_check_branch
        %3968 = sbr.rel (%p3966) target = $region116
      $region115: #{net_forward.1} parent=5 // pred_region
        %s3969 = ssub.s32 %s29, 2
        // Predicated region
        $region117: #{net_forward.1} parent=115 // pred_check
          %p3970 = pneg %p420
        $region118: #{net_forward.1} parent=115 // pred_check_branch
          %3972 = sbr.rel (%p3970) target = $region120
        $region119: #{net_forward.1} parent=115 // pred_region
          %s3973 = sand.u32 %s405, 1
          %s3974 = scalar_lea.sflag [#allocation4], %s3973
          %s3975 = sand.u32 %s405, 1
          %s3976 = scalar_lea.vmem [#allocation11], %s3975
          %3977 = dma.done %s3974, 16
        $region120: #{net_forward.1} parent=115 // pred_fallthru
          _
      $region116: #{net_forward.1} parent=5 // pred_fallthru
        _
    $region6: #{net_forward.1} parent=1 // loop_footer
      %s33 = sadd.s32 1, %s29
    $region7: #{net_forward.1} parent=1 // loop_footer_branch
      %28 = sbr.rel target = $region3
    $region8: #{net_forward.1} parent=1 // loop_exit
      _
    %3978 = vsyncpa [#allocation3], 1
    %s3979 = scalar_lea.sflag [#allocation3], 1
    %3980 = vsyncpa %s3979, 1
    %3981 = vsyncpa [#allocation6], 1
    %3982 = vsyncpa [#allocation9], 1
    %3983 = vsyncpa [#allocation4], 1
    %s3984 = scalar_lea.sflag [#allocation4], 1
    %3985 = vsyncpa %s3984, 1

</llo_original>
